<compile_context>
chip_gen: v5e
topology: v5e:2x2
jax: 0.10.0
libtpu: 0.0.40
codegen_flags: <defaults>
</compile_context>

<pallas_src>
import jax
import jax.numpy as jnp
from jax.experimental import pallas as pl
from jax.experimental.pallas import tpu as pltpu

_HIGHEST = jax.lax.Precision.HIGHEST


def coord_att_kernel(x_ref, pool_ref, eh_ref, ew_ref,
                     w1ft_ref, b1f_ref, w2t_ref, b2_ref, w3t_ref, b3_ref,
                     o_ref):
    # x_ref/o_ref: (NB*C, HW)   pool_ref: (HW, H+W)
    # eh_ref: (H, HW)  ew_ref: (W, HW)
    # w1ft: (C, mip)  b1f: (1, mip)  w2t/w3t: (mip, C)  b2/b3: (1, C)
    H = eh_ref.shape[0]
    C = w2t_ref.shape[1]
    NB = x_ref.shape[0] // C

    x = x_ref[...].astype(jnp.float32)                     # (NB*C, HW)
    pool = pool_ref[...]
    w1ft = w1ft_ref[...]
    b1f = b1f_ref[...]
    w2t = w2t_ref[...]
    b2 = b2_ref[...]
    w3t = w3t_ref[...]
    b3 = b3_ref[...]

    # Directional (row + column) average pooling for the whole batch block:
    # one lane-dense MXU matmul against a constant (HW, H+W) matrix.
    pooled = jnp.dot(x, pool, precision=_HIGHEST,
                     preferred_element_type=jnp.float32)   # (NB*C, H+W)

    gh_rows = []
    gw_rows = []
    for b in range(NB):                                    # NB is small & static
        p_b = pooled[b * C:(b + 1) * C, :]                 # (C, H+W)
        # conv1 (BN + bias folded) + hswish
        y_b = jnp.dot(p_b.T, w1ft, precision=_HIGHEST,
                      preferred_element_type=jnp.float32) + b1f   # (H+W, mip)
        y_b = y_b * jnp.minimum(jnp.maximum(y_b + 3.0, 0.0), 6.0) * (1.0 / 6.0)

        # conv2 / conv3 + sigmoid on the row / column halves
        g_h = jax.nn.sigmoid(
            jnp.dot(y_b[:H, :], w2t, precision=_HIGHEST,
                    preferred_element_type=jnp.float32) + b2)     # (H, C)
        g_w = jax.nn.sigmoid(
            jnp.dot(y_b[H:, :], w3t, precision=_HIGHEST,
                    preferred_element_type=jnp.float32) + b3)     # (W, C)
        gh_rows.append(g_h.T)                              # (C, H)
        gw_rows.append(g_w.T)                              # (C, W)

    gh = gh_rows[0] if NB == 1 else jnp.concatenate(gh_rows, axis=0)  # (NB*C, H)
    gw = gw_rows[0] if NB == 1 else jnp.concatenate(gw_rows, axis=0)  # (NB*C, W)

    # Broadcast the per-row / per-column gates back onto the flattened HW axis
    # with one-hot expansion matmuls (keeps stores lane-dense, no reshapes).
    rep_h = jnp.dot(gh, eh_ref[...], precision=_HIGHEST,
                    preferred_element_type=jnp.float32)    # (NB*C, HW)
    rep_w = jnp.dot(gw, ew_ref[...], precision=_HIGHEST,
                    preferred_element_type=jnp.float32)    # (NB*C, HW)

    o_ref[...] = (x * rep_h * rep_w).astype(o_ref.dtype)


def coord_att(x, w1, b1, gamma, beta, running_mean, running_var,
              w2, b2, w3, b3, *, eps=1e-5, nb=None):
    """x: (N, C, H, W); w1: (mip, C); w2/w3: (C, mip). Returns (N, C, H, W)."""
    N, C, H, W = x.shape
    HW = H * W
    S = H + W
    mip = w1.shape[0]
    assert w2.shape == (C, mip) and w3.shape == (C, mip)

    # Flatten spatial so the kernel's lane axis is H*W (lane-dense loads/stores).
    x2 = x.reshape(N * C, HW)

    # Constant pooling / expansion matrices (resident across all grid steps).
    ii = jnp.arange(HW, dtype=jnp.int32) // W
    jj = jnp.arange(HW, dtype=jnp.int32) % W
    onehot_h = (ii[:, None] == jnp.arange(H, dtype=jnp.int32)[None, :]
                ).astype(jnp.float32)                      # (HW, H)
    onehot_w = (jj[:, None] == jnp.arange(W, dtype=jnp.int32)[None, :]
                ).astype(jnp.float32)                      # (HW, W)
    pool_mat = jnp.concatenate([onehot_h / W, onehot_w / H], axis=1)  # (HW, S)
    eh = onehot_h.T                                        # (H, HW)
    ew = onehot_w.T                                        # (W, HW)

    # Fold BatchNorm (inference running stats) and conv1 bias into conv1.
    inv = gamma / jnp.sqrt(running_var + eps)
    w1ft = (w1 * inv[:, None]).T.astype(jnp.float32)       # (C, mip)
    b1f = ((b1 - running_mean) * inv + beta).reshape(1, mip).astype(jnp.float32)
    w2t = w2.T.astype(jnp.float32)                         # (mip, C)
    b2r = b2.reshape(1, C).astype(jnp.float32)
    w3t = w3.T.astype(jnp.float32)                         # (mip, C)
    b3r = b3.reshape(1, C).astype(jnp.float32)

    # Images per grid step: target ~2 MB x-blocks, keep >=2 grid steps for
    # dual-TC chips, cap the static unroll at 8.
    if nb is None:
        per_img = C * HW * x.dtype.itemsize
        cap = max(1, (2 * 1024 * 1024) // per_img)
        cap = min(cap, 8)
        if N >= 2:
            cap = min(cap, max(1, N // 2))
        nb = 1
        for d in range(1, N + 1):
            if N % d == 0 and d <= cap:
                nb = d
    assert N % nb == 0
    grid = (N // nb,)

    cost = pl.CostEstimate(
        flops=int(4 * N * C * HW * S + 3 * N * C * HW),
        transcendentals=int(N * C * S),
        bytes_accessed=int(2 * N * C * HW * x.dtype.itemsize),
    )

    out2 = pl.pallas_call(
        coord_att_kernel,
        out_shape=jax.ShapeDtypeStruct((N * C, HW), x.dtype),
        grid_spec=pltpu.PrefetchScalarGridSpec(
            num_scalar_prefetch=0,
            grid=grid,
            in_specs=[
                pl.BlockSpec((nb * C, HW), lambda n: (n, 0)),   # x
                pl.BlockSpec((HW, S), lambda n: (0, 0)),        # pool_mat
                pl.BlockSpec((H, HW), lambda n: (0, 0)),        # eh
                pl.BlockSpec((W, HW), lambda n: (0, 0)),        # ew
                pl.BlockSpec((C, mip), lambda n: (0, 0)),       # w1ft
                pl.BlockSpec((1, mip), lambda n: (0, 0)),       # b1f
                pl.BlockSpec((mip, C), lambda n: (0, 0)),       # w2t
                pl.BlockSpec((1, C), lambda n: (0, 0)),         # b2
                pl.BlockSpec((mip, C), lambda n: (0, 0)),       # w3t
                pl.BlockSpec((1, C), lambda n: (0, 0)),         # b3
            ],
            out_specs=pl.BlockSpec((nb * C, HW), lambda n: (n, 0)),
        ),
        compiler_params=pltpu.CompilerParams(
            dimension_semantics=("parallel",),
            vmem_limit_bytes=32 * 1024 * 1024,
        ),
        cost_estimate=cost,
    )(x2, pool_mat, eh, ew, w1ft, b1f, w2t, b2r, w3t, b3r)

    return out2.reshape(N, C, H, W)


def coord_att_ref(x, w1, b1, gamma, beta, running_mean, running_var,
                  w2, b2, w3, b3, eps=1e-5):
    """Plain-JAX reference mirroring CoordAtt.forward (inference-mode BN)."""
    N, C, H, W = x.shape
    x_h = jnp.mean(x, axis=3)                              # (N, C, H)
    x_w = jnp.mean(x, axis=2)                              # (N, C, W)
    y = jnp.concatenate([x_h, x_w], axis=2)                # (N, C, H+W)
    y = jnp.einsum('mc,ncs->nms', w1, y, precision=_HIGHEST) + b1[None, :, None]
    y = (y - running_mean[None, :, None]) * (
        gamma / jnp.sqrt(running_var + eps))[None, :, None] + beta[None, :, None]
    y = y * jnp.clip(y + 3.0, 0.0, 6.0) / 6.0              # hswish
    a_h = jax.nn.sigmoid(
        jnp.einsum('om,nmh->noh', w2, y[:, :, :H], precision=_HIGHEST)
        + b2[None, :, None])                               # (N, C, H)
    a_w = jax.nn.sigmoid(
        jnp.einsum('om,nmw->now', w3, y[:, :, H:], precision=_HIGHEST)
        + b3[None, :, None])                               # (N, C, W)
    return x * a_h[:, :, :, None] * a_w[:, :, None, :]


if __name__ == "__main__":
    key = jax.random.PRNGKey(0)
    ks = jax.random.split(key, 11)

    N, C, H, W = 2, 64, 16, 16          # inp = oup = 64
    groups = 32
    mip = max(8, C // groups)           # = 8

    x = jax.random.normal(ks[0], (N, C, H, W), dtype=jnp.float32)
    w1 = jax.random.normal(ks[1], (mip, C), dtype=jnp.float32) / jnp.sqrt(C)
    b1 = 0.1 * jax.random.normal(ks[2], (mip,), dtype=jnp.float32)
    gamma = 1.0 + 0.1 * jax.random.normal(ks[3], (mip,), dtype=jnp.float32)
    beta = 0.1 * jax.random.normal(ks[4], (mip,), dtype=jnp.float32)
    running_mean = 0.1 * jax.random.normal(ks[5], (mip,), dtype=jnp.float32)
    running_var = jnp.abs(jax.random.normal(ks[6], (mip,), dtype=jnp.float32)) + 0.5
    w2 = jax.random.normal(ks[7], (C, mip), dtype=jnp.float32) / jnp.sqrt(mip)
    b2 = 0.1 * jax.random.normal(ks[8], (C,), dtype=jnp.float32)
    w3 = jax.random.normal(ks[9], (C, mip), dtype=jnp.float32) / jnp.sqrt(mip)
    b3 = 0.1 * jax.random.normal(ks[10], (C,), dtype=jnp.float32)

    out = coord_att(x, w1, b1, gamma, beta, running_mean, running_var,
                    w2, b2, w3, b3)
    out = jax.block_until_ready(out)

    ref = coord_att_ref(x, w1, b1, gamma, beta, running_mean, running_var,
                        w2, b2, w3, b3)
    assert out.shape == (N, C, H, W), out.shape
    err = float(jnp.max(jnp.abs(out - ref)))
    assert err < 1e-4, err

    print("KERNEL_OK")
</pallas_src>

<mosaic_0001>
module attributes {stable_mosaic.version = 11 : i64} {
  func.func @coord_att_kernel(%arg0: i32, %arg1: memref<64x256xf32, #tpu.memory_space<vmem>>, %arg2: memref<256x32xf32, #tpu.memory_space<vmem>>, %arg3: memref<16x256xf32, #tpu.memory_space<vmem>>, %arg4: memref<16x256xf32, #tpu.memory_space<vmem>>, %arg5: memref<64x8xf32, #tpu.memory_space<vmem>>, %arg6: memref<1x8xf32, #tpu.memory_space<vmem>>, %arg7: memref<8x64xf32, #tpu.memory_space<vmem>>, %arg8: memref<1x64xf32, #tpu.memory_space<vmem>>, %arg9: memref<8x64xf32, #tpu.memory_space<vmem>>, %arg10: memref<1x64xf32, #tpu.memory_space<vmem>>, %arg11: memref<64x256xf32, #tpu.memory_space<vmem>>) attributes {dimension_semantics = [#tpu.dimension_semantics<parallel>], iteration_bounds = array<i64: 2>, scalar_prefetch = 0 : i64, scratch_operands = 0 : i64, tpu.core_type = #tpu.core_type<tc>, window_params = [{transform_indices = @transform_0, window_bounds = array<i64: 64, 256>}, {pipeline_mode = #tpu.pipeline_mode<synchronous>, transform_indices = @transform_1, window_bounds = array<i64: 256, 32>}, {pipeline_mode = #tpu.pipeline_mode<synchronous>, transform_indices = @transform_2, window_bounds = array<i64: 16, 256>}, {pipeline_mode = #tpu.pipeline_mode<synchronous>, transform_indices = @transform_3, window_bounds = array<i64: 16, 256>}, {pipeline_mode = #tpu.pipeline_mode<synchronous>, transform_indices = @transform_4, window_bounds = array<i64: 64, 8>}, {pipeline_mode = #tpu.pipeline_mode<synchronous>, transform_indices = @transform_5, window_bounds = array<i64: 1, 8>}, {pipeline_mode = #tpu.pipeline_mode<synchronous>, transform_indices = @transform_6, window_bounds = array<i64: 8, 64>}, {pipeline_mode = #tpu.pipeline_mode<synchronous>, transform_indices = @transform_7, window_bounds = array<i64: 1, 64>}, {pipeline_mode = #tpu.pipeline_mode<synchronous>, transform_indices = @transform_8, window_bounds = array<i64: 8, 64>}, {pipeline_mode = #tpu.pipeline_mode<synchronous>, transform_indices = @transform_9, window_bounds = array<i64: 1, 64>}, {transform_indices = @transform_10, window_bounds = array<i64: 64, 256>}]} {
    %c0 = arith.constant 0 : index
    %c0_0 = arith.constant 0 : index
    %0 = vector.load %arg1[%c0, %c0_0] : memref<64x256xf32, #tpu.memory_space<vmem>>, vector<64x256xf32>
    %c0_1 = arith.constant 0 : index
    %c0_2 = arith.constant 0 : index
    %1 = vector.load %arg2[%c0_1, %c0_2] : memref<256x32xf32, #tpu.memory_space<vmem>>, vector<256x32xf32>
    %c0_3 = arith.constant 0 : index
    %c0_4 = arith.constant 0 : index
    %2 = vector.load %arg5[%c0_3, %c0_4] : memref<64x8xf32, #tpu.memory_space<vmem>>, vector<64x8xf32>
    %c0_5 = arith.constant 0 : index
    %c0_6 = arith.constant 0 : index
    %3 = vector.load %arg6[%c0_5, %c0_6] : memref<1x8xf32, #tpu.memory_space<vmem>>, vector<1x8xf32>
    %c0_7 = arith.constant 0 : index
    %c0_8 = arith.constant 0 : index
    %4 = vector.load %arg7[%c0_7, %c0_8] : memref<8x64xf32, #tpu.memory_space<vmem>>, vector<8x64xf32>
    %c0_9 = arith.constant 0 : index
    %c0_10 = arith.constant 0 : index
    %5 = vector.load %arg8[%c0_9, %c0_10] : memref<1x64xf32, #tpu.memory_space<vmem>>, vector<1x64xf32>
    %c0_11 = arith.constant 0 : index
    %c0_12 = arith.constant 0 : index
    %6 = vector.load %arg9[%c0_11, %c0_12] : memref<8x64xf32, #tpu.memory_space<vmem>>, vector<8x64xf32>
    %c0_13 = arith.constant 0 : index
    %c0_14 = arith.constant 0 : index
    %7 = vector.load %arg10[%c0_13, %c0_14] : memref<1x64xf32, #tpu.memory_space<vmem>>, vector<1x64xf32>
    %cst = arith.constant dense<0.000000e+00> : vector<64x32xf32>
    %8 = tpu.matmul %0, %1, %cst {dimension_numbers = #tpu.dot_dimension_numbers<[1], [0], [0], [1], [0, 0, 1, 1], [], []>, precision = #tpu.contract_precision<fp32>} : vector<64x256xf32>, vector<256x32xf32>, vector<64x32xf32> -> vector<64x32xf32>
    %9 = tpu.transpose %8, [1, 0] : vector<64x32xf32> -> vector<32x64xf32>
    %cst_15 = arith.constant dense<0.000000e+00> : vector<32x8xf32>
    %10 = tpu.matmul %9, %2, %cst_15 {dimension_numbers = #tpu.dot_dimension_numbers<[1], [0], [0], [1], [0, 0, 1, 1], [], []>, precision = #tpu.contract_precision<fp32>} : vector<32x64xf32>, vector<64x8xf32>, vector<32x8xf32> -> vector<32x8xf32>
    %11 = vector.broadcast %3 : vector<1x8xf32> to vector<32x8xf32>
    %12 = arith.addf %10, %11 : vector<32x8xf32>
    %cst_16 = arith.constant 3.000000e+00 : f32
    %13 = vector.broadcast %cst_16 : f32 to vector<32x8xf32>
    %14 = arith.addf %12, %13 : vector<32x8xf32>
    %cst_17 = arith.constant 0.000000e+00 : f32
    %15 = vector.broadcast %cst_17 : f32 to vector<32x8xf32>
    %16 = arith.maximumf %14, %15 : vector<32x8xf32>
    %cst_18 = arith.constant 6.000000e+00 : f32
    %17 = vector.broadcast %cst_18 : f32 to vector<32x8xf32>
    %18 = arith.minimumf %16, %17 : vector<32x8xf32>
    %19 = arith.mulf %12, %18 : vector<32x8xf32>
    %cst_19 = arith.constant 0.166666672 : f32
    %20 = vector.broadcast %cst_19 : f32 to vector<32x8xf32>
    %21 = arith.mulf %19, %20 : vector<32x8xf32>
    %22 = vector.extract_strided_slice %21 {offsets = [0, 0], sizes = [16, 8], strides = [1, 1]} : vector<32x8xf32> to vector<16x8xf32>
    %cst_20 = arith.constant dense<0.000000e+00> : vector<16x64xf32>
    %23 = tpu.matmul %22, %4, %cst_20 {dimension_numbers = #tpu.dot_dimension_numbers<[1], [0], [0], [1], [0, 0, 1, 1], [], []>, precision = #tpu.contract_precision<fp32>} : vector<16x8xf32>, vector<8x64xf32>, vector<16x64xf32> -> vector<16x64xf32>
    %24 = vector.broadcast %5 : vector<1x64xf32> to vector<16x64xf32>
    %25 = arith.addf %23, %24 : vector<16x64xf32>
    %26 = arith.negf %25 : vector<16x64xf32>
    %27 = math.exp %26 : vector<16x64xf32>
    %cst_21 = arith.constant 1.000000e+00 : f32
    %28 = vector.broadcast %cst_21 : f32 to vector<16x64xf32>
    %29 = arith.addf %28, %27 : vector<16x64xf32>
    %30 = arith.divf %28, %29 : vector<16x64xf32>
    %31 = vector.extract_strided_slice %21 {offsets = [16, 0], sizes = [16, 8], strides = [1, 1]} : vector<32x8xf32> to vector<16x8xf32>
    %cst_22 = arith.constant dense<0.000000e+00> : vector<16x64xf32>
    %32 = tpu.matmul %31, %6, %cst_22 {dimension_numbers = #tpu.dot_dimension_numbers<[1], [0], [0], [1], [0, 0, 1, 1], [], []>, precision = #tpu.contract_precision<fp32>} : vector<16x8xf32>, vector<8x64xf32>, vector<16x64xf32> -> vector<16x64xf32>
    %33 = vector.broadcast %7 : vector<1x64xf32> to vector<16x64xf32>
    %34 = arith.addf %32, %33 : vector<16x64xf32>
    %35 = arith.negf %34 : vector<16x64xf32>
    %36 = math.exp %35 : vector<16x64xf32>
    %cst_23 = arith.constant 1.000000e+00 : f32
    %37 = vector.broadcast %cst_23 : f32 to vector<16x64xf32>
    %38 = arith.addf %37, %36 : vector<16x64xf32>
    %39 = arith.divf %37, %38 : vector<16x64xf32>
    %40 = tpu.transpose %30, [1, 0] : vector<16x64xf32> -> vector<64x16xf32>
    %41 = tpu.transpose %39, [1, 0] : vector<16x64xf32> -> vector<64x16xf32>
    %c0_24 = arith.constant 0 : index
    %c0_25 = arith.constant 0 : index
    %42 = vector.load %arg3[%c0_24, %c0_25] : memref<16x256xf32, #tpu.memory_space<vmem>>, vector<16x256xf32>
    %cst_26 = arith.constant dense<0.000000e+00> : vector<64x256xf32>
    %43 = tpu.matmul %40, %42, %cst_26 {dimension_numbers = #tpu.dot_dimension_numbers<[1], [0], [0], [1], [0, 0, 1, 1], [], []>, precision = #tpu.contract_precision<fp32>} : vector<64x16xf32>, vector<16x256xf32>, vector<64x256xf32> -> vector<64x256xf32>
    %c0_27 = arith.constant 0 : index
    %c0_28 = arith.constant 0 : index
    %44 = vector.load %arg4[%c0_27, %c0_28] : memref<16x256xf32, #tpu.memory_space<vmem>>, vector<16x256xf32>
    %cst_29 = arith.constant dense<0.000000e+00> : vector<64x256xf32>
    %45 = tpu.matmul %41, %44, %cst_29 {dimension_numbers = #tpu.dot_dimension_numbers<[1], [0], [0], [1], [0, 0, 1, 1], [], []>, precision = #tpu.contract_precision<fp32>} : vector<64x16xf32>, vector<16x256xf32>, vector<64x256xf32> -> vector<64x256xf32>
    %46 = arith.mulf %0, %43 : vector<64x256xf32>
    %47 = arith.mulf %46, %45 : vector<64x256xf32>
    %c0_30 = arith.constant 0 : index
    %c0_31 = arith.constant 0 : index
    %48 = vector.load %arg11[%c0_30, %c0_31] : memref<64x256xf32, #tpu.memory_space<vmem>>, vector<64x256xf32>
    tpu.vector_store %arg11[%c0_30, %c0_31], %47 {strides = array<i32>} : memref<64x256xf32, #tpu.memory_space<vmem>>, vector<64x256xf32>,
    return
  }
  func.func @transform_0(%arg0: i32) -> (i32, i32) {
    %c0_i32 = arith.constant 0 : i32
    %c0_i32_0 = arith.constant 0 : i32
    return %arg0, %c0_i32 : i32, i32
  }
  func.func @transform_1(%arg0: i32) -> (i32, i32) {
    %c0_i32 = arith.constant 0 : i32
    %c0_i32_0 = arith.constant 0 : i32
    %c0_i32_1 = arith.constant 0 : i32
    return %c0_i32, %c0_i32_0 : i32, i32
  }
  func.func @transform_2(%arg0: i32) -> (i32, i32) {
    %c0_i32 = arith.constant 0 : i32
    %c0_i32_0 = arith.constant 0 : i32
    %c0_i32_1 = arith.constant 0 : i32
    return %c0_i32, %c0_i32_0 : i32, i32
  }
  func.func @transform_3(%arg0: i32) -> (i32, i32) {
    %c0_i32 = arith.constant 0 : i32
    %c0_i32_0 = arith.constant 0 : i32
    %c0_i32_1 = arith.constant 0 : i32
    return %c0_i32, %c0_i32_0 : i32, i32
  }
  func.func @transform_4(%arg0: i32) -> (i32, i32) {
    %c0_i32 = arith.constant 0 : i32
    %c0_i32_0 = arith.constant 0 : i32
    %c0_i32_1 = arith.constant 0 : i32
    return %c0_i32, %c0_i32_0 : i32, i32
  }
  func.func @transform_5(%arg0: i32) -> (i32, i32) {
    %c0_i32 = arith.constant 0 : i32
    %c0_i32_0 = arith.constant 0 : i32
    %c0_i32_1 = arith.constant 0 : i32
    return %c0_i32, %c0_i32_0 : i32, i32
  }
  func.func @transform_6(%arg0: i32) -> (i32, i32) {
    %c0_i32 = arith.constant 0 : i32
    %c0_i32_0 = arith.constant 0 : i32
    %c0_i32_1 = arith.constant 0 : i32
    return %c0_i32, %c0_i32_0 : i32, i32
  }
  func.func @transform_7(%arg0: i32) -> (i32, i32) {
    %c0_i32 = arith.constant 0 : i32
    %c0_i32_0 = arith.constant 0 : i32
    %c0_i32_1 = arith.constant 0 : i32
    return %c0_i32, %c0_i32_0 : i32, i32
  }
  func.func @transform_8(%arg0: i32) -> (i32, i32) {
    %c0_i32 = arith.constant 0 : i32
    %c0_i32_0 = arith.constant 0 : i32
    %c0_i32_1 = arith.constant 0 : i32
    return %c0_i32, %c0_i32_0 : i32, i32
  }
  func.func @transform_9(%arg0: i32) -> (i32, i32) {
    %c0_i32 = arith.constant 0 : i32
    %c0_i32_0 = arith.constant 0 : i32
    %c0_i32_1 = arith.constant 0 : i32
    return %c0_i32, %c0_i32_0 : i32, i32
  }
  func.func @transform_10(%arg0: i32) -> (i32, i32) {
    %c0_i32 = arith.constant 0 : i32
    %c0_i32_0 = arith.constant 0 : i32
    return %arg0, %c0_i32 : i32, i32
  }
}

</mosaic_0001>

<llo_original>
// kernel: tpu_custom_call.1
$region0: #{tpu_custom_call.1}
  #allocation0 [shape = 'u32[]', space=smem, size = 0x4, offset = 0x4, fixed_abs, tag = 'smem constant byte address 0x4 - core index']
  #allocation1 [shape = 'u32[72,128]{1,0:T(1,128)}', space=vmem, size = 0x9000, scoped, tag = 'internal scratch']
  %s0 = inlined_call_operand.vmem [shape: f32[128,256], index: 0, kind: input, shape index: {}]
  %s1 = inlined_call_operand.vmem [shape: f32[256,32], index: 1, kind: input, shape index: {}]
  %s2 = inlined_call_operand.vmem [shape: f32[16,256], index: 2, kind: input, shape index: {}]
  %s3 = inlined_call_operand.vmem [shape: f32[16,256], index: 3, kind: input, shape index: {}]
  %s4 = inlined_call_operand.vmem [shape: f32[64,8], index: 4, kind: input, shape index: {}]
  %s5 = inlined_call_operand.vmem [shape: f32[1,8], index: 5, kind: input, shape index: {}]
  %s6 = inlined_call_operand.vmem [shape: f32[8,64], index: 6, kind: input, shape index: {}]
  %s7 = inlined_call_operand.vmem [shape: f32[1,64], index: 7, kind: input, shape index: {}]
  %s8 = inlined_call_operand.hbm [shape: f32[8,64], index: 8, kind: input, shape index: {}]
  %s9 = inlined_call_operand.vmem [shape: f32[1,64], index: 9, kind: input, shape index: {}]
  %s10 = inlined_call_operand.hbm [shape: f32[128,256], index: 10, kind: output, shape index: {}]
  %s11 = sld [smem:[#allocation0]]
  $region77: #{tpu_custom_call.1} parent=0
    _
  %s13 = ssub.s32 1, %s11
  %s14 = scalar_select 0, %s13, %s11
  $region1: #{tpu_custom_call.1} parent=0
    #allocation2 [shape = 'u8[4096]{0}', space=vmem, size = 0x1000, scoped, tag = 'input window, operand 8, single buffered']
    #allocation3 [shape = 's32[2]{0}', space=sflag, size = 0x8, scoped, tag = 'scoped memory for tpu_custom_call.1']
    #allocation4 [shape = 's32[2]{0}', space=sflag, size = 0x8, scoped, tag = 'scoped memory for tpu_custom_call.1']
    #allocation5 [shape = 'u8[131072]{0}', space=vmem, size = 0x20000, scoped, tag = 'output window, operand 0']
    %15 = vsyncpa [#allocation3], 0
    %16 = vsyncpa [#allocation4], 0
    %s17 = scalar_lea.sflag [#allocation4], 1
    %18 = vsyncpa %s17, 0
    loop: start=0, step=1, limit=4
    $region2: #{tpu_custom_call.1} parent=1 // loop_pre_header
      _
    $region3: #{tpu_custom_call.1} parent=1 // loop_header
      %s20 = sphi 0, %s24
      %p21 = scmp.ge.s32.totalorder %s20, 4
      %s30 = sphi 0, %s32
      %s33 = sphi 0, %s30
      %s34 = sphi 0, %s33
      %s50 = sphi 0, %s34
      %s54 = sphi 0, %s54
      %s56 = sphi 0, %s54
      %s57 = sphi 0, %s56
      %s71 = sphi 0, %s57
      %s75 = sphi 0, %s75
      %s77 = sphi 0, %s75
      %s78 = sphi 0, %s77
      %s92 = sphi 0, %s78
      %s96 = sphi 0, %s96
      %s98 = sphi 0, %s96
      %s99 = sphi 0, %s98
      %s113 = sphi 0, %s99
      %s117 = sphi 0, %s117
      %s119 = sphi 0, %s117
      %s120 = sphi 0, %s119
      %s134 = sphi 0, %s120
      %s138 = sphi 0, %s138
      %s140 = sphi 0, %s138
      %s141 = sphi 0, %s140
      %s155 = sphi 0, %s141
      %s159 = sphi 0, %s159
      %s161 = sphi 0, %s159
      %s162 = sphi 0, %s161
      %s176 = sphi 0, %s162
      %s180 = sphi 0, %s180
      %s182 = sphi 0, %s180
      %s183 = sphi 0, %s182
      %s197 = sphi 0, %s183
      %s201 = sphi 0, %s201
      %s203 = sphi 0, %s201
      %s204 = sphi 0, %s203
      %s218 = sphi 0, %s204
      %s222 = sphi 0, %s222
      %s224 = sphi 0, %s222
      %s225 = sphi 0, %s224
      %s239 = sphi 0, %s225
      %s245 = sphi 0, %s247
      %s248 = sphi 0, %s245
      %s249 = sphi 0, %s248
      %s265 = sphi 0, %s249
    $region4: #{tpu_custom_call.1} parent=1 // loop_header_branch
      %23 = sbr.rel (%p21) target = $region8
    $region5: #{tpu_custom_call.1} parent=1 // loop_body
      %s25 = ssub.s32 %s20, 1
      %s26 = ssub.s32 %s20, 2
      %s27 = sadd.s32 %s20, 1
      %s28 = ssub.s32 %s20, %s27
      %p29 = scmp.eq.s32.totalorder %s28, 0
      %s31 = sadd.s32 %s30, 1
      %s32 = scalar_select %p29, %s30, %s31
      %p35 = pneg %p29
      %p36 = scmp.eq.s32.totalorder %s20, 1
      %p37 = por %p35, %p36
      %p38 = scmp.ne.s32.totalorder %s30, %s33
      %p39 = scmp.eq.s32.totalorder %s20, 0
      %p40 = por %p38, %p39
      %p41 = scmp.ne.s32.totalorder %s30, %s33
      %p42 = scmp.eq.s32.totalorder %s25, 1
      %p43 = por %p41, %p42
      %p44 = scmp.ne.s32.totalorder %s33, %s34
      %p45 = scmp.eq.s32.totalorder %s25, 0
      %p46 = por %p44, %p45
      %p47 = scmp.ne.s32.totalorder %s33, %s34
      %p48 = scmp.eq.s32.totalorder %s26, 1
      %p49 = por %p47, %p48
      %p51 = scmp.ne.s32.totalorder %s34, %s50
      %p52 = scmp.eq.s32.totalorder %s26, 0
      %p53 = por %p51, %p52
      %s55 = sadd.s32 %s54, 1
      %p58 = scmp.eq.s32.totalorder %s20, 1
      %p59 = scmp.ne.s32.totalorder %s54, %s56
      %p60 = scmp.eq.s32.totalorder %s20, 0
      %p61 = por %p59, %p60
      %p62 = scmp.ne.s32.totalorder %s54, %s56
      %p63 = scmp.eq.s32.totalorder %s25, 1
      %p64 = por %p62, %p63
      %p65 = scmp.ne.s32.totalorder %s56, %s57
      %p66 = scmp.eq.s32.totalorder %s25, 0
      %p67 = por %p65, %p66
      %p68 = scmp.ne.s32.totalorder %s56, %s57
      %p69 = scmp.eq.s32.totalorder %s26, 1
      %p70 = por %p68, %p69
      %p72 = scmp.ne.s32.totalorder %s57, %s71
      %p73 = scmp.eq.s32.totalorder %s26, 0
      %p74 = por %p72, %p73
      %s76 = sadd.s32 %s75, 1
      %p79 = scmp.eq.s32.totalorder %s20, 1
      %p80 = scmp.ne.s32.totalorder %s75, %s77
      %p81 = scmp.eq.s32.totalorder %s20, 0
      %p82 = por %p80, %p81
      %p83 = scmp.ne.s32.totalorder %s75, %s77
      %p84 = scmp.eq.s32.totalorder %s25, 1
      %p85 = por %p83, %p84
      %p86 = scmp.ne.s32.totalorder %s77, %s78
      %p87 = scmp.eq.s32.totalorder %s25, 0
      %p88 = por %p86, %p87
      %p89 = scmp.ne.s32.totalorder %s77, %s78
      %p90 = scmp.eq.s32.totalorder %s26, 1
      %p91 = por %p89, %p90
      %p93 = scmp.ne.s32.totalorder %s78, %s92
      %p94 = scmp.eq.s32.totalorder %s26, 0
      %p95 = por %p93, %p94
      %s97 = sadd.s32 %s96, 1
      %p100 = scmp.eq.s32.totalorder %s20, 1
      %p101 = scmp.ne.s32.totalorder %s96, %s98
      %p102 = scmp.eq.s32.totalorder %s20, 0
      %p103 = por %p101, %p102
      %p104 = scmp.ne.s32.totalorder %s96, %s98
      %p105 = scmp.eq.s32.totalorder %s25, 1
      %p106 = por %p104, %p105
      %p107 = scmp.ne.s32.totalorder %s98, %s99
      %p108 = scmp.eq.s32.totalorder %s25, 0
      %p109 = por %p107, %p108
      %p110 = scmp.ne.s32.totalorder %s98, %s99
      %p111 = scmp.eq.s32.totalorder %s26, 1
      %p112 = por %p110, %p111
      %p114 = scmp.ne.s32.totalorder %s99, %s113
      %p115 = scmp.eq.s32.totalorder %s26, 0
      %p116 = por %p114, %p115
      %s118 = sadd.s32 %s117, 1
      %p121 = scmp.eq.s32.totalorder %s20, 1
      %p122 = scmp.ne.s32.totalorder %s117, %s119
      %p123 = scmp.eq.s32.totalorder %s20, 0
      %p124 = por %p122, %p123
      %p125 = scmp.ne.s32.totalorder %s117, %s119
      %p126 = scmp.eq.s32.totalorder %s25, 1
      %p127 = por %p125, %p126
      %p128 = scmp.ne.s32.totalorder %s119, %s120
      %p129 = scmp.eq.s32.totalorder %s25, 0
      %p130 = por %p128, %p129
      %p131 = scmp.ne.s32.totalorder %s119, %s120
      %p132 = scmp.eq.s32.totalorder %s26, 1
      %p133 = por %p131, %p132
      %p135 = scmp.ne.s32.totalorder %s120, %s134
      %p136 = scmp.eq.s32.totalorder %s26, 0
      %p137 = por %p135, %p136
      %s139 = sadd.s32 %s138, 1
      %p142 = scmp.eq.s32.totalorder %s20, 1
      %p143 = scmp.ne.s32.totalorder %s138, %s140
      %p144 = scmp.eq.s32.totalorder %s20, 0
      %p145 = por %p143, %p144
      %p146 = scmp.ne.s32.totalorder %s138, %s140
      %p147 = scmp.eq.s32.totalorder %s25, 1
      %p148 = por %p146, %p147
      %p149 = scmp.ne.s32.totalorder %s140, %s141
      %p150 = scmp.eq.s32.totalorder %s25, 0
      %p151 = por %p149, %p150
      %p152 = scmp.ne.s32.totalorder %s140, %s141
      %p153 = scmp.eq.s32.totalorder %s26, 1
      %p154 = por %p152, %p153
      %p156 = scmp.ne.s32.totalorder %s141, %s155
      %p157 = scmp.eq.s32.totalorder %s26, 0
      %p158 = por %p156, %p157
      %s160 = sadd.s32 %s159, 1
      %p163 = scmp.eq.s32.totalorder %s20, 1
      %p164 = scmp.ne.s32.totalorder %s159, %s161
      %p165 = scmp.eq.s32.totalorder %s20, 0
      %p166 = por %p164, %p165
      %p167 = scmp.ne.s32.totalorder %s159, %s161
      %p168 = scmp.eq.s32.totalorder %s25, 1
      %p169 = por %p167, %p168
      %p170 = scmp.ne.s32.totalorder %s161, %s162
      %p171 = scmp.eq.s32.totalorder %s25, 0
      %p172 = por %p170, %p171
      %p173 = scmp.ne.s32.totalorder %s161, %s162
      %p174 = scmp.eq.s32.totalorder %s26, 1
      %p175 = por %p173, %p174
      %p177 = scmp.ne.s32.totalorder %s162, %s176
      %p178 = scmp.eq.s32.totalorder %s26, 0
      %p179 = por %p177, %p178
      %s181 = sadd.s32 %s180, 1
      %p184 = scmp.eq.s32.totalorder %s20, 1
      %p185 = scmp.ne.s32.totalorder %s180, %s182
      %p186 = scmp.eq.s32.totalorder %s20, 0
      %p187 = por %p185, %p186
      %p188 = scmp.ne.s32.totalorder %s180, %s182
      %p189 = scmp.eq.s32.totalorder %s25, 1
      %p190 = por %p188, %p189
      %p191 = scmp.ne.s32.totalorder %s182, %s183
      %p192 = scmp.eq.s32.totalorder %s25, 0
      %p193 = por %p191, %p192
      %p194 = scmp.ne.s32.totalorder %s182, %s183
      %p195 = scmp.eq.s32.totalorder %s26, 1
      %p196 = por %p194, %p195
      %p198 = scmp.ne.s32.totalorder %s183, %s197
      %p199 = scmp.eq.s32.totalorder %s26, 0
      %p200 = por %p198, %p199
      %s202 = sadd.s32 %s201, 1
      %p205 = scmp.eq.s32.totalorder %s20, 1
      %p206 = scmp.ne.s32.totalorder %s201, %s203
      %p207 = scmp.eq.s32.totalorder %s20, 0
      %p208 = por %p206, %p207
      %p209 = scmp.ne.s32.totalorder %s201, %s203
      %p210 = scmp.eq.s32.totalorder %s25, 1
      %p211 = por %p209, %p210
      %p212 = scmp.ne.s32.totalorder %s203, %s204
      %p213 = scmp.eq.s32.totalorder %s25, 0
      %p214 = por %p212, %p213
      %p215 = scmp.ne.s32.totalorder %s203, %s204
      %p216 = scmp.eq.s32.totalorder %s26, 1
      %p217 = por %p215, %p216
      %p219 = scmp.ne.s32.totalorder %s204, %s218
      %p220 = scmp.eq.s32.totalorder %s26, 0
      %p221 = por %p219, %p220
      %s223 = sadd.s32 %s222, 1
      %p226 = scmp.eq.s32.totalorder %s20, 1
      %p227 = scmp.ne.s32.totalorder %s222, %s224
      %p228 = scmp.eq.s32.totalorder %s20, 0
      %p229 = por %p227, %p228
      %p230 = scmp.ne.s32.totalorder %s222, %s224
      %p231 = scmp.eq.s32.totalorder %s25, 1
      %p232 = por %p230, %p231
      %p233 = scmp.ne.s32.totalorder %s224, %s225
      %p234 = scmp.eq.s32.totalorder %s25, 0
      %p235 = por %p233, %p234
      %p236 = scmp.ne.s32.totalorder %s224, %s225
      %p237 = scmp.eq.s32.totalorder %s26, 1
      %p238 = por %p236, %p237
      %p240 = scmp.ne.s32.totalorder %s225, %s239
      %p241 = scmp.eq.s32.totalorder %s26, 0
      %p242 = por %p240, %p241
      %s243 = ssub.s32 %s20, %s27
      %p244 = scmp.eq.s32.totalorder %s243, 0
      %s246 = sadd.s32 %s245, 1
      %s247 = scalar_select %p244, %s245, %s246
      %p250 = pneg %p244
      %p251 = scmp.eq.s32.totalorder %s20, 1
      %p252 = por %p250, %p251
      %p253 = scmp.ne.s32.totalorder %s245, %s248
      %p254 = scmp.eq.s32.totalorder %s20, 0
      %p255 = por %p253, %p254
      %p256 = scmp.ne.s32.totalorder %s245, %s248
      %p257 = scmp.eq.s32.totalorder %s25, 1
      %p258 = por %p256, %p257
      %p259 = scmp.ne.s32.totalorder %s248, %s249
      %p260 = scmp.eq.s32.totalorder %s25, 0
      %p261 = por %p259, %p260
      %p262 = scmp.ne.s32.totalorder %s248, %s249
      %p263 = scmp.eq.s32.totalorder %s26, 1
      %p264 = por %p262, %p263
      %p266 = scmp.ne.s32.totalorder %s249, %s265
      %p267 = scmp.eq.s32.totalorder %s26, 0
      %p268 = por %p266, %p267
      %p269 = scmp.le.s32.totalorder 1, %s20
      %p270 = scmp.lt.s32.totalorder %s20, 3
      %p271 = pnand %p269, %p270
      %p272 = pneg %p271
      // Predicated region
      $region9: #{tpu_custom_call.1} parent=5 // pred_check
        _
      $region10: #{tpu_custom_call.1} parent=5 // pred_check_branch
        %274 = sbr.rel (%p271) target = $region12
      $region11: #{tpu_custom_call.1} parent=5 // pred_region
        %s275 = ssub.s32 %s20, 1
        // Predicated region
        $region13: #{tpu_custom_call.1} parent=11 // pred_check
          %p276 = pneg %p67
        $region14: #{tpu_custom_call.1} parent=11 // pred_check_branch
          %278 = sbr.rel (%p276) target = $region16
        $region15: #{tpu_custom_call.1} parent=11 // pred_region
          _
        $region16: #{tpu_custom_call.1} parent=11 // pred_fallthru
          _
        // Predicated region
        $region17: #{tpu_custom_call.1} parent=11 // pred_check
          %p279 = pneg %p88
        $region18: #{tpu_custom_call.1} parent=11 // pred_check_branch
          %281 = sbr.rel (%p279) target = $region20
        $region19: #{tpu_custom_call.1} parent=11 // pred_region
          _
        $region20: #{tpu_custom_call.1} parent=11 // pred_fallthru
          _
        // Predicated region
        $region21: #{tpu_custom_call.1} parent=11 // pred_check
          %p282 = pneg %p109
        $region22: #{tpu_custom_call.1} parent=11 // pred_check_branch
          %284 = sbr.rel (%p282) target = $region24
        $region23: #{tpu_custom_call.1} parent=11 // pred_region
          _
        $region24: #{tpu_custom_call.1} parent=11 // pred_fallthru
          _
        // Predicated region
        $region25: #{tpu_custom_call.1} parent=11 // pred_check
          %p285 = pneg %p130
        $region26: #{tpu_custom_call.1} parent=11 // pred_check_branch
          %287 = sbr.rel (%p285) target = $region28
        $region27: #{tpu_custom_call.1} parent=11 // pred_region
          _
        $region28: #{tpu_custom_call.1} parent=11 // pred_fallthru
          _
        // Predicated region
        $region29: #{tpu_custom_call.1} parent=11 // pred_check
          %p288 = pneg %p151
        $region30: #{tpu_custom_call.1} parent=11 // pred_check_branch
          %290 = sbr.rel (%p288) target = $region32
        $region31: #{tpu_custom_call.1} parent=11 // pred_region
          _
        $region32: #{tpu_custom_call.1} parent=11 // pred_fallthru
          _
        // Predicated region
        $region33: #{tpu_custom_call.1} parent=11 // pred_check
          %p291 = pneg %p172
        $region34: #{tpu_custom_call.1} parent=11 // pred_check_branch
          %293 = sbr.rel (%p291) target = $region36
        $region35: #{tpu_custom_call.1} parent=11 // pred_region
          _
        $region36: #{tpu_custom_call.1} parent=11 // pred_fallthru
          _
        // Predicated region
        $region37: #{tpu_custom_call.1} parent=11 // pred_check
          %p294 = pneg %p193
        $region38: #{tpu_custom_call.1} parent=11 // pred_check_branch
          %296 = sbr.rel (%p294) target = $region40
        $region39: #{tpu_custom_call.1} parent=11 // pred_region
          _
        $region40: #{tpu_custom_call.1} parent=11 // pred_fallthru
          _
        // Predicated region
        $region41: #{tpu_custom_call.1} parent=11 // pred_check
          %p297 = pneg %p214
        $region42: #{tpu_custom_call.1} parent=11 // pred_check_branch
          %299 = sbr.rel (%p297) target = $region44
        $region43: #{tpu_custom_call.1} parent=11 // pred_region
          %301 = vsyncadd [#allocation3], 0
          %s303 = sshll.u32 %s8, 4
          %s304 = int_to_ptr.hbm [resolvable:$true] %s303
          %s305 = sshll.u32 [#allocation2], 4
          %s306 = int_to_ptr.vmem [resolvable:$true] %s305
          %308 = dma.hbm_to_vmem [thread:$0]  %s304, 128, %s306, [#allocation3]
        $region44: #{tpu_custom_call.1} parent=11 // pred_fallthru
          _
        // Predicated region
        $region45: #{tpu_custom_call.1} parent=11 // pred_check
          %p309 = pneg %p235
        $region46: #{tpu_custom_call.1} parent=11 // pred_check_branch
          %311 = sbr.rel (%p309) target = $region48
        $region47: #{tpu_custom_call.1} parent=11 // pred_region
          _
        $region48: #{tpu_custom_call.1} parent=11 // pred_fallthru
          _
      $region12: #{tpu_custom_call.1} parent=5 // pred_fallthru
        _
      %p312 = scmp.lt.s32.totalorder %s20, 2
      // Predicated region
      $region49: #{tpu_custom_call.1} parent=5 // pred_check
        %p313 = pneg %p312
      $region50: #{tpu_custom_call.1} parent=5 // pred_check_branch
        %315 = sbr.rel (%p313) target = $region52
      $region51: #{tpu_custom_call.1} parent=5 // pred_region
        // Predicated region
        $region53: #{tpu_custom_call.1} parent=51 // pred_check
          %p316 = pneg %p40
        $region54: #{tpu_custom_call.1} parent=51 // pred_check_branch
          %318 = sbr.rel (%p316) target = $region56
        $region55: #{tpu_custom_call.1} parent=51 // pred_region
          %s319 = smul.u32 8, %s20
          %p320 = scmp.lt.s32.totalorder %s319, 15
          %s321 = scalar_select %p320, %s319, 15
          %s322 = smul.addr %s321, 2
          %s323 = smul.addr %s322, 8
          %s324 = scalar_lea.vmem %s0, %s323
          %s325 = smul.u32 8, %s20
        $region56: #{tpu_custom_call.1} parent=51 // pred_fallthru
          _
      $region52: #{tpu_custom_call.1} parent=5 // pred_fallthru
        _
      %p326 = scmp.le.s32.totalorder 1, %s20
      %p327 = scmp.lt.s32.totalorder %s20, 3
      %p328 = pnand %p326, %p327
      %p329 = pneg %p328
      // Predicated region
      $region57: #{tpu_custom_call.1} parent=5 // pred_check
        _
      $region58: #{tpu_custom_call.1} parent=5 // pred_check_branch
        %331 = sbr.rel (%p328) target = $region60
      $region59: #{tpu_custom_call.1} parent=5 // pred_region
        %s332 = ssub.s32 %s20, 1
        // Predicated region
        $region61: #{tpu_custom_call.1} parent=59 // pred_check
          %p333 = pneg %p214
        $region62: #{tpu_custom_call.1} parent=59 // pred_check_branch
          %335 = sbr.rel (%p333) target = $region64
        $region63: #{tpu_custom_call.1} parent=59 // pred_region
          %337 = dma.done [#allocation3], 128
        $region64: #{tpu_custom_call.1} parent=59 // pred_fallthru
          _
        %s338 = smul.u32 8, %s25
        %p339 = scmp.lt.s32.totalorder %s338, 15
        %s340 = scalar_select %p339, %s338, 15
        %s341 = smul.addr %s340, 2
        %s342 = smul.addr %s341, 8
        %s343 = scalar_lea.vmem %s0, %s342
        %p344 = pneg %p46
        %p345 = pneg %p43
        %p346 = pneg %p67
        %p347 = pneg %p64
        %p348 = pneg %p88
        %p349 = pneg %p85
        %p350 = pneg %p109
        %p351 = pneg %p106
        %p352 = pneg %p130
        %p353 = pneg %p127
        %p354 = pneg %p151
        %p355 = pneg %p148
        %p356 = pneg %p172
        %p357 = pneg %p169
        %p358 = pneg %p193
        %p359 = pneg %p190
        %p360 = pneg %p214
        %p361 = pneg %p211
        %p362 = pneg %p235
        %p363 = pneg %p232
        %p364 = pneg %p261
        %p365 = pneg %p258
        %s366 = sand.u32 %s248, 1
        %s367 = scalar_lea.sflag [#allocation4], %s366
        %s368 = sand.u32 %s248, 1
        %s369 = smul.addr %s368, 128
        %s370 = scalar_lea.vmem [#allocation5], %s369
        %s371 = smul.u32 8, %s25
        %p372 = scmp.lt.s32.totalorder %s371, 15
        %s373 = scalar_select %p372, %s371, 15
        %s374 = smul.addr %s373, 2
        %s375 = smul.addr %s374, 8
        %s376 = scalar_lea.vmem %s0, %s375
        %s377 = smul.u32 8, %s25
        %s378 = smul.u32 8, %s25
        %v379 = vld [vmem:[%s376] sm:$0xff]
        %v380 = vld [vmem:[%s376 + $0x8] sm:$0xff]
        %v381 = vld [vmem:[%s376 + $0x10] sm:$0xff]
        %v382 = vld [vmem:[%s376 + $0x18] sm:$0xff]
        %v383 = vld [vmem:[%s376 + $0x20] sm:$0xff]
        %v384 = vld [vmem:[%s376 + $0x28] sm:$0xff]
        %v385 = vld [vmem:[%s376 + $0x30] sm:$0xff]
        %v386 = vld [vmem:[%s376 + $0x38] sm:$0xff]
        %v387 = vld [vmem:[%s376 + $0x40] sm:$0xff]
        %v388 = vld [vmem:[%s376 + $0x48] sm:$0xff]
        %v389 = vld [vmem:[%s376 + $0x50] sm:$0xff]
        %v390 = vld [vmem:[%s376 + $0x58] sm:$0xff]
        %v391 = vld [vmem:[%s376 + $0x60] sm:$0xff]
        %v392 = vld [vmem:[%s376 + $0x68] sm:$0xff]
        %v393 = vld [vmem:[%s376 + $0x70] sm:$0xff]
        %v394 = vld [vmem:[%s376 + $0x78] sm:$0xff]
        %v395 = vld [vmem:[%s1] sm:$0xff]
        %v396 = vld [vmem:[%s1 + $0x8] sm:$0xff]
        %v397 = vld [vmem:[%s1 + $0x10] sm:$0xff]
        %v398 = vld [vmem:[%s1 + $0x18] sm:$0xff]
        %v399 = vld [vmem:[%s1 + $0x20] sm:$0xff]
        %v400 = vld [vmem:[%s1 + $0x28] sm:$0xff]
        %v401 = vld [vmem:[%s1 + $0x30] sm:$0xff]
        %v402 = vld [vmem:[%s1 + $0x38] sm:$0xff]
        %v403 = vld [vmem:[%s1 + $0x40] sm:$0xff]
        %v404 = vld [vmem:[%s1 + $0x48] sm:$0xff]
        %v405 = vld [vmem:[%s1 + $0x50] sm:$0xff]
        %v406 = vld [vmem:[%s1 + $0x58] sm:$0xff]
        %v407 = vld [vmem:[%s1 + $0x60] sm:$0xff]
        %v408 = vld [vmem:[%s1 + $0x68] sm:$0xff]
        %v409 = vld [vmem:[%s1 + $0x70] sm:$0xff]
        %v410 = vld [vmem:[%s1 + $0x78] sm:$0xff]
        %v411 = vld [vmem:[%s1 + $0x80] sm:$0xff]
        %v412 = vld [vmem:[%s1 + $0x88] sm:$0xff]
        %v413 = vld [vmem:[%s1 + $0x90] sm:$0xff]
        %v414 = vld [vmem:[%s1 + $0x98] sm:$0xff]
        %v415 = vld [vmem:[%s1 + $0xa0] sm:$0xff]
        %v416 = vld [vmem:[%s1 + $0xa8] sm:$0xff]
        %v417 = vld [vmem:[%s1 + $0xb0] sm:$0xff]
        %v418 = vld [vmem:[%s1 + $0xb8] sm:$0xff]
        %v419 = vld [vmem:[%s1 + $0xc0] sm:$0xff]
        %v420 = vld [vmem:[%s1 + $0xc8] sm:$0xff]
        %v421 = vld [vmem:[%s1 + $0xd0] sm:$0xff]
        %v422 = vld [vmem:[%s1 + $0xd8] sm:$0xff]
        %v423 = vld [vmem:[%s1 + $0xe0] sm:$0xff]
        %v424 = vld [vmem:[%s1 + $0xe8] sm:$0xff]
        %v425 = vld [vmem:[%s1 + $0xf0] sm:$0xff]
        %v426 = vld [vmem:[%s1 + $0xf8] sm:$0xff]
        %v427 = vld [vmem:[%s4] sm:$0xff]
        %v428 = vld [vmem:[%s4 + $0x8] sm:$0xff]
        %v429 = vld [vmem:[%s4 + $0x10] sm:$0xff]
        %v430 = vld [vmem:[%s4 + $0x18] sm:$0xff]
        %v431 = vld [vmem:[%s4 + $0x20] sm:$0xff]
        %v432 = vld [vmem:[%s4 + $0x28] sm:$0xff]
        %v433 = vld [vmem:[%s4 + $0x30] sm:$0xff]
        %v434 = vld [vmem:[%s4 + $0x38] sm:$0xff]
        %v435 = vld [vmem:[%s5] sm:$0x1]
        %v436 = vld [vmem:[%s6] sm:$0xff]
        %v437 = vld [vmem:[%s7] sm:$0x1]
        %v438 = vld [vmem:[#allocation2] sm:$0xff]
        %v439 = vld [vmem:[%s9] sm:$0x1]
        %v440 = vand.u32 %v410, 4294901760
        %441 = vmatpush.msra.mxu0 %v440
        %v442 = vand.u32 %v409, 4294901760
        %443 = vmatpush.msra.mxu0 %v442
        %v444 = vand.u32 %v408, 4294901760
        %445 = vmatpush.msra.mxu0 %v444
        %v446 = vand.u32 %v407, 4294901760
        %447 = vmatpush.msra.mxu0 %v446
        %v448 = vand.u32 %v406, 4294901760
        %449 = vmatpush.msra.mxu0 %v448
        %v450 = vand.u32 %v405, 4294901760
        %451 = vmatpush.msra.mxu0 %v450
        %v452 = vand.u32 %v404, 4294901760
        %453 = vmatpush.msra.mxu0 %v452
        %v454 = vand.u32 %v403, 4294901760
        %455 = vmatpush.msra.mxu0 %v454
        %v456 = vand.u32 %v402, 4294901760
        %457 = vmatpush.msra.mxu0 %v456
        %v458 = vand.u32 %v401, 4294901760
        %459 = vmatpush.msra.mxu0 %v458
        %v460 = vand.u32 %v400, 4294901760
        %461 = vmatpush.msra.mxu0 %v460
        %v462 = vand.u32 %v399, 4294901760
        %463 = vmatpush.msra.mxu0 %v462
        %v464 = vand.u32 %v398, 4294901760
        %465 = vmatpush.msra.mxu0 %v464
        %v466 = vand.u32 %v397, 4294901760
        %467 = vmatpush.msra.mxu0 %v466
        %v468 = vand.u32 %v396, 4294901760
        %469 = vmatpush.msra.mxu0 %v468
        %v470 = vand.u32 %v395, 4294901760
        %471 = vmatpush.msra.mxu0 %v470
        %v472 = vand.u32 %v379, 4294901760
        %v473 = vsub.f32 %v379, %v472
        %v474 = vand.u32 %v473, 4294901760
        %v475 = vsub.f32 %v473, %v474
        %v476 = vand.u32 %v475, 4294901760
        %477 = vmatmul.f32.gmra.mxu0 %v476
        %v478 = vpop.f32.mrf.mxu0
        %v479 = vadd.f32 0.0, %v478
        %v480 = vand.u32 %v381, 4294901760
        %v481 = vsub.f32 %v381, %v480
        %v482 = vand.u32 %v481, 4294901760
        %v483 = vsub.f32 %v481, %v482
        %v484 = vand.u32 %v483, 4294901760
        %485 = vmatmul.f32.gmra.mxu0 %v484
        %v486 = vpop.f32.mrf.mxu0
        %v487 = vadd.f32 0.0, %v486
        %v488 = vand.u32 %v383, 4294901760
        %v489 = vsub.f32 %v383, %v488
        %v490 = vand.u32 %v489, 4294901760
        %v491 = vsub.f32 %v489, %v490
        %v492 = vand.u32 %v491, 4294901760
        %493 = vmatmul.f32.gmra.mxu0 %v492
        %v494 = vpop.f32.mrf.mxu0
        %v495 = vadd.f32 0.0, %v494
        %v496 = vand.u32 %v385, 4294901760
        %v497 = vsub.f32 %v385, %v496
        %v498 = vand.u32 %v497, 4294901760
        %v499 = vsub.f32 %v497, %v498
        %v500 = vand.u32 %v499, 4294901760
        %501 = vmatmul.f32.gmra.mxu0 %v500
        %v502 = vpop.f32.mrf.mxu0
        %v503 = vadd.f32 0.0, %v502
        %v504 = vand.u32 %v387, 4294901760
        %v505 = vsub.f32 %v387, %v504
        %v506 = vand.u32 %v505, 4294901760
        %v507 = vsub.f32 %v505, %v506
        %v508 = vand.u32 %v507, 4294901760
        %509 = vmatmul.f32.gmra.mxu0 %v508
        %v510 = vpop.f32.mrf.mxu0
        %v511 = vadd.f32 0.0, %v510
        %v512 = vand.u32 %v389, 4294901760
        %v513 = vsub.f32 %v389, %v512
        %v514 = vand.u32 %v513, 4294901760
        %v515 = vsub.f32 %v513, %v514
        %v516 = vand.u32 %v515, 4294901760
        %517 = vmatmul.f32.gmra.mxu0 %v516
        %v518 = vpop.f32.mrf.mxu0
        %v519 = vadd.f32 0.0, %v518
        %v520 = vand.u32 %v391, 4294901760
        %v521 = vsub.f32 %v391, %v520
        %v522 = vand.u32 %v521, 4294901760
        %v523 = vsub.f32 %v521, %v522
        %v524 = vand.u32 %v523, 4294901760
        %525 = vmatmul.f32.gmra.mxu0 %v524
        %v526 = vpop.f32.mrf.mxu0
        %v527 = vadd.f32 0.0, %v526
        %v528 = vand.u32 %v393, 4294901760
        %v529 = vsub.f32 %v393, %v528
        %v530 = vand.u32 %v529, 4294901760
        %v531 = vsub.f32 %v529, %v530
        %v532 = vand.u32 %v531, 4294901760
        %533 = vmatmul.f32.gmra.mxu0 %v532
        %v534 = vpop.f32.mrf.mxu0
        %v535 = vadd.f32 0.0, %v534
        %536 = vdwg.mxu0
        %v537 = vand.u32 %v410, 4294901760
        %v538 = vsub.f32 %v410, %v537
        %v539 = vand.u32 %v538, 4294901760
        %v540 = vsub.f32 %v538, %v539
        %v541 = vand.u32 %v540, 4294901760
        %542 = vmatpush.msra.mxu0 %v541
        %v543 = vand.u32 %v409, 4294901760
        %v544 = vsub.f32 %v409, %v543
        %v545 = vand.u32 %v544, 4294901760
        %v546 = vsub.f32 %v544, %v545
        %v547 = vand.u32 %v546, 4294901760
        %548 = vmatpush.msra.mxu0 %v547
        %v549 = vand.u32 %v408, 4294901760
        %v550 = vsub.f32 %v408, %v549
        %v551 = vand.u32 %v550, 4294901760
        %v552 = vsub.f32 %v550, %v551
        %v553 = vand.u32 %v552, 4294901760
        %554 = vmatpush.msra.mxu0 %v553
        %v555 = vand.u32 %v407, 4294901760
        %v556 = vsub.f32 %v407, %v555
        %v557 = vand.u32 %v556, 4294901760
        %v558 = vsub.f32 %v556, %v557
        %v559 = vand.u32 %v558, 4294901760
        %560 = vmatpush.msra.mxu0 %v559
        %v561 = vand.u32 %v406, 4294901760
        %v562 = vsub.f32 %v406, %v561
        %v563 = vand.u32 %v562, 4294901760
        %v564 = vsub.f32 %v562, %v563
        %v565 = vand.u32 %v564, 4294901760
        %566 = vmatpush.msra.mxu0 %v565
        %v567 = vand.u32 %v405, 4294901760
        %v568 = vsub.f32 %v405, %v567
        %v569 = vand.u32 %v568, 4294901760
        %v570 = vsub.f32 %v568, %v569
        %v571 = vand.u32 %v570, 4294901760
        %572 = vmatpush.msra.mxu0 %v571
        %v573 = vand.u32 %v404, 4294901760
        %v574 = vsub.f32 %v404, %v573
        %v575 = vand.u32 %v574, 4294901760
        %v576 = vsub.f32 %v574, %v575
        %v577 = vand.u32 %v576, 4294901760
        %578 = vmatpush.msra.mxu0 %v577
        %v579 = vand.u32 %v403, 4294901760
        %v580 = vsub.f32 %v403, %v579
        %v581 = vand.u32 %v580, 4294901760
        %v582 = vsub.f32 %v580, %v581
        %v583 = vand.u32 %v582, 4294901760
        %584 = vmatpush.msra.mxu0 %v583
        %v585 = vand.u32 %v402, 4294901760
        %v586 = vsub.f32 %v402, %v585
        %v587 = vand.u32 %v586, 4294901760
        %v588 = vsub.f32 %v586, %v587
        %v589 = vand.u32 %v588, 4294901760
        %590 = vmatpush.msra.mxu0 %v589
        %v591 = vand.u32 %v401, 4294901760
        %v592 = vsub.f32 %v401, %v591
        %v593 = vand.u32 %v592, 4294901760
        %v594 = vsub.f32 %v592, %v593
        %v595 = vand.u32 %v594, 4294901760
        %596 = vmatpush.msra.mxu0 %v595
        %v597 = vand.u32 %v400, 4294901760
        %v598 = vsub.f32 %v400, %v597
        %v599 = vand.u32 %v598, 4294901760
        %v600 = vsub.f32 %v598, %v599
        %v601 = vand.u32 %v600, 4294901760
        %602 = vmatpush.msra.mxu0 %v601
        %v603 = vand.u32 %v399, 4294901760
        %v604 = vsub.f32 %v399, %v603
        %v605 = vand.u32 %v604, 4294901760
        %v606 = vsub.f32 %v604, %v605
        %v607 = vand.u32 %v606, 4294901760
        %608 = vmatpush.msra.mxu0 %v607
        %v609 = vand.u32 %v398, 4294901760
        %v610 = vsub.f32 %v398, %v609
        %v611 = vand.u32 %v610, 4294901760
        %v612 = vsub.f32 %v610, %v611
        %v613 = vand.u32 %v612, 4294901760
        %614 = vmatpush.msra.mxu0 %v613
        %v615 = vand.u32 %v397, 4294901760
        %v616 = vsub.f32 %v397, %v615
        %v617 = vand.u32 %v616, 4294901760
        %v618 = vsub.f32 %v616, %v617
        %v619 = vand.u32 %v618, 4294901760
        %620 = vmatpush.msra.mxu0 %v619
        %v621 = vand.u32 %v396, 4294901760
        %v622 = vsub.f32 %v396, %v621
        %v623 = vand.u32 %v622, 4294901760
        %v624 = vsub.f32 %v622, %v623
        %v625 = vand.u32 %v624, 4294901760
        %626 = vmatpush.msra.mxu0 %v625
        %v627 = vand.u32 %v395, 4294901760
        %v628 = vsub.f32 %v395, %v627
        %v629 = vand.u32 %v628, 4294901760
        %v630 = vsub.f32 %v628, %v629
        %v631 = vand.u32 %v630, 4294901760
        %632 = vmatpush.msra.mxu0 %v631
        %v633 = vand.u32 %v379, 4294901760
        %634 = vmatmul.f32.gmra.mxu0 %v633
        %v635 = vpop.f32.mrf.mxu0
        %v636 = vadd.f32 %v479, %v635
        %v637 = vand.u32 %v381, 4294901760
        %638 = vmatmul.f32.gmra.mxu0 %v637
        %v639 = vpop.f32.mrf.mxu0
        %v640 = vadd.f32 %v487, %v639
        %v641 = vand.u32 %v383, 4294901760
        %642 = vmatmul.f32.gmra.mxu0 %v641
        %v643 = vpop.f32.mrf.mxu0
        %v644 = vadd.f32 %v495, %v643
        %v645 = vand.u32 %v385, 4294901760
        %646 = vmatmul.f32.gmra.mxu0 %v645
        %v647 = vpop.f32.mrf.mxu0
        %v648 = vadd.f32 %v503, %v647
        %v649 = vand.u32 %v387, 4294901760
        %650 = vmatmul.f32.gmra.mxu0 %v649
        %v651 = vpop.f32.mrf.mxu0
        %v652 = vadd.f32 %v511, %v651
        %v653 = vand.u32 %v389, 4294901760
        %654 = vmatmul.f32.gmra.mxu0 %v653
        %v655 = vpop.f32.mrf.mxu0
        %v656 = vadd.f32 %v519, %v655
        %v657 = vand.u32 %v391, 4294901760
        %658 = vmatmul.f32.gmra.mxu0 %v657
        %v659 = vpop.f32.mrf.mxu0
        %v660 = vadd.f32 %v527, %v659
        %v661 = vand.u32 %v393, 4294901760
        %662 = vmatmul.f32.gmra.mxu0 %v661
        %v663 = vpop.f32.mrf.mxu0
        %v664 = vadd.f32 %v535, %v663
        %665 = vdwg.mxu0
        %v666 = vand.u32 %v410, 4294901760
        %v667 = vsub.f32 %v410, %v666
        %668 = vmatpush.msra.mxu0 %v667
        %v669 = vand.u32 %v409, 4294901760
        %v670 = vsub.f32 %v409, %v669
        %671 = vmatpush.msra.mxu0 %v670
        %v672 = vand.u32 %v408, 4294901760
        %v673 = vsub.f32 %v408, %v672
        %674 = vmatpush.msra.mxu0 %v673
        %v675 = vand.u32 %v407, 4294901760
        %v676 = vsub.f32 %v407, %v675
        %677 = vmatpush.msra.mxu0 %v676
        %v678 = vand.u32 %v406, 4294901760
        %v679 = vsub.f32 %v406, %v678
        %680 = vmatpush.msra.mxu0 %v679
        %v681 = vand.u32 %v405, 4294901760
        %v682 = vsub.f32 %v405, %v681
        %683 = vmatpush.msra.mxu0 %v682
        %v684 = vand.u32 %v404, 4294901760
        %v685 = vsub.f32 %v404, %v684
        %686 = vmatpush.msra.mxu0 %v685
        %v687 = vand.u32 %v403, 4294901760
        %v688 = vsub.f32 %v403, %v687
        %689 = vmatpush.msra.mxu0 %v688
        %v690 = vand.u32 %v402, 4294901760
        %v691 = vsub.f32 %v402, %v690
        %692 = vmatpush.msra.mxu0 %v691
        %v693 = vand.u32 %v401, 4294901760
        %v694 = vsub.f32 %v401, %v693
        %695 = vmatpush.msra.mxu0 %v694
        %v696 = vand.u32 %v400, 4294901760
        %v697 = vsub.f32 %v400, %v696
        %698 = vmatpush.msra.mxu0 %v697
        %v699 = vand.u32 %v399, 4294901760
        %v700 = vsub.f32 %v399, %v699
        %701 = vmatpush.msra.mxu0 %v700
        %v702 = vand.u32 %v398, 4294901760
        %v703 = vsub.f32 %v398, %v702
        %704 = vmatpush.msra.mxu0 %v703
        %v705 = vand.u32 %v397, 4294901760
        %v706 = vsub.f32 %v397, %v705
        %707 = vmatpush.msra.mxu0 %v706
        %v708 = vand.u32 %v396, 4294901760
        %v709 = vsub.f32 %v396, %v708
        %710 = vmatpush.msra.mxu0 %v709
        %v711 = vand.u32 %v395, 4294901760
        %v712 = vsub.f32 %v395, %v711
        %713 = vmatpush.msra.mxu0 %v712
        %v714 = vand.u32 %v379, 4294901760
        %v715 = vsub.f32 %v379, %v714
        %716 = vmatmul.f32.gmra.mxu0 %v715
        %v717 = vpop.f32.mrf.mxu0
        %v718 = vadd.f32 %v636, %v717
        %v719 = vand.u32 %v381, 4294901760
        %v720 = vsub.f32 %v381, %v719
        %721 = vmatmul.f32.gmra.mxu0 %v720
        %v722 = vpop.f32.mrf.mxu0
        %v723 = vadd.f32 %v640, %v722
        %v724 = vand.u32 %v383, 4294901760
        %v725 = vsub.f32 %v383, %v724
        %726 = vmatmul.f32.gmra.mxu0 %v725
        %v727 = vpop.f32.mrf.mxu0
        %v728 = vadd.f32 %v644, %v727
        %v729 = vand.u32 %v385, 4294901760
        %v730 = vsub.f32 %v385, %v729
        %731 = vmatmul.f32.gmra.mxu0 %v730
        %v732 = vpop.f32.mrf.mxu0
        %v733 = vadd.f32 %v648, %v732
        %v734 = vand.u32 %v387, 4294901760
        %v735 = vsub.f32 %v387, %v734
        %736 = vmatmul.f32.gmra.mxu0 %v735
        %v737 = vpop.f32.mrf.mxu0
        %v738 = vadd.f32 %v652, %v737
        %v739 = vand.u32 %v389, 4294901760
        %v740 = vsub.f32 %v389, %v739
        %741 = vmatmul.f32.gmra.mxu0 %v740
        %v742 = vpop.f32.mrf.mxu0
        %v743 = vadd.f32 %v656, %v742
        %v744 = vand.u32 %v391, 4294901760
        %v745 = vsub.f32 %v391, %v744
        %746 = vmatmul.f32.gmra.mxu0 %v745
        %v747 = vpop.f32.mrf.mxu0
        %v748 = vadd.f32 %v660, %v747
        %v749 = vand.u32 %v393, 4294901760
        %v750 = vsub.f32 %v393, %v749
        %751 = vmatmul.f32.gmra.mxu0 %v750
        %v752 = vpop.f32.mrf.mxu0
        %v753 = vadd.f32 %v664, %v752
        %754 = vdwg.mxu0
        %v755 = vand.u32 %v410, 4294901760
        %756 = vmatpush.msra.mxu0 %v755
        %v757 = vand.u32 %v409, 4294901760
        %758 = vmatpush.msra.mxu0 %v757
        %v759 = vand.u32 %v408, 4294901760
        %760 = vmatpush.msra.mxu0 %v759
        %v761 = vand.u32 %v407, 4294901760
        %762 = vmatpush.msra.mxu0 %v761
        %v763 = vand.u32 %v406, 4294901760
        %764 = vmatpush.msra.mxu0 %v763
        %v765 = vand.u32 %v405, 4294901760
        %766 = vmatpush.msra.mxu0 %v765
        %v767 = vand.u32 %v404, 4294901760
        %768 = vmatpush.msra.mxu0 %v767
        %v769 = vand.u32 %v403, 4294901760
        %770 = vmatpush.msra.mxu0 %v769
        %v771 = vand.u32 %v402, 4294901760
        %772 = vmatpush.msra.mxu0 %v771
        %v773 = vand.u32 %v401, 4294901760
        %774 = vmatpush.msra.mxu0 %v773
        %v775 = vand.u32 %v400, 4294901760
        %776 = vmatpush.msra.mxu0 %v775
        %v777 = vand.u32 %v399, 4294901760
        %778 = vmatpush.msra.mxu0 %v777
        %v779 = vand.u32 %v398, 4294901760
        %780 = vmatpush.msra.mxu0 %v779
        %v781 = vand.u32 %v397, 4294901760
        %782 = vmatpush.msra.mxu0 %v781
        %v783 = vand.u32 %v396, 4294901760
        %784 = vmatpush.msra.mxu0 %v783
        %v785 = vand.u32 %v395, 4294901760
        %786 = vmatpush.msra.mxu0 %v785
        %v787 = vand.u32 %v379, 4294901760
        %v788 = vsub.f32 %v379, %v787
        %v789 = vand.u32 %v788, 4294901760
        %790 = vmatmul.f32.gmra.mxu0 %v789
        %v791 = vpop.f32.mrf.mxu0
        %v792 = vadd.f32 %v718, %v791
        %v793 = vand.u32 %v381, 4294901760
        %v794 = vsub.f32 %v381, %v793
        %v795 = vand.u32 %v794, 4294901760
        %796 = vmatmul.f32.gmra.mxu0 %v795
        %v797 = vpop.f32.mrf.mxu0
        %v798 = vadd.f32 %v723, %v797
        %v799 = vand.u32 %v383, 4294901760
        %v800 = vsub.f32 %v383, %v799
        %v801 = vand.u32 %v800, 4294901760
        %802 = vmatmul.f32.gmra.mxu0 %v801
        %v803 = vpop.f32.mrf.mxu0
        %v804 = vadd.f32 %v728, %v803
        %v805 = vand.u32 %v385, 4294901760
        %v806 = vsub.f32 %v385, %v805
        %v807 = vand.u32 %v806, 4294901760
        %808 = vmatmul.f32.gmra.mxu0 %v807
        %v809 = vpop.f32.mrf.mxu0
        %v810 = vadd.f32 %v733, %v809
        %v811 = vand.u32 %v387, 4294901760
        %v812 = vsub.f32 %v387, %v811
        %v813 = vand.u32 %v812, 4294901760
        %814 = vmatmul.f32.gmra.mxu0 %v813
        %v815 = vpop.f32.mrf.mxu0
        %v816 = vadd.f32 %v738, %v815
        %v817 = vand.u32 %v389, 4294901760
        %v818 = vsub.f32 %v389, %v817
        %v819 = vand.u32 %v818, 4294901760
        %820 = vmatmul.f32.gmra.mxu0 %v819
        %v821 = vpop.f32.mrf.mxu0
        %v822 = vadd.f32 %v743, %v821
        %v823 = vand.u32 %v391, 4294901760
        %v824 = vsub.f32 %v391, %v823
        %v825 = vand.u32 %v824, 4294901760
        %826 = vmatmul.f32.gmra.mxu0 %v825
        %v827 = vpop.f32.mrf.mxu0
        %v828 = vadd.f32 %v748, %v827
        %v829 = vand.u32 %v393, 4294901760
        %v830 = vsub.f32 %v393, %v829
        %v831 = vand.u32 %v830, 4294901760
        %832 = vmatmul.f32.gmra.mxu0 %v831
        %v833 = vpop.f32.mrf.mxu0
        %v834 = vadd.f32 %v753, %v833
        %835 = vdwg.mxu0
        %v836 = vand.u32 %v410, 4294901760
        %v837 = vsub.f32 %v410, %v836
        %v838 = vand.u32 %v837, 4294901760
        %839 = vmatpush.msra.mxu0 %v838
        %v840 = vand.u32 %v409, 4294901760
        %v841 = vsub.f32 %v409, %v840
        %v842 = vand.u32 %v841, 4294901760
        %843 = vmatpush.msra.mxu0 %v842
        %v844 = vand.u32 %v408, 4294901760
        %v845 = vsub.f32 %v408, %v844
        %v846 = vand.u32 %v845, 4294901760
        %847 = vmatpush.msra.mxu0 %v846
        %v848 = vand.u32 %v407, 4294901760
        %v849 = vsub.f32 %v407, %v848
        %v850 = vand.u32 %v849, 4294901760
        %851 = vmatpush.msra.mxu0 %v850
        %v852 = vand.u32 %v406, 4294901760
        %v853 = vsub.f32 %v406, %v852
        %v854 = vand.u32 %v853, 4294901760
        %855 = vmatpush.msra.mxu0 %v854
        %v856 = vand.u32 %v405, 4294901760
        %v857 = vsub.f32 %v405, %v856
        %v858 = vand.u32 %v857, 4294901760
        %859 = vmatpush.msra.mxu0 %v858
        %v860 = vand.u32 %v404, 4294901760
        %v861 = vsub.f32 %v404, %v860
        %v862 = vand.u32 %v861, 4294901760
        %863 = vmatpush.msra.mxu0 %v862
        %v864 = vand.u32 %v403, 4294901760
        %v865 = vsub.f32 %v403, %v864
        %v866 = vand.u32 %v865, 4294901760
        %867 = vmatpush.msra.mxu0 %v866
        %v868 = vand.u32 %v402, 4294901760
        %v869 = vsub.f32 %v402, %v868
        %v870 = vand.u32 %v869, 4294901760
        %871 = vmatpush.msra.mxu0 %v870
        %v872 = vand.u32 %v401, 4294901760
        %v873 = vsub.f32 %v401, %v872
        %v874 = vand.u32 %v873, 4294901760
        %875 = vmatpush.msra.mxu0 %v874
        %v876 = vand.u32 %v400, 4294901760
        %v877 = vsub.f32 %v400, %v876
        %v878 = vand.u32 %v877, 4294901760
        %879 = vmatpush.msra.mxu0 %v878
        %v880 = vand.u32 %v399, 4294901760
        %v881 = vsub.f32 %v399, %v880
        %v882 = vand.u32 %v881, 4294901760
        %883 = vmatpush.msra.mxu0 %v882
        %v884 = vand.u32 %v398, 4294901760
        %v885 = vsub.f32 %v398, %v884
        %v886 = vand.u32 %v885, 4294901760
        %887 = vmatpush.msra.mxu0 %v886
        %v888 = vand.u32 %v397, 4294901760
        %v889 = vsub.f32 %v397, %v888
        %v890 = vand.u32 %v889, 4294901760
        %891 = vmatpush.msra.mxu0 %v890
        %v892 = vand.u32 %v396, 4294901760
        %v893 = vsub.f32 %v396, %v892
        %v894 = vand.u32 %v893, 4294901760
        %895 = vmatpush.msra.mxu0 %v894
        %v896 = vand.u32 %v395, 4294901760
        %v897 = vsub.f32 %v395, %v896
        %v898 = vand.u32 %v897, 4294901760
        %899 = vmatpush.msra.mxu0 %v898
        %v900 = vand.u32 %v379, 4294901760
        %901 = vmatmul.f32.gmra.mxu0 %v900
        %v902 = vpop.f32.mrf.mxu0
        %v903 = vadd.f32 %v792, %v902
        %v904 = vand.u32 %v381, 4294901760
        %905 = vmatmul.f32.gmra.mxu0 %v904
        %v906 = vpop.f32.mrf.mxu0
        %v907 = vadd.f32 %v798, %v906
        %v908 = vand.u32 %v383, 4294901760
        %909 = vmatmul.f32.gmra.mxu0 %v908
        %v910 = vpop.f32.mrf.mxu0
        %v911 = vadd.f32 %v804, %v910
        %v912 = vand.u32 %v385, 4294901760
        %913 = vmatmul.f32.gmra.mxu0 %v912
        %v914 = vpop.f32.mrf.mxu0
        %v915 = vadd.f32 %v810, %v914
        %v916 = vand.u32 %v387, 4294901760
        %917 = vmatmul.f32.gmra.mxu0 %v916
        %v918 = vpop.f32.mrf.mxu0
        %v919 = vadd.f32 %v816, %v918
        %v920 = vand.u32 %v389, 4294901760
        %921 = vmatmul.f32.gmra.mxu0 %v920
        %v922 = vpop.f32.mrf.mxu0
        %v923 = vadd.f32 %v822, %v922
        %v924 = vand.u32 %v391, 4294901760
        %925 = vmatmul.f32.gmra.mxu0 %v924
        %v926 = vpop.f32.mrf.mxu0
        %v927 = vadd.f32 %v828, %v926
        %v928 = vand.u32 %v393, 4294901760
        %929 = vmatmul.f32.gmra.mxu0 %v928
        %v930 = vpop.f32.mrf.mxu0
        %v931 = vadd.f32 %v834, %v930
        %932 = vdwg.mxu0
        %v933 = vand.u32 %v410, 4294901760
        %934 = vmatpush.msra.mxu0 %v933
        %v935 = vand.u32 %v409, 4294901760
        %936 = vmatpush.msra.mxu0 %v935
        %v937 = vand.u32 %v408, 4294901760
        %938 = vmatpush.msra.mxu0 %v937
        %v939 = vand.u32 %v407, 4294901760
        %940 = vmatpush.msra.mxu0 %v939
        %v941 = vand.u32 %v406, 4294901760
        %942 = vmatpush.msra.mxu0 %v941
        %v943 = vand.u32 %v405, 4294901760
        %944 = vmatpush.msra.mxu0 %v943
        %v945 = vand.u32 %v404, 4294901760
        %946 = vmatpush.msra.mxu0 %v945
        %v947 = vand.u32 %v403, 4294901760
        %948 = vmatpush.msra.mxu0 %v947
        %v949 = vand.u32 %v402, 4294901760
        %950 = vmatpush.msra.mxu0 %v949
        %v951 = vand.u32 %v401, 4294901760
        %952 = vmatpush.msra.mxu0 %v951
        %v953 = vand.u32 %v400, 4294901760
        %954 = vmatpush.msra.mxu0 %v953
        %v955 = vand.u32 %v399, 4294901760
        %956 = vmatpush.msra.mxu0 %v955
        %v957 = vand.u32 %v398, 4294901760
        %958 = vmatpush.msra.mxu0 %v957
        %v959 = vand.u32 %v397, 4294901760
        %960 = vmatpush.msra.mxu0 %v959
        %v961 = vand.u32 %v396, 4294901760
        %962 = vmatpush.msra.mxu0 %v961
        %v963 = vand.u32 %v395, 4294901760
        %964 = vmatpush.msra.mxu0 %v963
        %v965 = vand.u32 %v379, 4294901760
        %966 = vmatmul.f32.gmra.mxu0 %v965
        %v967 = vpop.f32.mrf.mxu0
        %v968 = vadd.f32 %v903, %v967
        %v969 = vand.u32 %v381, 4294901760
        %970 = vmatmul.f32.gmra.mxu0 %v969
        %v971 = vpop.f32.mrf.mxu0
        %v972 = vadd.f32 %v907, %v971
        %v973 = vand.u32 %v383, 4294901760
        %974 = vmatmul.f32.gmra.mxu0 %v973
        %v975 = vpop.f32.mrf.mxu0
        %v976 = vadd.f32 %v911, %v975
        %v977 = vand.u32 %v385, 4294901760
        %978 = vmatmul.f32.gmra.mxu0 %v977
        %v979 = vpop.f32.mrf.mxu0
        %v980 = vadd.f32 %v915, %v979
        %v981 = vand.u32 %v387, 4294901760
        %982 = vmatmul.f32.gmra.mxu0 %v981
        %v983 = vpop.f32.mrf.mxu0
        %v984 = vadd.f32 %v919, %v983
        %v985 = vand.u32 %v389, 4294901760
        %986 = vmatmul.f32.gmra.mxu0 %v985
        %v987 = vpop.f32.mrf.mxu0
        %v988 = vadd.f32 %v923, %v987
        %v989 = vand.u32 %v391, 4294901760
        %990 = vmatmul.f32.gmra.mxu0 %v989
        %v991 = vpop.f32.mrf.mxu0
        %v992 = vadd.f32 %v927, %v991
        %v993 = vand.u32 %v393, 4294901760
        %994 = vmatmul.f32.gmra.mxu0 %v993
        %v995 = vpop.f32.mrf.mxu0
        %v996 = vadd.f32 %v931, %v995
        %997 = vdwg.mxu0
        %v998 = vand.u32 %v426, 4294901760
        %999 = vmatpush.msra.mxu0 %v998
        %v1000 = vand.u32 %v425, 4294901760
        %1001 = vmatpush.msra.mxu0 %v1000
        %v1002 = vand.u32 %v424, 4294901760
        %1003 = vmatpush.msra.mxu0 %v1002
        %v1004 = vand.u32 %v423, 4294901760
        %1005 = vmatpush.msra.mxu0 %v1004
        %v1006 = vand.u32 %v422, 4294901760
        %1007 = vmatpush.msra.mxu0 %v1006
        %v1008 = vand.u32 %v421, 4294901760
        %1009 = vmatpush.msra.mxu0 %v1008
        %v1010 = vand.u32 %v420, 4294901760
        %1011 = vmatpush.msra.mxu0 %v1010
        %v1012 = vand.u32 %v419, 4294901760
        %1013 = vmatpush.msra.mxu0 %v1012
        %v1014 = vand.u32 %v418, 4294901760
        %1015 = vmatpush.msra.mxu0 %v1014
        %v1016 = vand.u32 %v417, 4294901760
        %1017 = vmatpush.msra.mxu0 %v1016
        %v1018 = vand.u32 %v416, 4294901760
        %1019 = vmatpush.msra.mxu0 %v1018
        %v1020 = vand.u32 %v415, 4294901760
        %1021 = vmatpush.msra.mxu0 %v1020
        %v1022 = vand.u32 %v414, 4294901760
        %1023 = vmatpush.msra.mxu0 %v1022
        %v1024 = vand.u32 %v413, 4294901760
        %1025 = vmatpush.msra.mxu0 %v1024
        %v1026 = vand.u32 %v412, 4294901760
        %1027 = vmatpush.msra.mxu0 %v1026
        %v1028 = vand.u32 %v411, 4294901760
        %1029 = vmatpush.msra.mxu0 %v1028
        %v1030 = vand.u32 %v380, 4294901760
        %v1031 = vsub.f32 %v380, %v1030
        %v1032 = vand.u32 %v1031, 4294901760
        %v1033 = vsub.f32 %v1031, %v1032
        %v1034 = vand.u32 %v1033, 4294901760
        %1035 = vmatmul.f32.gmra.mxu0 %v1034
        %v1036 = vpop.f32.mrf.mxu0
        %v1037 = vadd.f32 %v968, %v1036
        %v1038 = vand.u32 %v382, 4294901760
        %v1039 = vsub.f32 %v382, %v1038
        %v1040 = vand.u32 %v1039, 4294901760
        %v1041 = vsub.f32 %v1039, %v1040
        %v1042 = vand.u32 %v1041, 4294901760
        %1043 = vmatmul.f32.gmra.mxu0 %v1042
        %v1044 = vpop.f32.mrf.mxu0
        %v1045 = vadd.f32 %v972, %v1044
        %v1046 = vand.u32 %v384, 4294901760
        %v1047 = vsub.f32 %v384, %v1046
        %v1048 = vand.u32 %v1047, 4294901760
        %v1049 = vsub.f32 %v1047, %v1048
        %v1050 = vand.u32 %v1049, 4294901760
        %1051 = vmatmul.f32.gmra.mxu0 %v1050
        %v1052 = vpop.f32.mrf.mxu0
        %v1053 = vadd.f32 %v976, %v1052
        %v1054 = vand.u32 %v386, 4294901760
        %v1055 = vsub.f32 %v386, %v1054
        %v1056 = vand.u32 %v1055, 4294901760
        %v1057 = vsub.f32 %v1055, %v1056
        %v1058 = vand.u32 %v1057, 4294901760
        %1059 = vmatmul.f32.gmra.mxu0 %v1058
        %v1060 = vpop.f32.mrf.mxu0
        %v1061 = vadd.f32 %v980, %v1060
        %v1062 = vand.u32 %v388, 4294901760
        %v1063 = vsub.f32 %v388, %v1062
        %v1064 = vand.u32 %v1063, 4294901760
        %v1065 = vsub.f32 %v1063, %v1064
        %v1066 = vand.u32 %v1065, 4294901760
        %1067 = vmatmul.f32.gmra.mxu0 %v1066
        %v1068 = vpop.f32.mrf.mxu0
        %v1069 = vadd.f32 %v984, %v1068
        %v1070 = vand.u32 %v390, 4294901760
        %v1071 = vsub.f32 %v390, %v1070
        %v1072 = vand.u32 %v1071, 4294901760
        %v1073 = vsub.f32 %v1071, %v1072
        %v1074 = vand.u32 %v1073, 4294901760
        %1075 = vmatmul.f32.gmra.mxu0 %v1074
        %v1076 = vpop.f32.mrf.mxu0
        %v1077 = vadd.f32 %v988, %v1076
        %v1078 = vand.u32 %v392, 4294901760
        %v1079 = vsub.f32 %v392, %v1078
        %v1080 = vand.u32 %v1079, 4294901760
        %v1081 = vsub.f32 %v1079, %v1080
        %v1082 = vand.u32 %v1081, 4294901760
        %1083 = vmatmul.f32.gmra.mxu0 %v1082
        %v1084 = vpop.f32.mrf.mxu0
        %v1085 = vadd.f32 %v992, %v1084
        %v1086 = vand.u32 %v394, 4294901760
        %v1087 = vsub.f32 %v394, %v1086
        %v1088 = vand.u32 %v1087, 4294901760
        %v1089 = vsub.f32 %v1087, %v1088
        %v1090 = vand.u32 %v1089, 4294901760
        %1091 = vmatmul.f32.gmra.mxu0 %v1090
        %v1092 = vpop.f32.mrf.mxu0
        %v1093 = vadd.f32 %v996, %v1092
        %1094 = vdwg.mxu0
        %v1095 = vand.u32 %v426, 4294901760
        %v1096 = vsub.f32 %v426, %v1095
        %v1097 = vand.u32 %v1096, 4294901760
        %v1098 = vsub.f32 %v1096, %v1097
        %v1099 = vand.u32 %v1098, 4294901760
        %1100 = vmatpush.msra.mxu0 %v1099
        %v1101 = vand.u32 %v425, 4294901760
        %v1102 = vsub.f32 %v425, %v1101
        %v1103 = vand.u32 %v1102, 4294901760
        %v1104 = vsub.f32 %v1102, %v1103
        %v1105 = vand.u32 %v1104, 4294901760
        %1106 = vmatpush.msra.mxu0 %v1105
        %v1107 = vand.u32 %v424, 4294901760
        %v1108 = vsub.f32 %v424, %v1107
        %v1109 = vand.u32 %v1108, 4294901760
        %v1110 = vsub.f32 %v1108, %v1109
        %v1111 = vand.u32 %v1110, 4294901760
        %1112 = vmatpush.msra.mxu0 %v1111
        %v1113 = vand.u32 %v423, 4294901760
        %v1114 = vsub.f32 %v423, %v1113
        %v1115 = vand.u32 %v1114, 4294901760
        %v1116 = vsub.f32 %v1114, %v1115
        %v1117 = vand.u32 %v1116, 4294901760
        %1118 = vmatpush.msra.mxu0 %v1117
        %v1119 = vand.u32 %v422, 4294901760
        %v1120 = vsub.f32 %v422, %v1119
        %v1121 = vand.u32 %v1120, 4294901760
        %v1122 = vsub.f32 %v1120, %v1121
        %v1123 = vand.u32 %v1122, 4294901760
        %1124 = vmatpush.msra.mxu0 %v1123
        %v1125 = vand.u32 %v421, 4294901760
        %v1126 = vsub.f32 %v421, %v1125
        %v1127 = vand.u32 %v1126, 4294901760
        %v1128 = vsub.f32 %v1126, %v1127
        %v1129 = vand.u32 %v1128, 4294901760
        %1130 = vmatpush.msra.mxu0 %v1129
        %v1131 = vand.u32 %v420, 4294901760
        %v1132 = vsub.f32 %v420, %v1131
        %v1133 = vand.u32 %v1132, 4294901760
        %v1134 = vsub.f32 %v1132, %v1133
        %v1135 = vand.u32 %v1134, 4294901760
        %1136 = vmatpush.msra.mxu0 %v1135
        %v1137 = vand.u32 %v419, 4294901760
        %v1138 = vsub.f32 %v419, %v1137
        %v1139 = vand.u32 %v1138, 4294901760
        %v1140 = vsub.f32 %v1138, %v1139
        %v1141 = vand.u32 %v1140, 4294901760
        %1142 = vmatpush.msra.mxu0 %v1141
        %v1143 = vand.u32 %v418, 4294901760
        %v1144 = vsub.f32 %v418, %v1143
        %v1145 = vand.u32 %v1144, 4294901760
        %v1146 = vsub.f32 %v1144, %v1145
        %v1147 = vand.u32 %v1146, 4294901760
        %1148 = vmatpush.msra.mxu0 %v1147
        %v1149 = vand.u32 %v417, 4294901760
        %v1150 = vsub.f32 %v417, %v1149
        %v1151 = vand.u32 %v1150, 4294901760
        %v1152 = vsub.f32 %v1150, %v1151
        %v1153 = vand.u32 %v1152, 4294901760
        %1154 = vmatpush.msra.mxu0 %v1153
        %v1155 = vand.u32 %v416, 4294901760
        %v1156 = vsub.f32 %v416, %v1155
        %v1157 = vand.u32 %v1156, 4294901760
        %v1158 = vsub.f32 %v1156, %v1157
        %v1159 = vand.u32 %v1158, 4294901760
        %1160 = vmatpush.msra.mxu0 %v1159
        %v1161 = vand.u32 %v415, 4294901760
        %v1162 = vsub.f32 %v415, %v1161
        %v1163 = vand.u32 %v1162, 4294901760
        %v1164 = vsub.f32 %v1162, %v1163
        %v1165 = vand.u32 %v1164, 4294901760
        %1166 = vmatpush.msra.mxu0 %v1165
        %v1167 = vand.u32 %v414, 4294901760
        %v1168 = vsub.f32 %v414, %v1167
        %v1169 = vand.u32 %v1168, 4294901760
        %v1170 = vsub.f32 %v1168, %v1169
        %v1171 = vand.u32 %v1170, 4294901760
        %1172 = vmatpush.msra.mxu0 %v1171
        %v1173 = vand.u32 %v413, 4294901760
        %v1174 = vsub.f32 %v413, %v1173
        %v1175 = vand.u32 %v1174, 4294901760
        %v1176 = vsub.f32 %v1174, %v1175
        %v1177 = vand.u32 %v1176, 4294901760
        %1178 = vmatpush.msra.mxu0 %v1177
        %v1179 = vand.u32 %v412, 4294901760
        %v1180 = vsub.f32 %v412, %v1179
        %v1181 = vand.u32 %v1180, 4294901760
        %v1182 = vsub.f32 %v1180, %v1181
        %v1183 = vand.u32 %v1182, 4294901760
        %1184 = vmatpush.msra.mxu0 %v1183
        %v1185 = vand.u32 %v411, 4294901760
        %v1186 = vsub.f32 %v411, %v1185
        %v1187 = vand.u32 %v1186, 4294901760
        %v1188 = vsub.f32 %v1186, %v1187
        %v1189 = vand.u32 %v1188, 4294901760
        %1190 = vmatpush.msra.mxu0 %v1189
        %v1191 = vand.u32 %v380, 4294901760
        %1192 = vmatmul.f32.gmra.mxu0 %v1191
        %v1193 = vpop.f32.mrf.mxu0
        %v1194 = vadd.f32 %v1037, %v1193
        %v1195 = vand.u32 %v382, 4294901760
        %1196 = vmatmul.f32.gmra.mxu0 %v1195
        %v1197 = vpop.f32.mrf.mxu0
        %v1198 = vadd.f32 %v1045, %v1197
        %v1199 = vand.u32 %v384, 4294901760
        %1200 = vmatmul.f32.gmra.mxu0 %v1199
        %v1201 = vpop.f32.mrf.mxu0
        %v1202 = vadd.f32 %v1053, %v1201
        %v1203 = vand.u32 %v386, 4294901760
        %1204 = vmatmul.f32.gmra.mxu0 %v1203
        %v1205 = vpop.f32.mrf.mxu0
        %v1206 = vadd.f32 %v1061, %v1205
        %v1207 = vand.u32 %v388, 4294901760
        %1208 = vmatmul.f32.gmra.mxu0 %v1207
        %v1209 = vpop.f32.mrf.mxu0
        %v1210 = vadd.f32 %v1069, %v1209
        %v1211 = vand.u32 %v390, 4294901760
        %1212 = vmatmul.f32.gmra.mxu0 %v1211
        %v1213 = vpop.f32.mrf.mxu0
        %v1214 = vadd.f32 %v1077, %v1213
        %v1215 = vand.u32 %v392, 4294901760
        %1216 = vmatmul.f32.gmra.mxu0 %v1215
        %v1217 = vpop.f32.mrf.mxu0
        %v1218 = vadd.f32 %v1085, %v1217
        %v1219 = vand.u32 %v394, 4294901760
        %1220 = vmatmul.f32.gmra.mxu0 %v1219
        %v1221 = vpop.f32.mrf.mxu0
        %v1222 = vadd.f32 %v1093, %v1221
        %1223 = vdwg.mxu0
        %v1224 = vand.u32 %v426, 4294901760
        %v1225 = vsub.f32 %v426, %v1224
        %1226 = vmatpush.msra.mxu0 %v1225
        %v1227 = vand.u32 %v425, 4294901760
        %v1228 = vsub.f32 %v425, %v1227
        %1229 = vmatpush.msra.mxu0 %v1228
        %v1230 = vand.u32 %v424, 4294901760
        %v1231 = vsub.f32 %v424, %v1230
        %1232 = vmatpush.msra.mxu0 %v1231
        %v1233 = vand.u32 %v423, 4294901760
        %v1234 = vsub.f32 %v423, %v1233
        %1235 = vmatpush.msra.mxu0 %v1234
        %v1236 = vand.u32 %v422, 4294901760
        %v1237 = vsub.f32 %v422, %v1236
        %1238 = vmatpush.msra.mxu0 %v1237
        %v1239 = vand.u32 %v421, 4294901760
        %v1240 = vsub.f32 %v421, %v1239
        %1241 = vmatpush.msra.mxu0 %v1240
        %v1242 = vand.u32 %v420, 4294901760
        %v1243 = vsub.f32 %v420, %v1242
        %1244 = vmatpush.msra.mxu0 %v1243
        %v1245 = vand.u32 %v419, 4294901760
        %v1246 = vsub.f32 %v419, %v1245
        %1247 = vmatpush.msra.mxu0 %v1246
        %v1248 = vand.u32 %v418, 4294901760
        %v1249 = vsub.f32 %v418, %v1248
        %1250 = vmatpush.msra.mxu0 %v1249
        %v1251 = vand.u32 %v417, 4294901760
        %v1252 = vsub.f32 %v417, %v1251
        %1253 = vmatpush.msra.mxu0 %v1252
        %v1254 = vand.u32 %v416, 4294901760
        %v1255 = vsub.f32 %v416, %v1254
        %1256 = vmatpush.msra.mxu0 %v1255
        %v1257 = vand.u32 %v415, 4294901760
        %v1258 = vsub.f32 %v415, %v1257
        %1259 = vmatpush.msra.mxu0 %v1258
        %v1260 = vand.u32 %v414, 4294901760
        %v1261 = vsub.f32 %v414, %v1260
        %1262 = vmatpush.msra.mxu0 %v1261
        %v1263 = vand.u32 %v413, 4294901760
        %v1264 = vsub.f32 %v413, %v1263
        %1265 = vmatpush.msra.mxu0 %v1264
        %v1266 = vand.u32 %v412, 4294901760
        %v1267 = vsub.f32 %v412, %v1266
        %1268 = vmatpush.msra.mxu0 %v1267
        %v1269 = vand.u32 %v411, 4294901760
        %v1270 = vsub.f32 %v411, %v1269
        %1271 = vmatpush.msra.mxu0 %v1270
        %v1272 = vand.u32 %v380, 4294901760
        %v1273 = vsub.f32 %v380, %v1272
        %1274 = vmatmul.f32.gmra.mxu0 %v1273
        %v1275 = vpop.f32.mrf.mxu0
        %v1276 = vadd.f32 %v1194, %v1275
        %v1277 = vand.u32 %v382, 4294901760
        %v1278 = vsub.f32 %v382, %v1277
        %1279 = vmatmul.f32.gmra.mxu0 %v1278
        %v1280 = vpop.f32.mrf.mxu0
        %v1281 = vadd.f32 %v1198, %v1280
        %v1282 = vand.u32 %v384, 4294901760
        %v1283 = vsub.f32 %v384, %v1282
        %1284 = vmatmul.f32.gmra.mxu0 %v1283
        %v1285 = vpop.f32.mrf.mxu0
        %v1286 = vadd.f32 %v1202, %v1285
        %v1287 = vand.u32 %v386, 4294901760
        %v1288 = vsub.f32 %v386, %v1287
        %1289 = vmatmul.f32.gmra.mxu0 %v1288
        %v1290 = vpop.f32.mrf.mxu0
        %v1291 = vadd.f32 %v1206, %v1290
        %v1292 = vand.u32 %v388, 4294901760
        %v1293 = vsub.f32 %v388, %v1292
        %1294 = vmatmul.f32.gmra.mxu0 %v1293
        %v1295 = vpop.f32.mrf.mxu0
        %v1296 = vadd.f32 %v1210, %v1295
        %v1297 = vand.u32 %v390, 4294901760
        %v1298 = vsub.f32 %v390, %v1297
        %1299 = vmatmul.f32.gmra.mxu0 %v1298
        %v1300 = vpop.f32.mrf.mxu0
        %v1301 = vadd.f32 %v1214, %v1300
        %v1302 = vand.u32 %v392, 4294901760
        %v1303 = vsub.f32 %v392, %v1302
        %1304 = vmatmul.f32.gmra.mxu0 %v1303
        %v1305 = vpop.f32.mrf.mxu0
        %v1306 = vadd.f32 %v1218, %v1305
        %v1307 = vand.u32 %v394, 4294901760
        %v1308 = vsub.f32 %v394, %v1307
        %1309 = vmatmul.f32.gmra.mxu0 %v1308
        %v1310 = vpop.f32.mrf.mxu0
        %v1311 = vadd.f32 %v1222, %v1310
        %1312 = vdwg.mxu0
        %v1313 = vand.u32 %v426, 4294901760
        %1314 = vmatpush.msra.mxu0 %v1313
        %v1315 = vand.u32 %v425, 4294901760
        %1316 = vmatpush.msra.mxu0 %v1315
        %v1317 = vand.u32 %v424, 4294901760
        %1318 = vmatpush.msra.mxu0 %v1317
        %v1319 = vand.u32 %v423, 4294901760
        %1320 = vmatpush.msra.mxu0 %v1319
        %v1321 = vand.u32 %v422, 4294901760
        %1322 = vmatpush.msra.mxu0 %v1321
        %v1323 = vand.u32 %v421, 4294901760
        %1324 = vmatpush.msra.mxu0 %v1323
        %v1325 = vand.u32 %v420, 4294901760
        %1326 = vmatpush.msra.mxu0 %v1325
        %v1327 = vand.u32 %v419, 4294901760
        %1328 = vmatpush.msra.mxu0 %v1327
        %v1329 = vand.u32 %v418, 4294901760
        %1330 = vmatpush.msra.mxu0 %v1329
        %v1331 = vand.u32 %v417, 4294901760
        %1332 = vmatpush.msra.mxu0 %v1331
        %v1333 = vand.u32 %v416, 4294901760
        %1334 = vmatpush.msra.mxu0 %v1333
        %v1335 = vand.u32 %v415, 4294901760
        %1336 = vmatpush.msra.mxu0 %v1335
        %v1337 = vand.u32 %v414, 4294901760
        %1338 = vmatpush.msra.mxu0 %v1337
        %v1339 = vand.u32 %v413, 4294901760
        %1340 = vmatpush.msra.mxu0 %v1339
        %v1341 = vand.u32 %v412, 4294901760
        %1342 = vmatpush.msra.mxu0 %v1341
        %v1343 = vand.u32 %v411, 4294901760
        %1344 = vmatpush.msra.mxu0 %v1343
        %v1345 = vand.u32 %v380, 4294901760
        %v1346 = vsub.f32 %v380, %v1345
        %v1347 = vand.u32 %v1346, 4294901760
        %1348 = vmatmul.f32.gmra.mxu0 %v1347
        %v1349 = vpop.f32.mrf.mxu0
        %v1350 = vadd.f32 %v1276, %v1349
        %v1351 = vand.u32 %v382, 4294901760
        %v1352 = vsub.f32 %v382, %v1351
        %v1353 = vand.u32 %v1352, 4294901760
        %1354 = vmatmul.f32.gmra.mxu0 %v1353
        %v1355 = vpop.f32.mrf.mxu0
        %v1356 = vadd.f32 %v1281, %v1355
        %v1357 = vand.u32 %v384, 4294901760
        %v1358 = vsub.f32 %v384, %v1357
        %v1359 = vand.u32 %v1358, 4294901760
        %1360 = vmatmul.f32.gmra.mxu0 %v1359
        %v1361 = vpop.f32.mrf.mxu0
        %v1362 = vadd.f32 %v1286, %v1361
        %v1363 = vand.u32 %v386, 4294901760
        %v1364 = vsub.f32 %v386, %v1363
        %v1365 = vand.u32 %v1364, 4294901760
        %1366 = vmatmul.f32.gmra.mxu0 %v1365
        %v1367 = vpop.f32.mrf.mxu0
        %v1368 = vadd.f32 %v1291, %v1367
        %v1369 = vand.u32 %v388, 4294901760
        %v1370 = vsub.f32 %v388, %v1369
        %v1371 = vand.u32 %v1370, 4294901760
        %1372 = vmatmul.f32.gmra.mxu0 %v1371
        %v1373 = vpop.f32.mrf.mxu0
        %v1374 = vadd.f32 %v1296, %v1373
        %v1375 = vand.u32 %v390, 4294901760
        %v1376 = vsub.f32 %v390, %v1375
        %v1377 = vand.u32 %v1376, 4294901760
        %1378 = vmatmul.f32.gmra.mxu0 %v1377
        %v1379 = vpop.f32.mrf.mxu0
        %v1380 = vadd.f32 %v1301, %v1379
        %v1381 = vand.u32 %v392, 4294901760
        %v1382 = vsub.f32 %v392, %v1381
        %v1383 = vand.u32 %v1382, 4294901760
        %1384 = vmatmul.f32.gmra.mxu0 %v1383
        %v1385 = vpop.f32.mrf.mxu0
        %v1386 = vadd.f32 %v1306, %v1385
        %v1387 = vand.u32 %v394, 4294901760
        %v1388 = vsub.f32 %v394, %v1387
        %v1389 = vand.u32 %v1388, 4294901760
        %1390 = vmatmul.f32.gmra.mxu0 %v1389
        %v1391 = vpop.f32.mrf.mxu0
        %v1392 = vadd.f32 %v1311, %v1391
        %1393 = vdwg.mxu0
        %v1394 = vand.u32 %v426, 4294901760
        %v1395 = vsub.f32 %v426, %v1394
        %v1396 = vand.u32 %v1395, 4294901760
        %1397 = vmatpush.msra.mxu0 %v1396
        %v1398 = vand.u32 %v425, 4294901760
        %v1399 = vsub.f32 %v425, %v1398
        %v1400 = vand.u32 %v1399, 4294901760
        %1401 = vmatpush.msra.mxu0 %v1400
        %v1402 = vand.u32 %v424, 4294901760
        %v1403 = vsub.f32 %v424, %v1402
        %v1404 = vand.u32 %v1403, 4294901760
        %1405 = vmatpush.msra.mxu0 %v1404
        %v1406 = vand.u32 %v423, 4294901760
        %v1407 = vsub.f32 %v423, %v1406
        %v1408 = vand.u32 %v1407, 4294901760
        %1409 = vmatpush.msra.mxu0 %v1408
        %v1410 = vand.u32 %v422, 4294901760
        %v1411 = vsub.f32 %v422, %v1410
        %v1412 = vand.u32 %v1411, 4294901760
        %1413 = vmatpush.msra.mxu0 %v1412
        %v1414 = vand.u32 %v421, 4294901760
        %v1415 = vsub.f32 %v421, %v1414
        %v1416 = vand.u32 %v1415, 4294901760
        %1417 = vmatpush.msra.mxu0 %v1416
        %v1418 = vand.u32 %v420, 4294901760
        %v1419 = vsub.f32 %v420, %v1418
        %v1420 = vand.u32 %v1419, 4294901760
        %1421 = vmatpush.msra.mxu0 %v1420
        %v1422 = vand.u32 %v419, 4294901760
        %v1423 = vsub.f32 %v419, %v1422
        %v1424 = vand.u32 %v1423, 4294901760
        %1425 = vmatpush.msra.mxu0 %v1424
        %v1426 = vand.u32 %v418, 4294901760
        %v1427 = vsub.f32 %v418, %v1426
        %v1428 = vand.u32 %v1427, 4294901760
        %1429 = vmatpush.msra.mxu0 %v1428
        %v1430 = vand.u32 %v417, 4294901760
        %v1431 = vsub.f32 %v417, %v1430
        %v1432 = vand.u32 %v1431, 4294901760
        %1433 = vmatpush.msra.mxu0 %v1432
        %v1434 = vand.u32 %v416, 4294901760
        %v1435 = vsub.f32 %v416, %v1434
        %v1436 = vand.u32 %v1435, 4294901760
        %1437 = vmatpush.msra.mxu0 %v1436
        %v1438 = vand.u32 %v415, 4294901760
        %v1439 = vsub.f32 %v415, %v1438
        %v1440 = vand.u32 %v1439, 4294901760
        %1441 = vmatpush.msra.mxu0 %v1440
        %v1442 = vand.u32 %v414, 4294901760
        %v1443 = vsub.f32 %v414, %v1442
        %v1444 = vand.u32 %v1443, 4294901760
        %1445 = vmatpush.msra.mxu0 %v1444
        %v1446 = vand.u32 %v413, 4294901760
        %v1447 = vsub.f32 %v413, %v1446
        %v1448 = vand.u32 %v1447, 4294901760
        %1449 = vmatpush.msra.mxu0 %v1448
        %v1450 = vand.u32 %v412, 4294901760
        %v1451 = vsub.f32 %v412, %v1450
        %v1452 = vand.u32 %v1451, 4294901760
        %1453 = vmatpush.msra.mxu0 %v1452
        %v1454 = vand.u32 %v411, 4294901760
        %v1455 = vsub.f32 %v411, %v1454
        %v1456 = vand.u32 %v1455, 4294901760
        %1457 = vmatpush.msra.mxu0 %v1456
        %v1458 = vand.u32 %v380, 4294901760
        %1459 = vmatmul.f32.gmra.mxu0 %v1458
        %v1460 = vpop.f32.mrf.mxu0
        %v1461 = vadd.f32 %v1350, %v1460
        %v1462 = vand.u32 %v382, 4294901760
        %1463 = vmatmul.f32.gmra.mxu0 %v1462
        %v1464 = vpop.f32.mrf.mxu0
        %v1465 = vadd.f32 %v1356, %v1464
        %v1466 = vand.u32 %v384, 4294901760
        %1467 = vmatmul.f32.gmra.mxu0 %v1466
        %v1468 = vpop.f32.mrf.mxu0
        %v1469 = vadd.f32 %v1362, %v1468
        %v1470 = vand.u32 %v386, 4294901760
        %1471 = vmatmul.f32.gmra.mxu0 %v1470
        %v1472 = vpop.f32.mrf.mxu0
        %v1473 = vadd.f32 %v1368, %v1472
        %v1474 = vand.u32 %v388, 4294901760
        %1475 = vmatmul.f32.gmra.mxu0 %v1474
        %v1476 = vpop.f32.mrf.mxu0
        %v1477 = vadd.f32 %v1374, %v1476
        %v1478 = vand.u32 %v390, 4294901760
        %1479 = vmatmul.f32.gmra.mxu0 %v1478
        %v1480 = vpop.f32.mrf.mxu0
        %v1481 = vadd.f32 %v1380, %v1480
        %v1482 = vand.u32 %v392, 4294901760
        %1483 = vmatmul.f32.gmra.mxu0 %v1482
        %v1484 = vpop.f32.mrf.mxu0
        %v1485 = vadd.f32 %v1386, %v1484
        %v1486 = vand.u32 %v394, 4294901760
        %1487 = vmatmul.f32.gmra.mxu0 %v1486
        %v1488 = vpop.f32.mrf.mxu0
        %v1489 = vadd.f32 %v1392, %v1488
        %1490 = vdwg.mxu0
        %v1491 = vand.u32 %v426, 4294901760
        %1492 = vmatpush.msra.mxu0 %v1491
        %v1493 = vand.u32 %v425, 4294901760
        %1494 = vmatpush.msra.mxu0 %v1493
        %v1495 = vand.u32 %v424, 4294901760
        %1496 = vmatpush.msra.mxu0 %v1495
        %v1497 = vand.u32 %v423, 4294901760
        %1498 = vmatpush.msra.mxu0 %v1497
        %v1499 = vand.u32 %v422, 4294901760
        %1500 = vmatpush.msra.mxu0 %v1499
        %v1501 = vand.u32 %v421, 4294901760
        %1502 = vmatpush.msra.mxu0 %v1501
        %v1503 = vand.u32 %v420, 4294901760
        %1504 = vmatpush.msra.mxu0 %v1503
        %v1505 = vand.u32 %v419, 4294901760
        %1506 = vmatpush.msra.mxu0 %v1505
        %v1507 = vand.u32 %v418, 4294901760
        %1508 = vmatpush.msra.mxu0 %v1507
        %v1509 = vand.u32 %v417, 4294901760
        %1510 = vmatpush.msra.mxu0 %v1509
        %v1511 = vand.u32 %v416, 4294901760
        %1512 = vmatpush.msra.mxu0 %v1511
        %v1513 = vand.u32 %v415, 4294901760
        %1514 = vmatpush.msra.mxu0 %v1513
        %v1515 = vand.u32 %v414, 4294901760
        %1516 = vmatpush.msra.mxu0 %v1515
        %v1517 = vand.u32 %v413, 4294901760
        %1518 = vmatpush.msra.mxu0 %v1517
        %v1519 = vand.u32 %v412, 4294901760
        %1520 = vmatpush.msra.mxu0 %v1519
        %v1521 = vand.u32 %v411, 4294901760
        %1522 = vmatpush.msra.mxu0 %v1521
        %v1523 = vand.u32 %v380, 4294901760
        %1524 = vmatmul.f32.gmra.mxu0 %v1523
        %v1525 = vpop.f32.mrf.mxu0
        %v1526 = vadd.f32 %v1461, %v1525
        %v1527 = vand.u32 %v382, 4294901760
        %1528 = vmatmul.f32.gmra.mxu0 %v1527
        %v1529 = vpop.f32.mrf.mxu0
        %v1530 = vadd.f32 %v1465, %v1529
        %v1531 = vand.u32 %v384, 4294901760
        %1532 = vmatmul.f32.gmra.mxu0 %v1531
        %v1533 = vpop.f32.mrf.mxu0
        %v1534 = vadd.f32 %v1469, %v1533
        %v1535 = vand.u32 %v386, 4294901760
        %1536 = vmatmul.f32.gmra.mxu0 %v1535
        %v1537 = vpop.f32.mrf.mxu0
        %v1538 = vadd.f32 %v1473, %v1537
        %v1539 = vand.u32 %v388, 4294901760
        %1540 = vmatmul.f32.gmra.mxu0 %v1539
        %v1541 = vpop.f32.mrf.mxu0
        %v1542 = vadd.f32 %v1477, %v1541
        %v1543 = vand.u32 %v390, 4294901760
        %1544 = vmatmul.f32.gmra.mxu0 %v1543
        %v1545 = vpop.f32.mrf.mxu0
        %v1546 = vadd.f32 %v1481, %v1545
        %v1547 = vand.u32 %v392, 4294901760
        %1548 = vmatmul.f32.gmra.mxu0 %v1547
        %v1549 = vpop.f32.mrf.mxu0
        %v1550 = vadd.f32 %v1485, %v1549
        %v1551 = vand.u32 %v394, 4294901760
        %1552 = vmatmul.f32.gmra.mxu0 %v1551
        %v1553 = vpop.f32.mrf.mxu0
        %v1554 = vadd.f32 %v1489, %v1553
        %1555 = vdwg.mxu0
        %1556 = vxpose.xlu0.b32.start [1/16] %v1526, 128
        %1557 = vxpose.xlu0.b32.cont [2/16] %v1530, 128
        %1558 = vxpose.xlu0.b32.cont [3/16] %v1534, 128
        %1559 = vxpose.xlu0.b32.cont [4/16] %v1538, 128
        %1560 = vxpose.xlu0.b32.cont [5/16] %v1542, 128
        %1561 = vxpose.xlu0.b32.cont [6/16] %v1546, 128
        %1562 = vxpose.xlu0.b32.cont [7/16] %v1550, 128
        %1563 = vxpose.xlu0.b32.cont [8/16] %v1554, 128
        %1564 = vxpose.xlu0.b32.cont [9/16] 0.0, 128
        %1565 = vxpose.xlu0.b32.cont [10/16] 0.0, 128
        %1566 = vxpose.xlu0.b32.cont [11/16] 0.0, 128
        %1567 = vxpose.xlu0.b32.cont [12/16] 0.0, 128
        %1568 = vxpose.xlu0.b32.cont [13/16] 0.0, 128
        %1569 = vxpose.xlu0.b32.cont [14/16] 0.0, 128
        %1570 = vxpose.xlu0.b32.cont [15/16] 0.0, 128
        %1571 = vxpose.xlu0.b32.end [16/16] 0.0, 128
        %v1572 = vpop.trf.xlu0
        %v1573 = vpop.trf.xlu0
        %v1574 = vpop.trf.xlu0
        %v1575 = vpop.trf.xlu0
        %v1576 = vpop.trf.xlu0
        %v1577 = vpop.trf.xlu0
        %v1578 = vpop.trf.xlu0
        %v1579 = vpop.trf.xlu0
        %v1580 = vpop.trf.xlu0
        %v1581 = vpop.trf.xlu0
        %v1582 = vpop.trf.xlu0
        %v1583 = vpop.trf.xlu0
        %v1584 = vpop.trf.xlu0
        %v1585 = vpop.trf.xlu0
        %v1586 = vpop.trf.xlu0
        %v1587 = vpop.trf.xlu0
        %v1589 = vperm.slane %v435, 0
        %vm1591 = vcmask 523264
        %v1593 = vsel %vm1591, %v1572, 0
        %v1596 = vsel %vm1591, %v1573, 0
        %v1599 = vsel %vm1591, %v1574, 0
        %v1602 = vsel %vm1591, %v1575, 0
        %1604 = vmatpush.msra.mxu0 0.0
        %1605 = vmatpush.msra.mxu0 0.0
        %1606 = vmatpush.msra.mxu0 0.0
        %1607 = vmatpush.msra.mxu0 0.0
        %1608 = vmatpush.msra.mxu0 0.0
        %1609 = vmatpush.msra.mxu0 0.0
        %1610 = vmatpush.msra.mxu0 0.0
        %1611 = vmatpush.msra.mxu0 0.0
        %v1612 = vand.u32 %v434, 4294901760
        %1613 = vmatpush.msra.mxu0 %v1612
        %v1614 = vand.u32 %v433, 4294901760
        %1615 = vmatpush.msra.mxu0 %v1614
        %v1616 = vand.u32 %v432, 4294901760
        %1617 = vmatpush.msra.mxu0 %v1616
        %v1618 = vand.u32 %v431, 4294901760
        %1619 = vmatpush.msra.mxu0 %v1618
        %v1620 = vand.u32 %v430, 4294901760
        %1621 = vmatpush.msra.mxu0 %v1620
        %v1622 = vand.u32 %v429, 4294901760
        %1623 = vmatpush.msra.mxu0 %v1622
        %v1624 = vand.u32 %v428, 4294901760
        %1625 = vmatpush.msra.mxu0 %v1624
        %v1626 = vand.u32 %v427, 4294901760
        %1627 = vmatpush.msra.mxu0 %v1626
        %v1628 = vand.u32 %v1593, 4294901760
        %v1629 = vsub.f32 %v1593, %v1628
        %v1630 = vand.u32 %v1629, 4294901760
        %v1631 = vsub.f32 %v1629, %v1630
        %v1632 = vand.u32 %v1631, 4294901760
        %1633 = vmatmul.f32.gmra.mxu0 %v1632
        %v1634 = vpop.f32.mrf.mxu0
        %v1635 = vadd.f32 %v1589, %v1634
        %v1636 = vand.u32 %v1596, 4294901760
        %v1637 = vsub.f32 %v1596, %v1636
        %v1638 = vand.u32 %v1637, 4294901760
        %v1639 = vsub.f32 %v1637, %v1638
        %v1640 = vand.u32 %v1639, 4294901760
        %1641 = vmatmul.f32.gmra.mxu0 %v1640
        %v1642 = vpop.f32.mrf.mxu0
        %v1643 = vadd.f32 %v1589, %v1642
        %v1644 = vand.u32 %v1599, 4294901760
        %v1645 = vsub.f32 %v1599, %v1644
        %v1646 = vand.u32 %v1645, 4294901760
        %v1647 = vsub.f32 %v1645, %v1646
        %v1648 = vand.u32 %v1647, 4294901760
        %1649 = vmatmul.f32.gmra.mxu0 %v1648
        %v1650 = vpop.f32.mrf.mxu0
        %v1651 = vadd.f32 %v1589, %v1650
        %v1652 = vand.u32 %v1602, 4294901760
        %v1653 = vsub.f32 %v1602, %v1652
        %v1654 = vand.u32 %v1653, 4294901760
        %v1655 = vsub.f32 %v1653, %v1654
        %v1656 = vand.u32 %v1655, 4294901760
        %1657 = vmatmul.f32.gmra.mxu0 %v1656
        %v1658 = vpop.f32.mrf.mxu0
        %v1659 = vadd.f32 %v1589, %v1658
        %1660 = vdwg.mxu0
        %1661 = vmatpush.msra.mxu0 0.0
        %1662 = vmatpush.msra.mxu0 0.0
        %1663 = vmatpush.msra.mxu0 0.0
        %1664 = vmatpush.msra.mxu0 0.0
        %1665 = vmatpush.msra.mxu0 0.0
        %1666 = vmatpush.msra.mxu0 0.0
        %1667 = vmatpush.msra.mxu0 0.0
        %1668 = vmatpush.msra.mxu0 0.0
        %v1669 = vand.u32 %v434, 4294901760
        %v1670 = vsub.f32 %v434, %v1669
        %v1671 = vand.u32 %v1670, 4294901760
        %v1672 = vsub.f32 %v1670, %v1671
        %v1673 = vand.u32 %v1672, 4294901760
        %1674 = vmatpush.msra.mxu0 %v1673
        %v1675 = vand.u32 %v433, 4294901760
        %v1676 = vsub.f32 %v433, %v1675
        %v1677 = vand.u32 %v1676, 4294901760
        %v1678 = vsub.f32 %v1676, %v1677
        %v1679 = vand.u32 %v1678, 4294901760
        %1680 = vmatpush.msra.mxu0 %v1679
        %v1681 = vand.u32 %v432, 4294901760
        %v1682 = vsub.f32 %v432, %v1681
        %v1683 = vand.u32 %v1682, 4294901760
        %v1684 = vsub.f32 %v1682, %v1683
        %v1685 = vand.u32 %v1684, 4294901760
        %1686 = vmatpush.msra.mxu0 %v1685
        %v1687 = vand.u32 %v431, 4294901760
        %v1688 = vsub.f32 %v431, %v1687
        %v1689 = vand.u32 %v1688, 4294901760
        %v1690 = vsub.f32 %v1688, %v1689
        %v1691 = vand.u32 %v1690, 4294901760
        %1692 = vmatpush.msra.mxu0 %v1691
        %v1693 = vand.u32 %v430, 4294901760
        %v1694 = vsub.f32 %v430, %v1693
        %v1695 = vand.u32 %v1694, 4294901760
        %v1696 = vsub.f32 %v1694, %v1695
        %v1697 = vand.u32 %v1696, 4294901760
        %1698 = vmatpush.msra.mxu0 %v1697
        %v1699 = vand.u32 %v429, 4294901760
        %v1700 = vsub.f32 %v429, %v1699
        %v1701 = vand.u32 %v1700, 4294901760
        %v1702 = vsub.f32 %v1700, %v1701
        %v1703 = vand.u32 %v1702, 4294901760
        %1704 = vmatpush.msra.mxu0 %v1703
        %v1705 = vand.u32 %v428, 4294901760
        %v1706 = vsub.f32 %v428, %v1705
        %v1707 = vand.u32 %v1706, 4294901760
        %v1708 = vsub.f32 %v1706, %v1707
        %v1709 = vand.u32 %v1708, 4294901760
        %1710 = vmatpush.msra.mxu0 %v1709
        %v1711 = vand.u32 %v427, 4294901760
        %v1712 = vsub.f32 %v427, %v1711
        %v1713 = vand.u32 %v1712, 4294901760
        %v1714 = vsub.f32 %v1712, %v1713
        %v1715 = vand.u32 %v1714, 4294901760
        %1716 = vmatpush.msra.mxu0 %v1715
        %v1717 = vand.u32 %v1593, 4294901760
        %1718 = vmatmul.f32.gmra.mxu0 %v1717
        %v1719 = vpop.f32.mrf.mxu0
        %v1720 = vadd.f32 %v1635, %v1719
        %v1721 = vand.u32 %v1596, 4294901760
        %1722 = vmatmul.f32.gmra.mxu0 %v1721
        %v1723 = vpop.f32.mrf.mxu0
        %v1724 = vadd.f32 %v1643, %v1723
        %v1725 = vand.u32 %v1599, 4294901760
        %1726 = vmatmul.f32.gmra.mxu0 %v1725
        %v1727 = vpop.f32.mrf.mxu0
        %v1728 = vadd.f32 %v1651, %v1727
        %v1729 = vand.u32 %v1602, 4294901760
        %1730 = vmatmul.f32.gmra.mxu0 %v1729
        %v1731 = vpop.f32.mrf.mxu0
        %v1732 = vadd.f32 %v1659, %v1731
        %1733 = vdwg.mxu0
        %1734 = vmatpush.msra.mxu0 0.0
        %1735 = vmatpush.msra.mxu0 0.0
        %1736 = vmatpush.msra.mxu0 0.0
        %1737 = vmatpush.msra.mxu0 0.0
        %1738 = vmatpush.msra.mxu0 0.0
        %1739 = vmatpush.msra.mxu0 0.0
        %1740 = vmatpush.msra.mxu0 0.0
        %1741 = vmatpush.msra.mxu0 0.0
        %v1742 = vand.u32 %v434, 4294901760
        %v1743 = vsub.f32 %v434, %v1742
        %1744 = vmatpush.msra.mxu0 %v1743
        %v1745 = vand.u32 %v433, 4294901760
        %v1746 = vsub.f32 %v433, %v1745
        %1747 = vmatpush.msra.mxu0 %v1746
        %v1748 = vand.u32 %v432, 4294901760
        %v1749 = vsub.f32 %v432, %v1748
        %1750 = vmatpush.msra.mxu0 %v1749
        %v1751 = vand.u32 %v431, 4294901760
        %v1752 = vsub.f32 %v431, %v1751
        %1753 = vmatpush.msra.mxu0 %v1752
        %v1754 = vand.u32 %v430, 4294901760
        %v1755 = vsub.f32 %v430, %v1754
        %1756 = vmatpush.msra.mxu0 %v1755
        %v1757 = vand.u32 %v429, 4294901760
        %v1758 = vsub.f32 %v429, %v1757
        %1759 = vmatpush.msra.mxu0 %v1758
        %v1760 = vand.u32 %v428, 4294901760
        %v1761 = vsub.f32 %v428, %v1760
        %1762 = vmatpush.msra.mxu0 %v1761
        %v1763 = vand.u32 %v427, 4294901760
        %v1764 = vsub.f32 %v427, %v1763
        %1765 = vmatpush.msra.mxu0 %v1764
        %v1766 = vand.u32 %v1593, 4294901760
        %v1767 = vsub.f32 %v1593, %v1766
        %1768 = vmatmul.f32.gmra.mxu0 %v1767
        %v1769 = vpop.f32.mrf.mxu0
        %v1770 = vadd.f32 %v1720, %v1769
        %v1771 = vand.u32 %v1596, 4294901760
        %v1772 = vsub.f32 %v1596, %v1771
        %1773 = vmatmul.f32.gmra.mxu0 %v1772
        %v1774 = vpop.f32.mrf.mxu0
        %v1775 = vadd.f32 %v1724, %v1774
        %v1776 = vand.u32 %v1599, 4294901760
        %v1777 = vsub.f32 %v1599, %v1776
        %1778 = vmatmul.f32.gmra.mxu0 %v1777
        %v1779 = vpop.f32.mrf.mxu0
        %v1780 = vadd.f32 %v1728, %v1779
        %v1781 = vand.u32 %v1602, 4294901760
        %v1782 = vsub.f32 %v1602, %v1781
        %1783 = vmatmul.f32.gmra.mxu0 %v1782
        %v1784 = vpop.f32.mrf.mxu0
        %v1785 = vadd.f32 %v1732, %v1784
        %1786 = vdwg.mxu0
        %1787 = vmatpush.msra.mxu0 0.0
        %1788 = vmatpush.msra.mxu0 0.0
        %1789 = vmatpush.msra.mxu0 0.0
        %1790 = vmatpush.msra.mxu0 0.0
        %1791 = vmatpush.msra.mxu0 0.0
        %1792 = vmatpush.msra.mxu0 0.0
        %1793 = vmatpush.msra.mxu0 0.0
        %1794 = vmatpush.msra.mxu0 0.0
        %v1795 = vand.u32 %v434, 4294901760
        %1796 = vmatpush.msra.mxu0 %v1795
        %v1797 = vand.u32 %v433, 4294901760
        %1798 = vmatpush.msra.mxu0 %v1797
        %v1799 = vand.u32 %v432, 4294901760
        %1800 = vmatpush.msra.mxu0 %v1799
        %v1801 = vand.u32 %v431, 4294901760
        %1802 = vmatpush.msra.mxu0 %v1801
        %v1803 = vand.u32 %v430, 4294901760
        %1804 = vmatpush.msra.mxu0 %v1803
        %v1805 = vand.u32 %v429, 4294901760
        %1806 = vmatpush.msra.mxu0 %v1805
        %v1807 = vand.u32 %v428, 4294901760
        %1808 = vmatpush.msra.mxu0 %v1807
        %v1809 = vand.u32 %v427, 4294901760
        %1810 = vmatpush.msra.mxu0 %v1809
        %v1811 = vand.u32 %v1593, 4294901760
        %v1812 = vsub.f32 %v1593, %v1811
        %v1813 = vand.u32 %v1812, 4294901760
        %1814 = vmatmul.f32.gmra.mxu0 %v1813
        %v1815 = vpop.f32.mrf.mxu0
        %v1816 = vadd.f32 %v1770, %v1815
        %v1817 = vand.u32 %v1596, 4294901760
        %v1818 = vsub.f32 %v1596, %v1817
        %v1819 = vand.u32 %v1818, 4294901760
        %1820 = vmatmul.f32.gmra.mxu0 %v1819
        %v1821 = vpop.f32.mrf.mxu0
        %v1822 = vadd.f32 %v1775, %v1821
        %v1823 = vand.u32 %v1599, 4294901760
        %v1824 = vsub.f32 %v1599, %v1823
        %v1825 = vand.u32 %v1824, 4294901760
        %1826 = vmatmul.f32.gmra.mxu0 %v1825
        %v1827 = vpop.f32.mrf.mxu0
        %v1828 = vadd.f32 %v1780, %v1827
        %v1829 = vand.u32 %v1602, 4294901760
        %v1830 = vsub.f32 %v1602, %v1829
        %v1831 = vand.u32 %v1830, 4294901760
        %1832 = vmatmul.f32.gmra.mxu0 %v1831
        %v1833 = vpop.f32.mrf.mxu0
        %v1834 = vadd.f32 %v1785, %v1833
        %1835 = vdwg.mxu0
        %1836 = vmatpush.msra.mxu0 0.0
        %1837 = vmatpush.msra.mxu0 0.0
        %1838 = vmatpush.msra.mxu0 0.0
        %1839 = vmatpush.msra.mxu0 0.0
        %1840 = vmatpush.msra.mxu0 0.0
        %1841 = vmatpush.msra.mxu0 0.0
        %1842 = vmatpush.msra.mxu0 0.0
        %1843 = vmatpush.msra.mxu0 0.0
        %v1844 = vand.u32 %v434, 4294901760
        %v1845 = vsub.f32 %v434, %v1844
        %v1846 = vand.u32 %v1845, 4294901760
        %1847 = vmatpush.msra.mxu0 %v1846
        %v1848 = vand.u32 %v433, 4294901760
        %v1849 = vsub.f32 %v433, %v1848
        %v1850 = vand.u32 %v1849, 4294901760
        %1851 = vmatpush.msra.mxu0 %v1850
        %v1852 = vand.u32 %v432, 4294901760
        %v1853 = vsub.f32 %v432, %v1852
        %v1854 = vand.u32 %v1853, 4294901760
        %1855 = vmatpush.msra.mxu0 %v1854
        %v1856 = vand.u32 %v431, 4294901760
        %v1857 = vsub.f32 %v431, %v1856
        %v1858 = vand.u32 %v1857, 4294901760
        %1859 = vmatpush.msra.mxu0 %v1858
        %v1860 = vand.u32 %v430, 4294901760
        %v1861 = vsub.f32 %v430, %v1860
        %v1862 = vand.u32 %v1861, 4294901760
        %1863 = vmatpush.msra.mxu0 %v1862
        %v1864 = vand.u32 %v429, 4294901760
        %v1865 = vsub.f32 %v429, %v1864
        %v1866 = vand.u32 %v1865, 4294901760
        %1867 = vmatpush.msra.mxu0 %v1866
        %v1868 = vand.u32 %v428, 4294901760
        %v1869 = vsub.f32 %v428, %v1868
        %v1870 = vand.u32 %v1869, 4294901760
        %1871 = vmatpush.msra.mxu0 %v1870
        %v1872 = vand.u32 %v427, 4294901760
        %v1873 = vsub.f32 %v427, %v1872
        %v1874 = vand.u32 %v1873, 4294901760
        %1875 = vmatpush.msra.mxu0 %v1874
        %v1876 = vand.u32 %v1593, 4294901760
        %1877 = vmatmul.f32.gmra.mxu0 %v1876
        %v1878 = vpop.f32.mrf.mxu0
        %v1879 = vadd.f32 %v1816, %v1878
        %v1880 = vand.u32 %v1596, 4294901760
        %1881 = vmatmul.f32.gmra.mxu0 %v1880
        %v1882 = vpop.f32.mrf.mxu0
        %v1883 = vadd.f32 %v1822, %v1882
        %v1884 = vand.u32 %v1599, 4294901760
        %1885 = vmatmul.f32.gmra.mxu0 %v1884
        %v1886 = vpop.f32.mrf.mxu0
        %v1887 = vadd.f32 %v1828, %v1886
        %v1888 = vand.u32 %v1602, 4294901760
        %1889 = vmatmul.f32.gmra.mxu0 %v1888
        %v1890 = vpop.f32.mrf.mxu0
        %v1891 = vadd.f32 %v1834, %v1890
        %1892 = vdwg.mxu0
        %1893 = vmatpush.msra.mxu0 0.0
        %1894 = vmatpush.msra.mxu0 0.0
        %1895 = vmatpush.msra.mxu0 0.0
        %1896 = vmatpush.msra.mxu0 0.0
        %1897 = vmatpush.msra.mxu0 0.0
        %1898 = vmatpush.msra.mxu0 0.0
        %1899 = vmatpush.msra.mxu0 0.0
        %1900 = vmatpush.msra.mxu0 0.0
        %v1901 = vand.u32 %v434, 4294901760
        %1902 = vmatpush.msra.mxu0 %v1901
        %v1903 = vand.u32 %v433, 4294901760
        %1904 = vmatpush.msra.mxu0 %v1903
        %v1905 = vand.u32 %v432, 4294901760
        %1906 = vmatpush.msra.mxu0 %v1905
        %v1907 = vand.u32 %v431, 4294901760
        %1908 = vmatpush.msra.mxu0 %v1907
        %v1909 = vand.u32 %v430, 4294901760
        %1910 = vmatpush.msra.mxu0 %v1909
        %v1911 = vand.u32 %v429, 4294901760
        %1912 = vmatpush.msra.mxu0 %v1911
        %v1913 = vand.u32 %v428, 4294901760
        %1914 = vmatpush.msra.mxu0 %v1913
        %v1915 = vand.u32 %v427, 4294901760
        %1916 = vmatpush.msra.mxu0 %v1915
        %v1917 = vand.u32 %v1593, 4294901760
        %1918 = vmatmul.f32.gmra.mxu0 %v1917
        %v1919 = vpop.f32.mrf.mxu0
        %v1920 = vadd.f32 %v1879, %v1919
        %v1921 = vand.u32 %v1596, 4294901760
        %1922 = vmatmul.f32.gmra.mxu0 %v1921
        %v1923 = vpop.f32.mrf.mxu0
        %v1924 = vadd.f32 %v1883, %v1923
        %v1925 = vand.u32 %v1599, 4294901760
        %1926 = vmatmul.f32.gmra.mxu0 %v1925
        %v1927 = vpop.f32.mrf.mxu0
        %v1928 = vadd.f32 %v1887, %v1927
        %v1929 = vand.u32 %v1602, 4294901760
        %1930 = vmatmul.f32.gmra.mxu0 %v1929
        %v1931 = vpop.f32.mrf.mxu0
        %v1932 = vadd.f32 %v1891, %v1931
        %1933 = vdwg.mxu0
        %v1934 = vadd.f32 %v1920, 3.0
        %v1935 = vadd.f32 %v1924, 3.0
        %v1936 = vadd.f32 %v1928, 3.0
        %v1937 = vadd.f32 %v1932, 3.0
        %v1938 = vmax.f32 %v1934, 0.0
        %v1939 = vmax.f32 %v1935, 0.0
        %v1940 = vmax.f32 %v1936, 0.0
        %v1941 = vmax.f32 %v1937, 0.0
        %v1942 = vmin.f32 %v1938, 6.0
        %v1943 = vmin.f32 %v1939, 6.0
        %v1944 = vmin.f32 %v1940, 6.0
        %v1945 = vmin.f32 %v1941, 6.0
        %v1946 = vmul.f32 %v1920, %v1942
        %v1947 = vmul.f32 %v1924, %v1943
        %v1948 = vmul.f32 %v1928, %v1944
        %v1949 = vmul.f32 %v1932, %v1945
        %v1950 = vmul.f32 %v1946, 0.16666667
        %v1951 = vmul.f32 %v1947, 0.16666667
        %v1952 = vmul.f32 %v1948, 0.16666667
        %v1953 = vmul.f32 %v1949, 0.16666667
        %v1955 = vperm.slane %v437, 0
        %vm1957 = vcmask 64512
        %v1959 = vsel %vm1957, %v1950, 0
        %v1962 = vsel %vm1957, %v1951, 0
        %1964 = vmatpush.msra.mxu0 0.0
        %1965 = vmatpush.msra.mxu0 0.0
        %1966 = vmatpush.msra.mxu0 0.0
        %1967 = vmatpush.msra.mxu0 0.0
        %1968 = vmatpush.msra.mxu0 0.0
        %1969 = vmatpush.msra.mxu0 0.0
        %1970 = vmatpush.msra.mxu0 0.0
        %1971 = vmatpush.msra.mxu0 0.0
        %1972 = vmatpush.msra.mxu0 0.0
        %1973 = vmatpush.msra.mxu0 0.0
        %1974 = vmatpush.msra.mxu0 0.0
        %1975 = vmatpush.msra.mxu0 0.0
        %1976 = vmatpush.msra.mxu0 0.0
        %1977 = vmatpush.msra.mxu0 0.0
        %1978 = vmatpush.msra.mxu0 0.0
        %v1979 = vand.u32 %v436, 4294901760
        %1980 = vmatpush.msra.mxu0 %v1979
        %v1981 = vand.u32 %v1959, 4294901760
        %v1982 = vsub.f32 %v1959, %v1981
        %v1983 = vand.u32 %v1982, 4294901760
        %v1984 = vsub.f32 %v1982, %v1983
        %v1985 = vand.u32 %v1984, 4294901760
        %1986 = vmatmul.f32.gmra.mxu0 %v1985
        %v1987 = vpop.f32.mrf.mxu0
        %v1988 = vadd.f32 %v1955, %v1987
        %v1989 = vand.u32 %v1962, 4294901760
        %v1990 = vsub.f32 %v1962, %v1989
        %v1991 = vand.u32 %v1990, 4294901760
        %v1992 = vsub.f32 %v1990, %v1991
        %v1993 = vand.u32 %v1992, 4294901760
        %1994 = vmatmul.f32.gmra.mxu0 %v1993
        %v1995 = vpop.f32.mrf.mxu0
        %v1996 = vadd.f32 %v1955, %v1995
        %1997 = vdwg.mxu0
        %1998 = vmatpush.msra.mxu0 0.0
        %1999 = vmatpush.msra.mxu0 0.0
        %2000 = vmatpush.msra.mxu0 0.0
        %2001 = vmatpush.msra.mxu0 0.0
        %2002 = vmatpush.msra.mxu0 0.0
        %2003 = vmatpush.msra.mxu0 0.0
        %2004 = vmatpush.msra.mxu0 0.0
        %2005 = vmatpush.msra.mxu0 0.0
        %2006 = vmatpush.msra.mxu0 0.0
        %2007 = vmatpush.msra.mxu0 0.0
        %2008 = vmatpush.msra.mxu0 0.0
        %2009 = vmatpush.msra.mxu0 0.0
        %2010 = vmatpush.msra.mxu0 0.0
        %2011 = vmatpush.msra.mxu0 0.0
        %2012 = vmatpush.msra.mxu0 0.0
        %v2013 = vand.u32 %v436, 4294901760
        %v2014 = vsub.f32 %v436, %v2013
        %v2015 = vand.u32 %v2014, 4294901760
        %v2016 = vsub.f32 %v2014, %v2015
        %v2017 = vand.u32 %v2016, 4294901760
        %2018 = vmatpush.msra.mxu0 %v2017
        %v2019 = vand.u32 %v1959, 4294901760
        %2020 = vmatmul.f32.gmra.mxu0 %v2019
        %v2021 = vpop.f32.mrf.mxu0
        %v2022 = vadd.f32 %v1988, %v2021
        %v2023 = vand.u32 %v1962, 4294901760
        %2024 = vmatmul.f32.gmra.mxu0 %v2023
        %v2025 = vpop.f32.mrf.mxu0
        %v2026 = vadd.f32 %v1996, %v2025
        %2027 = vdwg.mxu0
        %2028 = vmatpush.msra.mxu0 0.0
        %2029 = vmatpush.msra.mxu0 0.0
        %2030 = vmatpush.msra.mxu0 0.0
        %2031 = vmatpush.msra.mxu0 0.0
        %2032 = vmatpush.msra.mxu0 0.0
        %2033 = vmatpush.msra.mxu0 0.0
        %2034 = vmatpush.msra.mxu0 0.0
        %2035 = vmatpush.msra.mxu0 0.0
        %2036 = vmatpush.msra.mxu0 0.0
        %2037 = vmatpush.msra.mxu0 0.0
        %2038 = vmatpush.msra.mxu0 0.0
        %2039 = vmatpush.msra.mxu0 0.0
        %2040 = vmatpush.msra.mxu0 0.0
        %2041 = vmatpush.msra.mxu0 0.0
        %2042 = vmatpush.msra.mxu0 0.0
        %v2043 = vand.u32 %v436, 4294901760
        %v2044 = vsub.f32 %v436, %v2043
        %2045 = vmatpush.msra.mxu0 %v2044
        %v2046 = vand.u32 %v1959, 4294901760
        %v2047 = vsub.f32 %v1959, %v2046
        %2048 = vmatmul.f32.gmra.mxu0 %v2047
        %v2049 = vpop.f32.mrf.mxu0
        %v2050 = vadd.f32 %v2022, %v2049
        %v2051 = vand.u32 %v1962, 4294901760
        %v2052 = vsub.f32 %v1962, %v2051
        %2053 = vmatmul.f32.gmra.mxu0 %v2052
        %v2054 = vpop.f32.mrf.mxu0
        %v2055 = vadd.f32 %v2026, %v2054
        %2056 = vdwg.mxu0
        %2057 = vmatpush.msra.mxu0 0.0
        %2058 = vmatpush.msra.mxu0 0.0
        %2059 = vmatpush.msra.mxu0 0.0
        %2060 = vmatpush.msra.mxu0 0.0
        %2061 = vmatpush.msra.mxu0 0.0
        %2062 = vmatpush.msra.mxu0 0.0
        %2063 = vmatpush.msra.mxu0 0.0
        %2064 = vmatpush.msra.mxu0 0.0
        %2065 = vmatpush.msra.mxu0 0.0
        %2066 = vmatpush.msra.mxu0 0.0
        %2067 = vmatpush.msra.mxu0 0.0
        %2068 = vmatpush.msra.mxu0 0.0
        %2069 = vmatpush.msra.mxu0 0.0
        %2070 = vmatpush.msra.mxu0 0.0
        %2071 = vmatpush.msra.mxu0 0.0
        %v2072 = vand.u32 %v436, 4294901760
        %2073 = vmatpush.msra.mxu0 %v2072
        %v2074 = vand.u32 %v1959, 4294901760
        %v2075 = vsub.f32 %v1959, %v2074
        %v2076 = vand.u32 %v2075, 4294901760
        %2077 = vmatmul.f32.gmra.mxu0 %v2076
        %v2078 = vpop.f32.mrf.mxu0
        %v2079 = vadd.f32 %v2050, %v2078
        %v2080 = vand.u32 %v1962, 4294901760
        %v2081 = vsub.f32 %v1962, %v2080
        %v2082 = vand.u32 %v2081, 4294901760
        %2083 = vmatmul.f32.gmra.mxu0 %v2082
        %v2084 = vpop.f32.mrf.mxu0
        %v2085 = vadd.f32 %v2055, %v2084
        %2086 = vdwg.mxu0
        %2087 = vmatpush.msra.mxu0 0.0
        %2088 = vmatpush.msra.mxu0 0.0
        %2089 = vmatpush.msra.mxu0 0.0
        %2090 = vmatpush.msra.mxu0 0.0
        %2091 = vmatpush.msra.mxu0 0.0
        %2092 = vmatpush.msra.mxu0 0.0
        %2093 = vmatpush.msra.mxu0 0.0
        %2094 = vmatpush.msra.mxu0 0.0
        %2095 = vmatpush.msra.mxu0 0.0
        %2096 = vmatpush.msra.mxu0 0.0
        %2097 = vmatpush.msra.mxu0 0.0
        %2098 = vmatpush.msra.mxu0 0.0
        %2099 = vmatpush.msra.mxu0 0.0
        %2100 = vmatpush.msra.mxu0 0.0
        %2101 = vmatpush.msra.mxu0 0.0
        %v2102 = vand.u32 %v436, 4294901760
        %v2103 = vsub.f32 %v436, %v2102
        %v2104 = vand.u32 %v2103, 4294901760
        %2105 = vmatpush.msra.mxu0 %v2104
        %v2106 = vand.u32 %v1959, 4294901760
        %2107 = vmatmul.f32.gmra.mxu0 %v2106
        %v2108 = vpop.f32.mrf.mxu0
        %v2109 = vadd.f32 %v2079, %v2108
        %v2110 = vand.u32 %v1962, 4294901760
        %2111 = vmatmul.f32.gmra.mxu0 %v2110
        %v2112 = vpop.f32.mrf.mxu0
        %v2113 = vadd.f32 %v2085, %v2112
        %2114 = vdwg.mxu0
        %2115 = vmatpush.msra.mxu0 0.0
        %2116 = vmatpush.msra.mxu0 0.0
        %2117 = vmatpush.msra.mxu0 0.0
        %2118 = vmatpush.msra.mxu0 0.0
        %2119 = vmatpush.msra.mxu0 0.0
        %2120 = vmatpush.msra.mxu0 0.0
        %2121 = vmatpush.msra.mxu0 0.0
        %2122 = vmatpush.msra.mxu0 0.0
        %2123 = vmatpush.msra.mxu0 0.0
        %2124 = vmatpush.msra.mxu0 0.0
        %2125 = vmatpush.msra.mxu0 0.0
        %2126 = vmatpush.msra.mxu0 0.0
        %2127 = vmatpush.msra.mxu0 0.0
        %2128 = vmatpush.msra.mxu0 0.0
        %2129 = vmatpush.msra.mxu0 0.0
        %v2130 = vand.u32 %v436, 4294901760
        %2131 = vmatpush.msra.mxu0 %v2130
        %v2132 = vand.u32 %v1959, 4294901760
        %2133 = vmatmul.f32.gmra.mxu0 %v2132
        %v2134 = vpop.f32.mrf.mxu0
        %v2135 = vadd.f32 %v2109, %v2134
        %v2136 = vand.u32 %v1962, 4294901760
        %2137 = vmatmul.f32.gmra.mxu0 %v2136
        %v2138 = vpop.f32.mrf.mxu0
        %v2139 = vadd.f32 %v2113, %v2138
        %2140 = vdwg.mxu0
        %v2141 = vxor.u32 %v2135, 2147483648
        %v2142 = vxor.u32 %v2139, 2147483648
        %v2143 = vmul.f32 %v2141, 1.442695
        %v2144 = vpow.pop %v2143
        %v2145 = vmul.f32 %v2142, 1.442695
        %v2146 = vpow.pop %v2145
        %v2147 = vadd.f32 %v2144, 1.0
        %v2148 = vadd.f32 %v2146, 1.0
        %v2149 = vrcp.pop %v2147
        %v2150 = vmul.f32 %v2147, %v2149
        %v2151 = vsub.f32 1.0, %v2150
        %v2152 = vmul.f32 %v2149, %v2151
        %v2153 = vadd.f32 %v2149, %v2152
        %vm2154 = vweird.f32 %v2147
        %vm2155 = vweird.f32 %v2149
        %vm2156 = vmor %vm2154, %vm2155
        %v2157 = vsel %vm2156, %v2149, %v2153
        %v2158 = vand.u32 2147483647, %v2147
        %vm2159 = vcmp.eq.f32.partialorder %v2158, 8.507059e+37
        %v2160 = vand.u32 %v2147, 2147483648
        %v2161 = vor.u32 1.1754944e-38, %v2160
        %v2162 = vsel %vm2159, %v2161, %v2157
        %v2163 = vmul.f32 1.0, %v2162
        %v2164 = vrcp.pop %v2148
        %v2165 = vmul.f32 %v2148, %v2164
        %v2166 = vsub.f32 1.0, %v2165
        %v2167 = vmul.f32 %v2164, %v2166
        %v2168 = vadd.f32 %v2164, %v2167
        %vm2169 = vweird.f32 %v2148
        %vm2170 = vweird.f32 %v2164
        %vm2171 = vmor %vm2169, %vm2170
        %v2172 = vsel %vm2171, %v2164, %v2168
        %v2173 = vand.u32 2147483647, %v2148
        %vm2174 = vcmp.eq.f32.partialorder %v2173, 8.507059e+37
        %v2175 = vand.u32 %v2148, 2147483648
        %v2176 = vor.u32 1.1754944e-38, %v2175
        %v2177 = vsel %vm2174, %v2176, %v2172
        %v2178 = vmul.f32 1.0, %v2177
        %v2180 = vperm.slane %v439, 0
        %v2183 = vsel %vm1957, %v1952, 0
        %v2186 = vsel %vm1957, %v1953, 0
        %2188 = vmatpush.msra.mxu0 0.0
        %2189 = vmatpush.msra.mxu0 0.0
        %2190 = vmatpush.msra.mxu0 0.0
        %2191 = vmatpush.msra.mxu0 0.0
        %2192 = vmatpush.msra.mxu0 0.0
        %2193 = vmatpush.msra.mxu0 0.0
        %2194 = vmatpush.msra.mxu0 0.0
        %2195 = vmatpush.msra.mxu0 0.0
        %2196 = vmatpush.msra.mxu0 0.0
        %2197 = vmatpush.msra.mxu0 0.0
        %2198 = vmatpush.msra.mxu0 0.0
        %2199 = vmatpush.msra.mxu0 0.0
        %2200 = vmatpush.msra.mxu0 0.0
        %2201 = vmatpush.msra.mxu0 0.0
        %2202 = vmatpush.msra.mxu0 0.0
        %v2203 = vand.u32 %v438, 4294901760
        %2204 = vmatpush.msra.mxu0 %v2203
        %v2205 = vand.u32 %v2183, 4294901760
        %v2206 = vsub.f32 %v2183, %v2205
        %v2207 = vand.u32 %v2206, 4294901760
        %v2208 = vsub.f32 %v2206, %v2207
        %v2209 = vand.u32 %v2208, 4294901760
        %2210 = vmatmul.f32.gmra.mxu0 %v2209
        %v2211 = vpop.f32.mrf.mxu0
        %v2212 = vadd.f32 %v2180, %v2211
        %v2213 = vand.u32 %v2186, 4294901760
        %v2214 = vsub.f32 %v2186, %v2213
        %v2215 = vand.u32 %v2214, 4294901760
        %v2216 = vsub.f32 %v2214, %v2215
        %v2217 = vand.u32 %v2216, 4294901760
        %2218 = vmatmul.f32.gmra.mxu0 %v2217
        %v2219 = vpop.f32.mrf.mxu0
        %v2220 = vadd.f32 %v2180, %v2219
        %2221 = vdwg.mxu0
        %2222 = vmatpush.msra.mxu0 0.0
        %2223 = vmatpush.msra.mxu0 0.0
        %2224 = vmatpush.msra.mxu0 0.0
        %2225 = vmatpush.msra.mxu0 0.0
        %2226 = vmatpush.msra.mxu0 0.0
        %2227 = vmatpush.msra.mxu0 0.0
        %2228 = vmatpush.msra.mxu0 0.0
        %2229 = vmatpush.msra.mxu0 0.0
        %2230 = vmatpush.msra.mxu0 0.0
        %2231 = vmatpush.msra.mxu0 0.0
        %2232 = vmatpush.msra.mxu0 0.0
        %2233 = vmatpush.msra.mxu0 0.0
        %2234 = vmatpush.msra.mxu0 0.0
        %2235 = vmatpush.msra.mxu0 0.0
        %2236 = vmatpush.msra.mxu0 0.0
        %v2237 = vand.u32 %v438, 4294901760
        %v2238 = vsub.f32 %v438, %v2237
        %v2239 = vand.u32 %v2238, 4294901760
        %v2240 = vsub.f32 %v2238, %v2239
        %v2241 = vand.u32 %v2240, 4294901760
        %2242 = vmatpush.msra.mxu0 %v2241
        %v2243 = vand.u32 %v2183, 4294901760
        %2244 = vmatmul.f32.gmra.mxu0 %v2243
        %v2245 = vpop.f32.mrf.mxu0
        %v2246 = vadd.f32 %v2212, %v2245
        %v2247 = vand.u32 %v2186, 4294901760
        %2248 = vmatmul.f32.gmra.mxu0 %v2247
        %v2249 = vpop.f32.mrf.mxu0
        %v2250 = vadd.f32 %v2220, %v2249
        %2251 = vdwg.mxu0
        %2252 = vmatpush.msra.mxu0 0.0
        %2253 = vmatpush.msra.mxu0 0.0
        %2254 = vmatpush.msra.mxu0 0.0
        %2255 = vmatpush.msra.mxu0 0.0
        %2256 = vmatpush.msra.mxu0 0.0
        %2257 = vmatpush.msra.mxu0 0.0
        %2258 = vmatpush.msra.mxu0 0.0
        %2259 = vmatpush.msra.mxu0 0.0
        %2260 = vmatpush.msra.mxu0 0.0
        %2261 = vmatpush.msra.mxu0 0.0
        %2262 = vmatpush.msra.mxu0 0.0
        %2263 = vmatpush.msra.mxu0 0.0
        %2264 = vmatpush.msra.mxu0 0.0
        %2265 = vmatpush.msra.mxu0 0.0
        %2266 = vmatpush.msra.mxu0 0.0
        %v2267 = vand.u32 %v438, 4294901760
        %v2268 = vsub.f32 %v438, %v2267
        %2269 = vmatpush.msra.mxu0 %v2268
        %v2270 = vand.u32 %v2183, 4294901760
        %v2271 = vsub.f32 %v2183, %v2270
        %2272 = vmatmul.f32.gmra.mxu0 %v2271
        %v2273 = vpop.f32.mrf.mxu0
        %v2274 = vadd.f32 %v2246, %v2273
        %v2275 = vand.u32 %v2186, 4294901760
        %v2276 = vsub.f32 %v2186, %v2275
        %2277 = vmatmul.f32.gmra.mxu0 %v2276
        %v2278 = vpop.f32.mrf.mxu0
        %v2279 = vadd.f32 %v2250, %v2278
        %2280 = vdwg.mxu0
        %2281 = vmatpush.msra.mxu0 0.0
        %2282 = vmatpush.msra.mxu0 0.0
        %2283 = vmatpush.msra.mxu0 0.0
        %2284 = vmatpush.msra.mxu0 0.0
        %2285 = vmatpush.msra.mxu0 0.0
        %2286 = vmatpush.msra.mxu0 0.0
        %2287 = vmatpush.msra.mxu0 0.0
        %2288 = vmatpush.msra.mxu0 0.0
        %2289 = vmatpush.msra.mxu0 0.0
        %2290 = vmatpush.msra.mxu0 0.0
        %2291 = vmatpush.msra.mxu0 0.0
        %2292 = vmatpush.msra.mxu0 0.0
        %2293 = vmatpush.msra.mxu0 0.0
        %2294 = vmatpush.msra.mxu0 0.0
        %2295 = vmatpush.msra.mxu0 0.0
        %v2296 = vand.u32 %v438, 4294901760
        %2297 = vmatpush.msra.mxu0 %v2296
        %v2298 = vand.u32 %v2183, 4294901760
        %v2299 = vsub.f32 %v2183, %v2298
        %v2300 = vand.u32 %v2299, 4294901760
        %2301 = vmatmul.f32.gmra.mxu0 %v2300
        %v2302 = vpop.f32.mrf.mxu0
        %v2303 = vadd.f32 %v2274, %v2302
        %v2304 = vand.u32 %v2186, 4294901760
        %v2305 = vsub.f32 %v2186, %v2304
        %v2306 = vand.u32 %v2305, 4294901760
        %2307 = vmatmul.f32.gmra.mxu0 %v2306
        %v2308 = vpop.f32.mrf.mxu0
        %v2309 = vadd.f32 %v2279, %v2308
        %2310 = vdwg.mxu0
        %2311 = vmatpush.msra.mxu0 0.0
        %2312 = vmatpush.msra.mxu0 0.0
        %2313 = vmatpush.msra.mxu0 0.0
        %2314 = vmatpush.msra.mxu0 0.0
        %2315 = vmatpush.msra.mxu0 0.0
        %2316 = vmatpush.msra.mxu0 0.0
        %2317 = vmatpush.msra.mxu0 0.0
        %2318 = vmatpush.msra.mxu0 0.0
        %2319 = vmatpush.msra.mxu0 0.0
        %2320 = vmatpush.msra.mxu0 0.0
        %2321 = vmatpush.msra.mxu0 0.0
        %2322 = vmatpush.msra.mxu0 0.0
        %2323 = vmatpush.msra.mxu0 0.0
        %2324 = vmatpush.msra.mxu0 0.0
        %2325 = vmatpush.msra.mxu0 0.0
        %v2326 = vand.u32 %v438, 4294901760
        %v2327 = vsub.f32 %v438, %v2326
        %v2328 = vand.u32 %v2327, 4294901760
        %2329 = vmatpush.msra.mxu0 %v2328
        %v2330 = vand.u32 %v2183, 4294901760
        %2331 = vmatmul.f32.gmra.mxu0 %v2330
        %v2332 = vpop.f32.mrf.mxu0
        %v2333 = vadd.f32 %v2303, %v2332
        %v2334 = vand.u32 %v2186, 4294901760
        %2335 = vmatmul.f32.gmra.mxu0 %v2334
        %v2336 = vpop.f32.mrf.mxu0
        %v2337 = vadd.f32 %v2309, %v2336
        %2338 = vdwg.mxu0
        %2339 = vmatpush.msra.mxu0 0.0
        %2340 = vmatpush.msra.mxu0 0.0
        %2341 = vmatpush.msra.mxu0 0.0
        %2342 = vmatpush.msra.mxu0 0.0
        %2343 = vmatpush.msra.mxu0 0.0
        %2344 = vmatpush.msra.mxu0 0.0
        %2345 = vmatpush.msra.mxu0 0.0
        %2346 = vmatpush.msra.mxu0 0.0
        %2347 = vmatpush.msra.mxu0 0.0
        %2348 = vmatpush.msra.mxu0 0.0
        %2349 = vmatpush.msra.mxu0 0.0
        %2350 = vmatpush.msra.mxu0 0.0
        %2351 = vmatpush.msra.mxu0 0.0
        %2352 = vmatpush.msra.mxu0 0.0
        %2353 = vmatpush.msra.mxu0 0.0
        %v2354 = vand.u32 %v438, 4294901760
        %2355 = vmatpush.msra.mxu0 %v2354
        %v2356 = vand.u32 %v2183, 4294901760
        %2357 = vmatmul.f32.gmra.mxu0 %v2356
        %v2358 = vpop.f32.mrf.mxu0
        %v2359 = vadd.f32 %v2333, %v2358
        %v2360 = vand.u32 %v2186, 4294901760
        %2361 = vmatmul.f32.gmra.mxu0 %v2360
        %v2362 = vpop.f32.mrf.mxu0
        %v2363 = vadd.f32 %v2337, %v2362
        %2364 = vdwg.mxu0
        %v2365 = vxor.u32 %v2359, 2147483648
        %v2366 = vxor.u32 %v2363, 2147483648
        %v2367 = vmul.f32 %v2365, 1.442695
        %v2368 = vpow.pop %v2367
        %v2369 = vmul.f32 %v2366, 1.442695
        %v2370 = vpow.pop %v2369
        %v2371 = vadd.f32 %v2368, 1.0
        %v2372 = vadd.f32 %v2370, 1.0
        %v2373 = vrcp.pop %v2371
        %v2374 = vmul.f32 %v2371, %v2373
        %v2375 = vsub.f32 1.0, %v2374
        %v2376 = vmul.f32 %v2373, %v2375
        %v2377 = vadd.f32 %v2373, %v2376
        %vm2378 = vweird.f32 %v2371
        %vm2379 = vweird.f32 %v2373
        %vm2380 = vmor %vm2378, %vm2379
        %v2381 = vsel %vm2380, %v2373, %v2377
        %v2382 = vand.u32 2147483647, %v2371
        %vm2383 = vcmp.eq.f32.partialorder %v2382, 8.507059e+37
        %v2384 = vand.u32 %v2371, 2147483648
        %v2385 = vor.u32 1.1754944e-38, %v2384
        %v2386 = vsel %vm2383, %v2385, %v2381
        %v2387 = vmul.f32 1.0, %v2386
        %v2388 = vrcp.pop %v2372
        %v2389 = vmul.f32 %v2372, %v2388
        %v2390 = vsub.f32 1.0, %v2389
        %v2391 = vmul.f32 %v2388, %v2390
        %v2392 = vadd.f32 %v2388, %v2391
        %vm2393 = vweird.f32 %v2372
        %vm2394 = vweird.f32 %v2388
        %vm2395 = vmor %vm2393, %vm2394
        %v2396 = vsel %vm2395, %v2388, %v2392
        %v2397 = vand.u32 2147483647, %v2372
        %vm2398 = vcmp.eq.f32.partialorder %v2397, 8.507059e+37
        %v2399 = vand.u32 %v2372, 2147483648
        %v2400 = vor.u32 1.1754944e-38, %v2399
        %v2401 = vsel %vm2398, %v2400, %v2396
        %v2402 = vmul.f32 1.0, %v2401
        %2403 = vxpose.xlu0.b32.start [1/16] %v2163, 128
        %2404 = vxpose.xlu0.b32.cont [2/16] %v2178, 128
        %2405 = vxpose.xlu0.b32.cont [3/16] 0.0, 128
        %2406 = vxpose.xlu0.b32.cont [4/16] 0.0, 128
        %2407 = vxpose.xlu0.b32.cont [5/16] 0.0, 128
        %2408 = vxpose.xlu0.b32.cont [6/16] 0.0, 128
        %2409 = vxpose.xlu0.b32.cont [7/16] 0.0, 128
        %2410 = vxpose.xlu0.b32.cont [8/16] 0.0, 128
        %2411 = vxpose.xlu0.b32.cont [9/16] 0.0, 128
        %2412 = vxpose.xlu0.b32.cont [10/16] 0.0, 128
        %2413 = vxpose.xlu0.b32.cont [11/16] 0.0, 128
        %2414 = vxpose.xlu0.b32.cont [12/16] 0.0, 128
        %2415 = vxpose.xlu0.b32.cont [13/16] 0.0, 128
        %2416 = vxpose.xlu0.b32.cont [14/16] 0.0, 128
        %2417 = vxpose.xlu0.b32.cont [15/16] 0.0, 128
        %2418 = vxpose.xlu0.b32.end [16/16] 0.0, 128
        %v2419 = vpop.trf.xlu0
        %v2420 = vpop.trf.xlu0
        %v2421 = vpop.trf.xlu0
        %v2422 = vpop.trf.xlu0
        %v2423 = vpop.trf.xlu0
        %v2424 = vpop.trf.xlu0
        %v2425 = vpop.trf.xlu0
        %v2426 = vpop.trf.xlu0
        %v2427 = vpop.trf.xlu0
        %v2428 = vpop.trf.xlu0
        %v2429 = vpop.trf.xlu0
        %v2430 = vpop.trf.xlu0
        %v2431 = vpop.trf.xlu0
        %v2432 = vpop.trf.xlu0
        %v2433 = vpop.trf.xlu0
        %v2434 = vpop.trf.xlu0
        %2435 = vxpose.xlu0.b32.start [1/16] %v2387, 128
        %2436 = vxpose.xlu0.b32.cont [2/16] %v2402, 128
        %2437 = vxpose.xlu0.b32.cont [3/16] 0.0, 128
        %2438 = vxpose.xlu0.b32.cont [4/16] 0.0, 128
        %2439 = vxpose.xlu0.b32.cont [5/16] 0.0, 128
        %2440 = vxpose.xlu0.b32.cont [6/16] 0.0, 128
        %2441 = vxpose.xlu0.b32.cont [7/16] 0.0, 128
        %2442 = vxpose.xlu0.b32.cont [8/16] 0.0, 128
        %2443 = vxpose.xlu0.b32.cont [9/16] 0.0, 128
        %2444 = vxpose.xlu0.b32.cont [10/16] 0.0, 128
        %2445 = vxpose.xlu0.b32.cont [11/16] 0.0, 128
        %2446 = vxpose.xlu0.b32.cont [12/16] 0.0, 128
        %2447 = vxpose.xlu0.b32.cont [13/16] 0.0, 128
        %2448 = vxpose.xlu0.b32.cont [14/16] 0.0, 128
        %2449 = vxpose.xlu0.b32.cont [15/16] 0.0, 128
        %2450 = vxpose.xlu0.b32.end [16/16] 0.0, 128
        %v2451 = vpop.trf.xlu0
        %v2452 = vpop.trf.xlu0
        %v2453 = vpop.trf.xlu0
        %v2454 = vpop.trf.xlu0
        %v2455 = vpop.trf.xlu0
        %v2456 = vpop.trf.xlu0
        %v2457 = vpop.trf.xlu0
        %v2458 = vpop.trf.xlu0
        %v2459 = vpop.trf.xlu0
        %v2460 = vpop.trf.xlu0
        %v2461 = vpop.trf.xlu0
        %v2462 = vpop.trf.xlu0
        %v2463 = vpop.trf.xlu0
        %v2464 = vpop.trf.xlu0
        %v2465 = vpop.trf.xlu0
        %v2466 = vpop.trf.xlu0
        %v2467 = vld [vmem:[%s2] sm:$0xff]
        %v2468 = vld [vmem:[%s2 + $0x8] sm:$0xff]
        %v2469 = vld [vmem:[%s2 + $0x10] sm:$0xff]
        %v2470 = vld [vmem:[%s2 + $0x18] sm:$0xff]
        %vm2471 = vcmask 130048
        %v2473 = vsel %vm2471, %v2419, 0
        %v2476 = vsel %vm2471, %v2420, 0
        %v2479 = vsel %vm2471, %v2421, 0
        %v2482 = vsel %vm2471, %v2422, 0
        %v2485 = vsel %vm2471, %v2423, 0
        %v2488 = vsel %vm2471, %v2424, 0
        %v2491 = vsel %vm2471, %v2425, 0
        %v2494 = vsel %vm2471, %v2426, 0
        %2496 = vmatpush.msra.mxu0 0.0
        %2497 = vmatpush.msra.mxu0 0.0
        %2498 = vmatpush.msra.mxu0 0.0
        %2499 = vmatpush.msra.mxu0 0.0
        %2500 = vmatpush.msra.mxu0 0.0
        %2501 = vmatpush.msra.mxu0 0.0
        %2502 = vmatpush.msra.mxu0 0.0
        %2503 = vmatpush.msra.mxu0 0.0
        %2504 = vmatpush.msra.mxu0 0.0
        %2505 = vmatpush.msra.mxu0 0.0
        %2506 = vmatpush.msra.mxu0 0.0
        %2507 = vmatpush.msra.mxu0 0.0
        %2508 = vmatpush.msra.mxu0 0.0
        %2509 = vmatpush.msra.mxu0 0.0
        %v2510 = vand.u32 %v2469, 4294901760
        %2511 = vmatpush.msra.mxu0 %v2510
        %v2512 = vand.u32 %v2467, 4294901760
        %2513 = vmatpush.msra.mxu0 %v2512
        %v2514 = vand.u32 %v2473, 4294901760
        %v2515 = vsub.f32 %v2473, %v2514
        %v2516 = vand.u32 %v2515, 4294901760
        %v2517 = vsub.f32 %v2515, %v2516
        %v2518 = vand.u32 %v2517, 4294901760
        %2519 = vmatmul.f32.gmra.mxu0 %v2518
        %v2520 = vpop.f32.mrf.mxu0
        %v2521 = vadd.f32 0.0, %v2520
        %v2522 = vand.u32 %v2476, 4294901760
        %v2523 = vsub.f32 %v2476, %v2522
        %v2524 = vand.u32 %v2523, 4294901760
        %v2525 = vsub.f32 %v2523, %v2524
        %v2526 = vand.u32 %v2525, 4294901760
        %2527 = vmatmul.f32.gmra.mxu0 %v2526
        %v2528 = vpop.f32.mrf.mxu0
        %v2529 = vadd.f32 0.0, %v2528
        %v2530 = vand.u32 %v2479, 4294901760
        %v2531 = vsub.f32 %v2479, %v2530
        %v2532 = vand.u32 %v2531, 4294901760
        %v2533 = vsub.f32 %v2531, %v2532
        %v2534 = vand.u32 %v2533, 4294901760
        %2535 = vmatmul.f32.gmra.mxu0 %v2534
        %v2536 = vpop.f32.mrf.mxu0
        %v2537 = vadd.f32 0.0, %v2536
        %v2538 = vand.u32 %v2482, 4294901760
        %v2539 = vsub.f32 %v2482, %v2538
        %v2540 = vand.u32 %v2539, 4294901760
        %v2541 = vsub.f32 %v2539, %v2540
        %v2542 = vand.u32 %v2541, 4294901760
        %2543 = vmatmul.f32.gmra.mxu0 %v2542
        %v2544 = vpop.f32.mrf.mxu0
        %v2545 = vadd.f32 0.0, %v2544
        %v2546 = vand.u32 %v2485, 4294901760
        %v2547 = vsub.f32 %v2485, %v2546
        %v2548 = vand.u32 %v2547, 4294901760
        %v2549 = vsub.f32 %v2547, %v2548
        %v2550 = vand.u32 %v2549, 4294901760
        %2551 = vmatmul.f32.gmra.mxu0 %v2550
        %v2552 = vpop.f32.mrf.mxu0
        %v2553 = vadd.f32 0.0, %v2552
        %v2554 = vand.u32 %v2488, 4294901760
        %v2555 = vsub.f32 %v2488, %v2554
        %v2556 = vand.u32 %v2555, 4294901760
        %v2557 = vsub.f32 %v2555, %v2556
        %v2558 = vand.u32 %v2557, 4294901760
        %2559 = vmatmul.f32.gmra.mxu0 %v2558
        %v2560 = vpop.f32.mrf.mxu0
        %v2561 = vadd.f32 0.0, %v2560
        %v2562 = vand.u32 %v2491, 4294901760
        %v2563 = vsub.f32 %v2491, %v2562
        %v2564 = vand.u32 %v2563, 4294901760
        %v2565 = vsub.f32 %v2563, %v2564
        %v2566 = vand.u32 %v2565, 4294901760
        %2567 = vmatmul.f32.gmra.mxu0 %v2566
        %v2568 = vpop.f32.mrf.mxu0
        %v2569 = vadd.f32 0.0, %v2568
        %v2570 = vand.u32 %v2494, 4294901760
        %v2571 = vsub.f32 %v2494, %v2570
        %v2572 = vand.u32 %v2571, 4294901760
        %v2573 = vsub.f32 %v2571, %v2572
        %v2574 = vand.u32 %v2573, 4294901760
        %2575 = vmatmul.f32.gmra.mxu0 %v2574
        %v2576 = vpop.f32.mrf.mxu0
        %v2577 = vadd.f32 0.0, %v2576
        %2578 = vdwg.mxu0
        %2579 = vmatpush.msra.mxu0 0.0
        %2580 = vmatpush.msra.mxu0 0.0
        %2581 = vmatpush.msra.mxu0 0.0
        %2582 = vmatpush.msra.mxu0 0.0
        %2583 = vmatpush.msra.mxu0 0.0
        %2584 = vmatpush.msra.mxu0 0.0
        %2585 = vmatpush.msra.mxu0 0.0
        %2586 = vmatpush.msra.mxu0 0.0
        %2587 = vmatpush.msra.mxu0 0.0
        %2588 = vmatpush.msra.mxu0 0.0
        %2589 = vmatpush.msra.mxu0 0.0
        %2590 = vmatpush.msra.mxu0 0.0
        %2591 = vmatpush.msra.mxu0 0.0
        %2592 = vmatpush.msra.mxu0 0.0
        %v2593 = vand.u32 %v2469, 4294901760
        %v2594 = vsub.f32 %v2469, %v2593
        %v2595 = vand.u32 %v2594, 4294901760
        %v2596 = vsub.f32 %v2594, %v2595
        %v2597 = vand.u32 %v2596, 4294901760
        %2598 = vmatpush.msra.mxu0 %v2597
        %v2599 = vand.u32 %v2467, 4294901760
        %v2600 = vsub.f32 %v2467, %v2599
        %v2601 = vand.u32 %v2600, 4294901760
        %v2602 = vsub.f32 %v2600, %v2601
        %v2603 = vand.u32 %v2602, 4294901760
        %2604 = vmatpush.msra.mxu0 %v2603
        %v2605 = vand.u32 %v2473, 4294901760
        %2606 = vmatmul.f32.gmra.mxu0 %v2605
        %v2607 = vpop.f32.mrf.mxu0
        %v2608 = vadd.f32 %v2521, %v2607
        %v2609 = vand.u32 %v2476, 4294901760
        %2610 = vmatmul.f32.gmra.mxu0 %v2609
        %v2611 = vpop.f32.mrf.mxu0
        %v2612 = vadd.f32 %v2529, %v2611
        %v2613 = vand.u32 %v2479, 4294901760
        %2614 = vmatmul.f32.gmra.mxu0 %v2613
        %v2615 = vpop.f32.mrf.mxu0
        %v2616 = vadd.f32 %v2537, %v2615
        %v2617 = vand.u32 %v2482, 4294901760
        %2618 = vmatmul.f32.gmra.mxu0 %v2617
        %v2619 = vpop.f32.mrf.mxu0
        %v2620 = vadd.f32 %v2545, %v2619
        %v2621 = vand.u32 %v2485, 4294901760
        %2622 = vmatmul.f32.gmra.mxu0 %v2621
        %v2623 = vpop.f32.mrf.mxu0
        %v2624 = vadd.f32 %v2553, %v2623
        %v2625 = vand.u32 %v2488, 4294901760
        %2626 = vmatmul.f32.gmra.mxu0 %v2625
        %v2627 = vpop.f32.mrf.mxu0
        %v2628 = vadd.f32 %v2561, %v2627
        %v2629 = vand.u32 %v2491, 4294901760
        %2630 = vmatmul.f32.gmra.mxu0 %v2629
        %v2631 = vpop.f32.mrf.mxu0
        %v2632 = vadd.f32 %v2569, %v2631
        %v2633 = vand.u32 %v2494, 4294901760
        %2634 = vmatmul.f32.gmra.mxu0 %v2633
        %v2635 = vpop.f32.mrf.mxu0
        %v2636 = vadd.f32 %v2577, %v2635
        %2637 = vdwg.mxu0
        %2638 = vmatpush.msra.mxu0 0.0
        %2639 = vmatpush.msra.mxu0 0.0
        %2640 = vmatpush.msra.mxu0 0.0
        %2641 = vmatpush.msra.mxu0 0.0
        %2642 = vmatpush.msra.mxu0 0.0
        %2643 = vmatpush.msra.mxu0 0.0
        %2644 = vmatpush.msra.mxu0 0.0
        %2645 = vmatpush.msra.mxu0 0.0
        %2646 = vmatpush.msra.mxu0 0.0
        %2647 = vmatpush.msra.mxu0 0.0
        %2648 = vmatpush.msra.mxu0 0.0
        %2649 = vmatpush.msra.mxu0 0.0
        %2650 = vmatpush.msra.mxu0 0.0
        %2651 = vmatpush.msra.mxu0 0.0
        %v2652 = vand.u32 %v2469, 4294901760
        %v2653 = vsub.f32 %v2469, %v2652
        %2654 = vmatpush.msra.mxu0 %v2653
        %v2655 = vand.u32 %v2467, 4294901760
        %v2656 = vsub.f32 %v2467, %v2655
        %2657 = vmatpush.msra.mxu0 %v2656
        %v2658 = vand.u32 %v2473, 4294901760
        %v2659 = vsub.f32 %v2473, %v2658
        %2660 = vmatmul.f32.gmra.mxu0 %v2659
        %v2661 = vpop.f32.mrf.mxu0
        %v2662 = vadd.f32 %v2608, %v2661
        %v2663 = vand.u32 %v2476, 4294901760
        %v2664 = vsub.f32 %v2476, %v2663
        %2665 = vmatmul.f32.gmra.mxu0 %v2664
        %v2666 = vpop.f32.mrf.mxu0
        %v2667 = vadd.f32 %v2612, %v2666
        %v2668 = vand.u32 %v2479, 4294901760
        %v2669 = vsub.f32 %v2479, %v2668
        %2670 = vmatmul.f32.gmra.mxu0 %v2669
        %v2671 = vpop.f32.mrf.mxu0
        %v2672 = vadd.f32 %v2616, %v2671
        %v2673 = vand.u32 %v2482, 4294901760
        %v2674 = vsub.f32 %v2482, %v2673
        %2675 = vmatmul.f32.gmra.mxu0 %v2674
        %v2676 = vpop.f32.mrf.mxu0
        %v2677 = vadd.f32 %v2620, %v2676
        %v2678 = vand.u32 %v2485, 4294901760
        %v2679 = vsub.f32 %v2485, %v2678
        %2680 = vmatmul.f32.gmra.mxu0 %v2679
        %v2681 = vpop.f32.mrf.mxu0
        %v2682 = vadd.f32 %v2624, %v2681
        %v2683 = vand.u32 %v2488, 4294901760
        %v2684 = vsub.f32 %v2488, %v2683
        %2685 = vmatmul.f32.gmra.mxu0 %v2684
        %v2686 = vpop.f32.mrf.mxu0
        %v2687 = vadd.f32 %v2628, %v2686
        %v2688 = vand.u32 %v2491, 4294901760
        %v2689 = vsub.f32 %v2491, %v2688
        %2690 = vmatmul.f32.gmra.mxu0 %v2689
        %v2691 = vpop.f32.mrf.mxu0
        %v2692 = vadd.f32 %v2632, %v2691
        %v2693 = vand.u32 %v2494, 4294901760
        %v2694 = vsub.f32 %v2494, %v2693
        %2695 = vmatmul.f32.gmra.mxu0 %v2694
        %v2696 = vpop.f32.mrf.mxu0
        %v2697 = vadd.f32 %v2636, %v2696
        %2698 = vdwg.mxu0
        %2699 = vmatpush.msra.mxu0 0.0
        %2700 = vmatpush.msra.mxu0 0.0
        %2701 = vmatpush.msra.mxu0 0.0
        %2702 = vmatpush.msra.mxu0 0.0
        %2703 = vmatpush.msra.mxu0 0.0
        %2704 = vmatpush.msra.mxu0 0.0
        %2705 = vmatpush.msra.mxu0 0.0
        %2706 = vmatpush.msra.mxu0 0.0
        %2707 = vmatpush.msra.mxu0 0.0
        %2708 = vmatpush.msra.mxu0 0.0
        %2709 = vmatpush.msra.mxu0 0.0
        %2710 = vmatpush.msra.mxu0 0.0
        %2711 = vmatpush.msra.mxu0 0.0
        %2712 = vmatpush.msra.mxu0 0.0
        %v2713 = vand.u32 %v2469, 4294901760
        %2714 = vmatpush.msra.mxu0 %v2713
        %v2715 = vand.u32 %v2467, 4294901760
        %2716 = vmatpush.msra.mxu0 %v2715
        %v2717 = vand.u32 %v2473, 4294901760
        %v2718 = vsub.f32 %v2473, %v2717
        %v2719 = vand.u32 %v2718, 4294901760
        %2720 = vmatmul.f32.gmra.mxu0 %v2719
        %v2721 = vpop.f32.mrf.mxu0
        %v2722 = vadd.f32 %v2662, %v2721
        %v2723 = vand.u32 %v2476, 4294901760
        %v2724 = vsub.f32 %v2476, %v2723
        %v2725 = vand.u32 %v2724, 4294901760
        %2726 = vmatmul.f32.gmra.mxu0 %v2725
        %v2727 = vpop.f32.mrf.mxu0
        %v2728 = vadd.f32 %v2667, %v2727
        %v2729 = vand.u32 %v2479, 4294901760
        %v2730 = vsub.f32 %v2479, %v2729
        %v2731 = vand.u32 %v2730, 4294901760
        %2732 = vmatmul.f32.gmra.mxu0 %v2731
        %v2733 = vpop.f32.mrf.mxu0
        %v2734 = vadd.f32 %v2672, %v2733
        %v2735 = vand.u32 %v2482, 4294901760
        %v2736 = vsub.f32 %v2482, %v2735
        %v2737 = vand.u32 %v2736, 4294901760
        %2738 = vmatmul.f32.gmra.mxu0 %v2737
        %v2739 = vpop.f32.mrf.mxu0
        %v2740 = vadd.f32 %v2677, %v2739
        %v2741 = vand.u32 %v2485, 4294901760
        %v2742 = vsub.f32 %v2485, %v2741
        %v2743 = vand.u32 %v2742, 4294901760
        %2744 = vmatmul.f32.gmra.mxu0 %v2743
        %v2745 = vpop.f32.mrf.mxu0
        %v2746 = vadd.f32 %v2682, %v2745
        %v2747 = vand.u32 %v2488, 4294901760
        %v2748 = vsub.f32 %v2488, %v2747
        %v2749 = vand.u32 %v2748, 4294901760
        %2750 = vmatmul.f32.gmra.mxu0 %v2749
        %v2751 = vpop.f32.mrf.mxu0
        %v2752 = vadd.f32 %v2687, %v2751
        %v2753 = vand.u32 %v2491, 4294901760
        %v2754 = vsub.f32 %v2491, %v2753
        %v2755 = vand.u32 %v2754, 4294901760
        %2756 = vmatmul.f32.gmra.mxu0 %v2755
        %v2757 = vpop.f32.mrf.mxu0
        %v2758 = vadd.f32 %v2692, %v2757
        %v2759 = vand.u32 %v2494, 4294901760
        %v2760 = vsub.f32 %v2494, %v2759
        %v2761 = vand.u32 %v2760, 4294901760
        %2762 = vmatmul.f32.gmra.mxu0 %v2761
        %v2763 = vpop.f32.mrf.mxu0
        %v2764 = vadd.f32 %v2697, %v2763
        %2765 = vdwg.mxu0
        %2766 = vmatpush.msra.mxu0 0.0
        %2767 = vmatpush.msra.mxu0 0.0
        %2768 = vmatpush.msra.mxu0 0.0
        %2769 = vmatpush.msra.mxu0 0.0
        %2770 = vmatpush.msra.mxu0 0.0
        %2771 = vmatpush.msra.mxu0 0.0
        %2772 = vmatpush.msra.mxu0 0.0
        %2773 = vmatpush.msra.mxu0 0.0
        %2774 = vmatpush.msra.mxu0 0.0
        %2775 = vmatpush.msra.mxu0 0.0
        %2776 = vmatpush.msra.mxu0 0.0
        %2777 = vmatpush.msra.mxu0 0.0
        %2778 = vmatpush.msra.mxu0 0.0
        %2779 = vmatpush.msra.mxu0 0.0
        %v2780 = vand.u32 %v2469, 4294901760
        %v2781 = vsub.f32 %v2469, %v2780
        %v2782 = vand.u32 %v2781, 4294901760
        %2783 = vmatpush.msra.mxu0 %v2782
        %v2784 = vand.u32 %v2467, 4294901760
        %v2785 = vsub.f32 %v2467, %v2784
        %v2786 = vand.u32 %v2785, 4294901760
        %2787 = vmatpush.msra.mxu0 %v2786
        %v2788 = vand.u32 %v2473, 4294901760
        %2789 = vmatmul.f32.gmra.mxu0 %v2788
        %v2790 = vpop.f32.mrf.mxu0
        %v2791 = vadd.f32 %v2722, %v2790
        %v2792 = vand.u32 %v2476, 4294901760
        %2793 = vmatmul.f32.gmra.mxu0 %v2792
        %v2794 = vpop.f32.mrf.mxu0
        %v2795 = vadd.f32 %v2728, %v2794
        %v2796 = vand.u32 %v2479, 4294901760
        %2797 = vmatmul.f32.gmra.mxu0 %v2796
        %v2798 = vpop.f32.mrf.mxu0
        %v2799 = vadd.f32 %v2734, %v2798
        %v2800 = vand.u32 %v2482, 4294901760
        %2801 = vmatmul.f32.gmra.mxu0 %v2800
        %v2802 = vpop.f32.mrf.mxu0
        %v2803 = vadd.f32 %v2740, %v2802
        %v2804 = vand.u32 %v2485, 4294901760
        %2805 = vmatmul.f32.gmra.mxu0 %v2804
        %v2806 = vpop.f32.mrf.mxu0
        %v2807 = vadd.f32 %v2746, %v2806
        %v2808 = vand.u32 %v2488, 4294901760
        %2809 = vmatmul.f32.gmra.mxu0 %v2808
        %v2810 = vpop.f32.mrf.mxu0
        %v2811 = vadd.f32 %v2752, %v2810
        %v2812 = vand.u32 %v2491, 4294901760
        %2813 = vmatmul.f32.gmra.mxu0 %v2812
        %v2814 = vpop.f32.mrf.mxu0
        %v2815 = vadd.f32 %v2758, %v2814
        %v2816 = vand.u32 %v2494, 4294901760
        %2817 = vmatmul.f32.gmra.mxu0 %v2816
        %v2818 = vpop.f32.mrf.mxu0
        %v2819 = vadd.f32 %v2764, %v2818
        %2820 = vdwg.mxu0
        %2821 = vmatpush.msra.mxu0 0.0
        %2822 = vmatpush.msra.mxu0 0.0
        %2823 = vmatpush.msra.mxu0 0.0
        %2824 = vmatpush.msra.mxu0 0.0
        %2825 = vmatpush.msra.mxu0 0.0
        %2826 = vmatpush.msra.mxu0 0.0
        %2827 = vmatpush.msra.mxu0 0.0
        %2828 = vmatpush.msra.mxu0 0.0
        %2829 = vmatpush.msra.mxu0 0.0
        %2830 = vmatpush.msra.mxu0 0.0
        %2831 = vmatpush.msra.mxu0 0.0
        %2832 = vmatpush.msra.mxu0 0.0
        %2833 = vmatpush.msra.mxu0 0.0
        %2834 = vmatpush.msra.mxu0 0.0
        %v2835 = vand.u32 %v2469, 4294901760
        %2836 = vmatpush.msra.mxu0 %v2835
        %v2837 = vand.u32 %v2467, 4294901760
        %2838 = vmatpush.msra.mxu0 %v2837
        %v2839 = vand.u32 %v2473, 4294901760
        %2840 = vmatmul.f32.gmra.mxu0 %v2839
        %v2841 = vpop.f32.mrf.mxu0
        %v2842 = vadd.f32 %v2791, %v2841
        %v2843 = vand.u32 %v2476, 4294901760
        %2844 = vmatmul.f32.gmra.mxu0 %v2843
        %v2845 = vpop.f32.mrf.mxu0
        %v2846 = vadd.f32 %v2795, %v2845
        %v2847 = vand.u32 %v2479, 4294901760
        %2848 = vmatmul.f32.gmra.mxu0 %v2847
        %v2849 = vpop.f32.mrf.mxu0
        %v2850 = vadd.f32 %v2799, %v2849
        %v2851 = vand.u32 %v2482, 4294901760
        %2852 = vmatmul.f32.gmra.mxu0 %v2851
        %v2853 = vpop.f32.mrf.mxu0
        %v2854 = vadd.f32 %v2803, %v2853
        %v2855 = vand.u32 %v2485, 4294901760
        %2856 = vmatmul.f32.gmra.mxu0 %v2855
        %v2857 = vpop.f32.mrf.mxu0
        %v2858 = vadd.f32 %v2807, %v2857
        %v2859 = vand.u32 %v2488, 4294901760
        %2860 = vmatmul.f32.gmra.mxu0 %v2859
        %v2861 = vpop.f32.mrf.mxu0
        %v2862 = vadd.f32 %v2811, %v2861
        %v2863 = vand.u32 %v2491, 4294901760
        %2864 = vmatmul.f32.gmra.mxu0 %v2863
        %v2865 = vpop.f32.mrf.mxu0
        %v2866 = vadd.f32 %v2815, %v2865
        %v2867 = vand.u32 %v2494, 4294901760
        %2868 = vmatmul.f32.gmra.mxu0 %v2867
        %v2869 = vpop.f32.mrf.mxu0
        %v2870 = vadd.f32 %v2819, %v2869
        %2871 = vdwg.mxu0
        %2872 = vmatpush.msra.mxu0 0.0
        %2873 = vmatpush.msra.mxu0 0.0
        %2874 = vmatpush.msra.mxu0 0.0
        %2875 = vmatpush.msra.mxu0 0.0
        %2876 = vmatpush.msra.mxu0 0.0
        %2877 = vmatpush.msra.mxu0 0.0
        %2878 = vmatpush.msra.mxu0 0.0
        %2879 = vmatpush.msra.mxu0 0.0
        %2880 = vmatpush.msra.mxu0 0.0
        %2881 = vmatpush.msra.mxu0 0.0
        %2882 = vmatpush.msra.mxu0 0.0
        %2883 = vmatpush.msra.mxu0 0.0
        %2884 = vmatpush.msra.mxu0 0.0
        %2885 = vmatpush.msra.mxu0 0.0
        %v2886 = vand.u32 %v2470, 4294901760
        %2887 = vmatpush.msra.mxu0 %v2886
        %v2888 = vand.u32 %v2468, 4294901760
        %2889 = vmatpush.msra.mxu0 %v2888
        %v2890 = vand.u32 %v2473, 4294901760
        %v2891 = vsub.f32 %v2473, %v2890
        %v2892 = vand.u32 %v2891, 4294901760
        %v2893 = vsub.f32 %v2891, %v2892
        %v2894 = vand.u32 %v2893, 4294901760
        %2895 = vmatmul.f32.gmra.mxu0 %v2894
        %v2896 = vpop.f32.mrf.mxu0
        %v2897 = vadd.f32 0.0, %v2896
        %v2898 = vand.u32 %v2476, 4294901760
        %v2899 = vsub.f32 %v2476, %v2898
        %v2900 = vand.u32 %v2899, 4294901760
        %v2901 = vsub.f32 %v2899, %v2900
        %v2902 = vand.u32 %v2901, 4294901760
        %2903 = vmatmul.f32.gmra.mxu0 %v2902
        %v2904 = vpop.f32.mrf.mxu0
        %v2905 = vadd.f32 0.0, %v2904
        %v2906 = vand.u32 %v2479, 4294901760
        %v2907 = vsub.f32 %v2479, %v2906
        %v2908 = vand.u32 %v2907, 4294901760
        %v2909 = vsub.f32 %v2907, %v2908
        %v2910 = vand.u32 %v2909, 4294901760
        %2911 = vmatmul.f32.gmra.mxu0 %v2910
        %v2912 = vpop.f32.mrf.mxu0
        %v2913 = vadd.f32 0.0, %v2912
        %v2914 = vand.u32 %v2482, 4294901760
        %v2915 = vsub.f32 %v2482, %v2914
        %v2916 = vand.u32 %v2915, 4294901760
        %v2917 = vsub.f32 %v2915, %v2916
        %v2918 = vand.u32 %v2917, 4294901760
        %2919 = vmatmul.f32.gmra.mxu0 %v2918
        %v2920 = vpop.f32.mrf.mxu0
        %v2921 = vadd.f32 0.0, %v2920
        %v2922 = vand.u32 %v2485, 4294901760
        %v2923 = vsub.f32 %v2485, %v2922
        %v2924 = vand.u32 %v2923, 4294901760
        %v2925 = vsub.f32 %v2923, %v2924
        %v2926 = vand.u32 %v2925, 4294901760
        %2927 = vmatmul.f32.gmra.mxu0 %v2926
        %v2928 = vpop.f32.mrf.mxu0
        %v2929 = vadd.f32 0.0, %v2928
        %v2930 = vand.u32 %v2488, 4294901760
        %v2931 = vsub.f32 %v2488, %v2930
        %v2932 = vand.u32 %v2931, 4294901760
        %v2933 = vsub.f32 %v2931, %v2932
        %v2934 = vand.u32 %v2933, 4294901760
        %2935 = vmatmul.f32.gmra.mxu0 %v2934
        %v2936 = vpop.f32.mrf.mxu0
        %v2937 = vadd.f32 0.0, %v2936
        %v2938 = vand.u32 %v2491, 4294901760
        %v2939 = vsub.f32 %v2491, %v2938
        %v2940 = vand.u32 %v2939, 4294901760
        %v2941 = vsub.f32 %v2939, %v2940
        %v2942 = vand.u32 %v2941, 4294901760
        %2943 = vmatmul.f32.gmra.mxu0 %v2942
        %v2944 = vpop.f32.mrf.mxu0
        %v2945 = vadd.f32 0.0, %v2944
        %v2946 = vand.u32 %v2494, 4294901760
        %v2947 = vsub.f32 %v2494, %v2946
        %v2948 = vand.u32 %v2947, 4294901760
        %v2949 = vsub.f32 %v2947, %v2948
        %v2950 = vand.u32 %v2949, 4294901760
        %2951 = vmatmul.f32.gmra.mxu0 %v2950
        %v2952 = vpop.f32.mrf.mxu0
        %v2953 = vadd.f32 0.0, %v2952
        %2954 = vdwg.mxu0
        %2955 = vmatpush.msra.mxu0 0.0
        %2956 = vmatpush.msra.mxu0 0.0
        %2957 = vmatpush.msra.mxu0 0.0
        %2958 = vmatpush.msra.mxu0 0.0
        %2959 = vmatpush.msra.mxu0 0.0
        %2960 = vmatpush.msra.mxu0 0.0
        %2961 = vmatpush.msra.mxu0 0.0
        %2962 = vmatpush.msra.mxu0 0.0
        %2963 = vmatpush.msra.mxu0 0.0
        %2964 = vmatpush.msra.mxu0 0.0
        %2965 = vmatpush.msra.mxu0 0.0
        %2966 = vmatpush.msra.mxu0 0.0
        %2967 = vmatpush.msra.mxu0 0.0
        %2968 = vmatpush.msra.mxu0 0.0
        %v2969 = vand.u32 %v2470, 4294901760
        %v2970 = vsub.f32 %v2470, %v2969
        %v2971 = vand.u32 %v2970, 4294901760
        %v2972 = vsub.f32 %v2970, %v2971
        %v2973 = vand.u32 %v2972, 4294901760
        %2974 = vmatpush.msra.mxu0 %v2973
        %v2975 = vand.u32 %v2468, 4294901760
        %v2976 = vsub.f32 %v2468, %v2975
        %v2977 = vand.u32 %v2976, 4294901760
        %v2978 = vsub.f32 %v2976, %v2977
        %v2979 = vand.u32 %v2978, 4294901760
        %2980 = vmatpush.msra.mxu0 %v2979
        %v2981 = vand.u32 %v2473, 4294901760
        %2982 = vmatmul.f32.gmra.mxu0 %v2981
        %v2983 = vpop.f32.mrf.mxu0
        %v2984 = vadd.f32 %v2897, %v2983
        %v2985 = vand.u32 %v2476, 4294901760
        %2986 = vmatmul.f32.gmra.mxu0 %v2985
        %v2987 = vpop.f32.mrf.mxu0
        %v2988 = vadd.f32 %v2905, %v2987
        %v2989 = vand.u32 %v2479, 4294901760
        %2990 = vmatmul.f32.gmra.mxu0 %v2989
        %v2991 = vpop.f32.mrf.mxu0
        %v2992 = vadd.f32 %v2913, %v2991
        %v2993 = vand.u32 %v2482, 4294901760
        %2994 = vmatmul.f32.gmra.mxu0 %v2993
        %v2995 = vpop.f32.mrf.mxu0
        %v2996 = vadd.f32 %v2921, %v2995
        %v2997 = vand.u32 %v2485, 4294901760
        %2998 = vmatmul.f32.gmra.mxu0 %v2997
        %v2999 = vpop.f32.mrf.mxu0
        %v3000 = vadd.f32 %v2929, %v2999
        %v3001 = vand.u32 %v2488, 4294901760
        %3002 = vmatmul.f32.gmra.mxu0 %v3001
        %v3003 = vpop.f32.mrf.mxu0
        %v3004 = vadd.f32 %v2937, %v3003
        %v3005 = vand.u32 %v2491, 4294901760
        %3006 = vmatmul.f32.gmra.mxu0 %v3005
        %v3007 = vpop.f32.mrf.mxu0
        %v3008 = vadd.f32 %v2945, %v3007
        %v3009 = vand.u32 %v2494, 4294901760
        %3010 = vmatmul.f32.gmra.mxu0 %v3009
        %v3011 = vpop.f32.mrf.mxu0
        %v3012 = vadd.f32 %v2953, %v3011
        %3013 = vdwg.mxu0
        %3014 = vmatpush.msra.mxu0 0.0
        %3015 = vmatpush.msra.mxu0 0.0
        %3016 = vmatpush.msra.mxu0 0.0
        %3017 = vmatpush.msra.mxu0 0.0
        %3018 = vmatpush.msra.mxu0 0.0
        %3019 = vmatpush.msra.mxu0 0.0
        %3020 = vmatpush.msra.mxu0 0.0
        %3021 = vmatpush.msra.mxu0 0.0
        %3022 = vmatpush.msra.mxu0 0.0
        %3023 = vmatpush.msra.mxu0 0.0
        %3024 = vmatpush.msra.mxu0 0.0
        %3025 = vmatpush.msra.mxu0 0.0
        %3026 = vmatpush.msra.mxu0 0.0
        %3027 = vmatpush.msra.mxu0 0.0
        %v3028 = vand.u32 %v2470, 4294901760
        %v3029 = vsub.f32 %v2470, %v3028
        %3030 = vmatpush.msra.mxu0 %v3029
        %v3031 = vand.u32 %v2468, 4294901760
        %v3032 = vsub.f32 %v2468, %v3031
        %3033 = vmatpush.msra.mxu0 %v3032
        %v3034 = vand.u32 %v2473, 4294901760
        %v3035 = vsub.f32 %v2473, %v3034
        %3036 = vmatmul.f32.gmra.mxu0 %v3035
        %v3037 = vpop.f32.mrf.mxu0
        %v3038 = vadd.f32 %v2984, %v3037
        %v3039 = vand.u32 %v2476, 4294901760
        %v3040 = vsub.f32 %v2476, %v3039
        %3041 = vmatmul.f32.gmra.mxu0 %v3040
        %v3042 = vpop.f32.mrf.mxu0
        %v3043 = vadd.f32 %v2988, %v3042
        %v3044 = vand.u32 %v2479, 4294901760
        %v3045 = vsub.f32 %v2479, %v3044
        %3046 = vmatmul.f32.gmra.mxu0 %v3045
        %v3047 = vpop.f32.mrf.mxu0
        %v3048 = vadd.f32 %v2992, %v3047
        %v3049 = vand.u32 %v2482, 4294901760
        %v3050 = vsub.f32 %v2482, %v3049
        %3051 = vmatmul.f32.gmra.mxu0 %v3050
        %v3052 = vpop.f32.mrf.mxu0
        %v3053 = vadd.f32 %v2996, %v3052
        %v3054 = vand.u32 %v2485, 4294901760
        %v3055 = vsub.f32 %v2485, %v3054
        %3056 = vmatmul.f32.gmra.mxu0 %v3055
        %v3057 = vpop.f32.mrf.mxu0
        %v3058 = vadd.f32 %v3000, %v3057
        %v3059 = vand.u32 %v2488, 4294901760
        %v3060 = vsub.f32 %v2488, %v3059
        %3061 = vmatmul.f32.gmra.mxu0 %v3060
        %v3062 = vpop.f32.mrf.mxu0
        %v3063 = vadd.f32 %v3004, %v3062
        %v3064 = vand.u32 %v2491, 4294901760
        %v3065 = vsub.f32 %v2491, %v3064
        %3066 = vmatmul.f32.gmra.mxu0 %v3065
        %v3067 = vpop.f32.mrf.mxu0
        %v3068 = vadd.f32 %v3008, %v3067
        %v3069 = vand.u32 %v2494, 4294901760
        %v3070 = vsub.f32 %v2494, %v3069
        %3071 = vmatmul.f32.gmra.mxu0 %v3070
        %v3072 = vpop.f32.mrf.mxu0
        %v3073 = vadd.f32 %v3012, %v3072
        %3074 = vdwg.mxu0
        %3075 = vmatpush.msra.mxu0 0.0
        %3076 = vmatpush.msra.mxu0 0.0
        %3077 = vmatpush.msra.mxu0 0.0
        %3078 = vmatpush.msra.mxu0 0.0
        %3079 = vmatpush.msra.mxu0 0.0
        %3080 = vmatpush.msra.mxu0 0.0
        %3081 = vmatpush.msra.mxu0 0.0
        %3082 = vmatpush.msra.mxu0 0.0
        %3083 = vmatpush.msra.mxu0 0.0
        %3084 = vmatpush.msra.mxu0 0.0
        %3085 = vmatpush.msra.mxu0 0.0
        %3086 = vmatpush.msra.mxu0 0.0
        %3087 = vmatpush.msra.mxu0 0.0
        %3088 = vmatpush.msra.mxu0 0.0
        %v3089 = vand.u32 %v2470, 4294901760
        %3090 = vmatpush.msra.mxu0 %v3089
        %v3091 = vand.u32 %v2468, 4294901760
        %3092 = vmatpush.msra.mxu0 %v3091
        %v3093 = vand.u32 %v2473, 4294901760
        %v3094 = vsub.f32 %v2473, %v3093
        %v3095 = vand.u32 %v3094, 4294901760
        %3096 = vmatmul.f32.gmra.mxu0 %v3095
        %v3097 = vpop.f32.mrf.mxu0
        %v3098 = vadd.f32 %v3038, %v3097
        %v3099 = vand.u32 %v2476, 4294901760
        %v3100 = vsub.f32 %v2476, %v3099
        %v3101 = vand.u32 %v3100, 4294901760
        %3102 = vmatmul.f32.gmra.mxu0 %v3101
        %v3103 = vpop.f32.mrf.mxu0
        %v3104 = vadd.f32 %v3043, %v3103
        %v3105 = vand.u32 %v2479, 4294901760
        %v3106 = vsub.f32 %v2479, %v3105
        %v3107 = vand.u32 %v3106, 4294901760
        %3108 = vmatmul.f32.gmra.mxu0 %v3107
        %v3109 = vpop.f32.mrf.mxu0
        %v3110 = vadd.f32 %v3048, %v3109
        %v3111 = vand.u32 %v2482, 4294901760
        %v3112 = vsub.f32 %v2482, %v3111
        %v3113 = vand.u32 %v3112, 4294901760
        %3114 = vmatmul.f32.gmra.mxu0 %v3113
        %v3115 = vpop.f32.mrf.mxu0
        %v3116 = vadd.f32 %v3053, %v3115
        %v3117 = vand.u32 %v2485, 4294901760
        %v3118 = vsub.f32 %v2485, %v3117
        %v3119 = vand.u32 %v3118, 4294901760
        %3120 = vmatmul.f32.gmra.mxu0 %v3119
        %v3121 = vpop.f32.mrf.mxu0
        %v3122 = vadd.f32 %v3058, %v3121
        %v3123 = vand.u32 %v2488, 4294901760
        %v3124 = vsub.f32 %v2488, %v3123
        %v3125 = vand.u32 %v3124, 4294901760
        %3126 = vmatmul.f32.gmra.mxu0 %v3125
        %v3127 = vpop.f32.mrf.mxu0
        %v3128 = vadd.f32 %v3063, %v3127
        %v3129 = vand.u32 %v2491, 4294901760
        %v3130 = vsub.f32 %v2491, %v3129
        %v3131 = vand.u32 %v3130, 4294901760
        %3132 = vmatmul.f32.gmra.mxu0 %v3131
        %v3133 = vpop.f32.mrf.mxu0
        %v3134 = vadd.f32 %v3068, %v3133
        %v3135 = vand.u32 %v2494, 4294901760
        %v3136 = vsub.f32 %v2494, %v3135
        %v3137 = vand.u32 %v3136, 4294901760
        %3138 = vmatmul.f32.gmra.mxu0 %v3137
        %v3139 = vpop.f32.mrf.mxu0
        %v3140 = vadd.f32 %v3073, %v3139
        %3141 = vdwg.mxu0
        %3142 = vmatpush.msra.mxu0 0.0
        %3143 = vmatpush.msra.mxu0 0.0
        %3144 = vmatpush.msra.mxu0 0.0
        %3145 = vmatpush.msra.mxu0 0.0
        %3146 = vmatpush.msra.mxu0 0.0
        %3147 = vmatpush.msra.mxu0 0.0
        %3148 = vmatpush.msra.mxu0 0.0
        %3149 = vmatpush.msra.mxu0 0.0
        %3150 = vmatpush.msra.mxu0 0.0
        %3151 = vmatpush.msra.mxu0 0.0
        %3152 = vmatpush.msra.mxu0 0.0
        %3153 = vmatpush.msra.mxu0 0.0
        %3154 = vmatpush.msra.mxu0 0.0
        %3155 = vmatpush.msra.mxu0 0.0
        %v3156 = vand.u32 %v2470, 4294901760
        %v3157 = vsub.f32 %v2470, %v3156
        %v3158 = vand.u32 %v3157, 4294901760
        %3159 = vmatpush.msra.mxu0 %v3158
        %v3160 = vand.u32 %v2468, 4294901760
        %v3161 = vsub.f32 %v2468, %v3160
        %v3162 = vand.u32 %v3161, 4294901760
        %3163 = vmatpush.msra.mxu0 %v3162
        %v3164 = vand.u32 %v2473, 4294901760
        %3165 = vmatmul.f32.gmra.mxu0 %v3164
        %v3166 = vpop.f32.mrf.mxu0
        %v3167 = vadd.f32 %v3098, %v3166
        %v3168 = vand.u32 %v2476, 4294901760
        %3169 = vmatmul.f32.gmra.mxu0 %v3168
        %v3170 = vpop.f32.mrf.mxu0
        %v3171 = vadd.f32 %v3104, %v3170
        %v3172 = vand.u32 %v2479, 4294901760
        %3173 = vmatmul.f32.gmra.mxu0 %v3172
        %v3174 = vpop.f32.mrf.mxu0
        %v3175 = vadd.f32 %v3110, %v3174
        %v3176 = vand.u32 %v2482, 4294901760
        %3177 = vmatmul.f32.gmra.mxu0 %v3176
        %v3178 = vpop.f32.mrf.mxu0
        %v3179 = vadd.f32 %v3116, %v3178
        %v3180 = vand.u32 %v2485, 4294901760
        %3181 = vmatmul.f32.gmra.mxu0 %v3180
        %v3182 = vpop.f32.mrf.mxu0
        %v3183 = vadd.f32 %v3122, %v3182
        %v3184 = vand.u32 %v2488, 4294901760
        %3185 = vmatmul.f32.gmra.mxu0 %v3184
        %v3186 = vpop.f32.mrf.mxu0
        %v3187 = vadd.f32 %v3128, %v3186
        %v3188 = vand.u32 %v2491, 4294901760
        %3189 = vmatmul.f32.gmra.mxu0 %v3188
        %v3190 = vpop.f32.mrf.mxu0
        %v3191 = vadd.f32 %v3134, %v3190
        %v3192 = vand.u32 %v2494, 4294901760
        %3193 = vmatmul.f32.gmra.mxu0 %v3192
        %v3194 = vpop.f32.mrf.mxu0
        %v3195 = vadd.f32 %v3140, %v3194
        %3196 = vdwg.mxu0
        %3197 = vmatpush.msra.mxu0 0.0
        %3198 = vmatpush.msra.mxu0 0.0
        %3199 = vmatpush.msra.mxu0 0.0
        %3200 = vmatpush.msra.mxu0 0.0
        %3201 = vmatpush.msra.mxu0 0.0
        %3202 = vmatpush.msra.mxu0 0.0
        %3203 = vmatpush.msra.mxu0 0.0
        %3204 = vmatpush.msra.mxu0 0.0
        %3205 = vmatpush.msra.mxu0 0.0
        %3206 = vmatpush.msra.mxu0 0.0
        %3207 = vmatpush.msra.mxu0 0.0
        %3208 = vmatpush.msra.mxu0 0.0
        %3209 = vmatpush.msra.mxu0 0.0
        %3210 = vmatpush.msra.mxu0 0.0
        %v3211 = vand.u32 %v2470, 4294901760
        %3212 = vmatpush.msra.mxu0 %v3211
        %v3213 = vand.u32 %v2468, 4294901760
        %3214 = vmatpush.msra.mxu0 %v3213
        %v3215 = vand.u32 %v2473, 4294901760
        %3216 = vmatmul.f32.gmra.mxu0 %v3215
        %v3217 = vpop.f32.mrf.mxu0
        %v3218 = vadd.f32 %v3167, %v3217
        %v3219 = vand.u32 %v2476, 4294901760
        %3220 = vmatmul.f32.gmra.mxu0 %v3219
        %v3221 = vpop.f32.mrf.mxu0
        %v3222 = vadd.f32 %v3171, %v3221
        %v3223 = vand.u32 %v2479, 4294901760
        %3224 = vmatmul.f32.gmra.mxu0 %v3223
        %v3225 = vpop.f32.mrf.mxu0
        %v3226 = vadd.f32 %v3175, %v3225
        %v3227 = vand.u32 %v2482, 4294901760
        %3228 = vmatmul.f32.gmra.mxu0 %v3227
        %v3229 = vpop.f32.mrf.mxu0
        %v3230 = vadd.f32 %v3179, %v3229
        %v3231 = vand.u32 %v2485, 4294901760
        %3232 = vmatmul.f32.gmra.mxu0 %v3231
        %v3233 = vpop.f32.mrf.mxu0
        %v3234 = vadd.f32 %v3183, %v3233
        %v3235 = vand.u32 %v2488, 4294901760
        %3236 = vmatmul.f32.gmra.mxu0 %v3235
        %v3237 = vpop.f32.mrf.mxu0
        %v3238 = vadd.f32 %v3187, %v3237
        %v3239 = vand.u32 %v2491, 4294901760
        %3240 = vmatmul.f32.gmra.mxu0 %v3239
        %v3241 = vpop.f32.mrf.mxu0
        %v3242 = vadd.f32 %v3191, %v3241
        %v3243 = vand.u32 %v2494, 4294901760
        %3244 = vmatmul.f32.gmra.mxu0 %v3243
        %v3245 = vpop.f32.mrf.mxu0
        %v3246 = vadd.f32 %v3195, %v3245
        %3247 = vdwg.mxu0
        %v3248 = vld [vmem:[%s3] sm:$0xff]
        %v3249 = vld [vmem:[%s3 + $0x8] sm:$0xff]
        %v3250 = vld [vmem:[%s3 + $0x10] sm:$0xff]
        %v3251 = vld [vmem:[%s3 + $0x18] sm:$0xff]
        %v3253 = vsel %vm2471, %v2451, 0
        %v3256 = vsel %vm2471, %v2452, 0
        %v3259 = vsel %vm2471, %v2453, 0
        %v3262 = vsel %vm2471, %v2454, 0
        %v3265 = vsel %vm2471, %v2455, 0
        %v3268 = vsel %vm2471, %v2456, 0
        %v3271 = vsel %vm2471, %v2457, 0
        %v3274 = vsel %vm2471, %v2458, 0
        %3276 = vmatpush.msra.mxu0 0.0
        %3277 = vmatpush.msra.mxu0 0.0
        %3278 = vmatpush.msra.mxu0 0.0
        %3279 = vmatpush.msra.mxu0 0.0
        %3280 = vmatpush.msra.mxu0 0.0
        %3281 = vmatpush.msra.mxu0 0.0
        %3282 = vmatpush.msra.mxu0 0.0
        %3283 = vmatpush.msra.mxu0 0.0
        %3284 = vmatpush.msra.mxu0 0.0
        %3285 = vmatpush.msra.mxu0 0.0
        %3286 = vmatpush.msra.mxu0 0.0
        %3287 = vmatpush.msra.mxu0 0.0
        %3288 = vmatpush.msra.mxu0 0.0
        %3289 = vmatpush.msra.mxu0 0.0
        %v3290 = vand.u32 %v3250, 4294901760
        %3291 = vmatpush.msra.mxu0 %v3290
        %v3292 = vand.u32 %v3248, 4294901760
        %3293 = vmatpush.msra.mxu0 %v3292
        %v3294 = vand.u32 %v3253, 4294901760
        %v3295 = vsub.f32 %v3253, %v3294
        %v3296 = vand.u32 %v3295, 4294901760
        %v3297 = vsub.f32 %v3295, %v3296
        %v3298 = vand.u32 %v3297, 4294901760
        %3299 = vmatmul.f32.gmra.mxu0 %v3298
        %v3300 = vpop.f32.mrf.mxu0
        %v3301 = vadd.f32 0.0, %v3300
        %v3302 = vand.u32 %v3256, 4294901760
        %v3303 = vsub.f32 %v3256, %v3302
        %v3304 = vand.u32 %v3303, 4294901760
        %v3305 = vsub.f32 %v3303, %v3304
        %v3306 = vand.u32 %v3305, 4294901760
        %3307 = vmatmul.f32.gmra.mxu0 %v3306
        %v3308 = vpop.f32.mrf.mxu0
        %v3309 = vadd.f32 0.0, %v3308
        %v3310 = vand.u32 %v3259, 4294901760
        %v3311 = vsub.f32 %v3259, %v3310
        %v3312 = vand.u32 %v3311, 4294901760
        %v3313 = vsub.f32 %v3311, %v3312
        %v3314 = vand.u32 %v3313, 4294901760
        %3315 = vmatmul.f32.gmra.mxu0 %v3314
        %v3316 = vpop.f32.mrf.mxu0
        %v3317 = vadd.f32 0.0, %v3316
        %v3318 = vand.u32 %v3262, 4294901760
        %v3319 = vsub.f32 %v3262, %v3318
        %v3320 = vand.u32 %v3319, 4294901760
        %v3321 = vsub.f32 %v3319, %v3320
        %v3322 = vand.u32 %v3321, 4294901760
        %3323 = vmatmul.f32.gmra.mxu0 %v3322
        %v3324 = vpop.f32.mrf.mxu0
        %v3325 = vadd.f32 0.0, %v3324
        %v3326 = vand.u32 %v3265, 4294901760
        %v3327 = vsub.f32 %v3265, %v3326
        %v3328 = vand.u32 %v3327, 4294901760
        %v3329 = vsub.f32 %v3327, %v3328
        %v3330 = vand.u32 %v3329, 4294901760
        %3331 = vmatmul.f32.gmra.mxu0 %v3330
        %v3332 = vpop.f32.mrf.mxu0
        %v3333 = vadd.f32 0.0, %v3332
        %v3334 = vand.u32 %v3268, 4294901760
        %v3335 = vsub.f32 %v3268, %v3334
        %v3336 = vand.u32 %v3335, 4294901760
        %v3337 = vsub.f32 %v3335, %v3336
        %v3338 = vand.u32 %v3337, 4294901760
        %3339 = vmatmul.f32.gmra.mxu0 %v3338
        %v3340 = vpop.f32.mrf.mxu0
        %v3341 = vadd.f32 0.0, %v3340
        %v3342 = vand.u32 %v3271, 4294901760
        %v3343 = vsub.f32 %v3271, %v3342
        %v3344 = vand.u32 %v3343, 4294901760
        %v3345 = vsub.f32 %v3343, %v3344
        %v3346 = vand.u32 %v3345, 4294901760
        %3347 = vmatmul.f32.gmra.mxu0 %v3346
        %v3348 = vpop.f32.mrf.mxu0
        %v3349 = vadd.f32 0.0, %v3348
        %v3350 = vand.u32 %v3274, 4294901760
        %v3351 = vsub.f32 %v3274, %v3350
        %v3352 = vand.u32 %v3351, 4294901760
        %v3353 = vsub.f32 %v3351, %v3352
        %v3354 = vand.u32 %v3353, 4294901760
        %3355 = vmatmul.f32.gmra.mxu0 %v3354
        %v3356 = vpop.f32.mrf.mxu0
        %v3357 = vadd.f32 0.0, %v3356
        %3358 = vdwg.mxu0
        %3359 = vmatpush.msra.mxu0 0.0
        %3360 = vmatpush.msra.mxu0 0.0
        %3361 = vmatpush.msra.mxu0 0.0
        %3362 = vmatpush.msra.mxu0 0.0
        %3363 = vmatpush.msra.mxu0 0.0
        %3364 = vmatpush.msra.mxu0 0.0
        %3365 = vmatpush.msra.mxu0 0.0
        %3366 = vmatpush.msra.mxu0 0.0
        %3367 = vmatpush.msra.mxu0 0.0
        %3368 = vmatpush.msra.mxu0 0.0
        %3369 = vmatpush.msra.mxu0 0.0
        %3370 = vmatpush.msra.mxu0 0.0
        %3371 = vmatpush.msra.mxu0 0.0
        %3372 = vmatpush.msra.mxu0 0.0
        %v3373 = vand.u32 %v3250, 4294901760
        %v3374 = vsub.f32 %v3250, %v3373
        %v3375 = vand.u32 %v3374, 4294901760
        %v3376 = vsub.f32 %v3374, %v3375
        %v3377 = vand.u32 %v3376, 4294901760
        %3378 = vmatpush.msra.mxu0 %v3377
        %v3379 = vand.u32 %v3248, 4294901760
        %v3380 = vsub.f32 %v3248, %v3379
        %v3381 = vand.u32 %v3380, 4294901760
        %v3382 = vsub.f32 %v3380, %v3381
        %v3383 = vand.u32 %v3382, 4294901760
        %3384 = vmatpush.msra.mxu0 %v3383
        %v3385 = vand.u32 %v3253, 4294901760
        %3386 = vmatmul.f32.gmra.mxu0 %v3385
        %v3387 = vpop.f32.mrf.mxu0
        %v3388 = vadd.f32 %v3301, %v3387
        %v3389 = vand.u32 %v3256, 4294901760
        %3390 = vmatmul.f32.gmra.mxu0 %v3389
        %v3391 = vpop.f32.mrf.mxu0
        %v3392 = vadd.f32 %v3309, %v3391
        %v3393 = vand.u32 %v3259, 4294901760
        %3394 = vmatmul.f32.gmra.mxu0 %v3393
        %v3395 = vpop.f32.mrf.mxu0
        %v3396 = vadd.f32 %v3317, %v3395
        %v3397 = vand.u32 %v3262, 4294901760
        %3398 = vmatmul.f32.gmra.mxu0 %v3397
        %v3399 = vpop.f32.mrf.mxu0
        %v3400 = vadd.f32 %v3325, %v3399
        %v3401 = vand.u32 %v3265, 4294901760
        %3402 = vmatmul.f32.gmra.mxu0 %v3401
        %v3403 = vpop.f32.mrf.mxu0
        %v3404 = vadd.f32 %v3333, %v3403
        %v3405 = vand.u32 %v3268, 4294901760
        %3406 = vmatmul.f32.gmra.mxu0 %v3405
        %v3407 = vpop.f32.mrf.mxu0
        %v3408 = vadd.f32 %v3341, %v3407
        %v3409 = vand.u32 %v3271, 4294901760
        %3410 = vmatmul.f32.gmra.mxu0 %v3409
        %v3411 = vpop.f32.mrf.mxu0
        %v3412 = vadd.f32 %v3349, %v3411
        %v3413 = vand.u32 %v3274, 4294901760
        %3414 = vmatmul.f32.gmra.mxu0 %v3413
        %v3415 = vpop.f32.mrf.mxu0
        %v3416 = vadd.f32 %v3357, %v3415
        %3417 = vdwg.mxu0
        %3418 = vmatpush.msra.mxu0 0.0
        %3419 = vmatpush.msra.mxu0 0.0
        %3420 = vmatpush.msra.mxu0 0.0
        %3421 = vmatpush.msra.mxu0 0.0
        %3422 = vmatpush.msra.mxu0 0.0
        %3423 = vmatpush.msra.mxu0 0.0
        %3424 = vmatpush.msra.mxu0 0.0
        %3425 = vmatpush.msra.mxu0 0.0
        %3426 = vmatpush.msra.mxu0 0.0
        %3427 = vmatpush.msra.mxu0 0.0
        %3428 = vmatpush.msra.mxu0 0.0
        %3429 = vmatpush.msra.mxu0 0.0
        %3430 = vmatpush.msra.mxu0 0.0
        %3431 = vmatpush.msra.mxu0 0.0
        %v3432 = vand.u32 %v3250, 4294901760
        %v3433 = vsub.f32 %v3250, %v3432
        %3434 = vmatpush.msra.mxu0 %v3433
        %v3435 = vand.u32 %v3248, 4294901760
        %v3436 = vsub.f32 %v3248, %v3435
        %3437 = vmatpush.msra.mxu0 %v3436
        %v3438 = vand.u32 %v3253, 4294901760
        %v3439 = vsub.f32 %v3253, %v3438
        %3440 = vmatmul.f32.gmra.mxu0 %v3439
        %v3441 = vpop.f32.mrf.mxu0
        %v3442 = vadd.f32 %v3388, %v3441
        %v3443 = vand.u32 %v3256, 4294901760
        %v3444 = vsub.f32 %v3256, %v3443
        %3445 = vmatmul.f32.gmra.mxu0 %v3444
        %v3446 = vpop.f32.mrf.mxu0
        %v3447 = vadd.f32 %v3392, %v3446
        %v3448 = vand.u32 %v3259, 4294901760
        %v3449 = vsub.f32 %v3259, %v3448
        %3450 = vmatmul.f32.gmra.mxu0 %v3449
        %v3451 = vpop.f32.mrf.mxu0
        %v3452 = vadd.f32 %v3396, %v3451
        %v3453 = vand.u32 %v3262, 4294901760
        %v3454 = vsub.f32 %v3262, %v3453
        %3455 = vmatmul.f32.gmra.mxu0 %v3454
        %v3456 = vpop.f32.mrf.mxu0
        %v3457 = vadd.f32 %v3400, %v3456
        %v3458 = vand.u32 %v3265, 4294901760
        %v3459 = vsub.f32 %v3265, %v3458
        %3460 = vmatmul.f32.gmra.mxu0 %v3459
        %v3461 = vpop.f32.mrf.mxu0
        %v3462 = vadd.f32 %v3404, %v3461
        %v3463 = vand.u32 %v3268, 4294901760
        %v3464 = vsub.f32 %v3268, %v3463
        %3465 = vmatmul.f32.gmra.mxu0 %v3464
        %v3466 = vpop.f32.mrf.mxu0
        %v3467 = vadd.f32 %v3408, %v3466
        %v3468 = vand.u32 %v3271, 4294901760
        %v3469 = vsub.f32 %v3271, %v3468
        %3470 = vmatmul.f32.gmra.mxu0 %v3469
        %v3471 = vpop.f32.mrf.mxu0
        %v3472 = vadd.f32 %v3412, %v3471
        %v3473 = vand.u32 %v3274, 4294901760
        %v3474 = vsub.f32 %v3274, %v3473
        %3475 = vmatmul.f32.gmra.mxu0 %v3474
        %v3476 = vpop.f32.mrf.mxu0
        %v3477 = vadd.f32 %v3416, %v3476
        %3478 = vdwg.mxu0
        %3479 = vmatpush.msra.mxu0 0.0
        %3480 = vmatpush.msra.mxu0 0.0
        %3481 = vmatpush.msra.mxu0 0.0
        %3482 = vmatpush.msra.mxu0 0.0
        %3483 = vmatpush.msra.mxu0 0.0
        %3484 = vmatpush.msra.mxu0 0.0
        %3485 = vmatpush.msra.mxu0 0.0
        %3486 = vmatpush.msra.mxu0 0.0
        %3487 = vmatpush.msra.mxu0 0.0
        %3488 = vmatpush.msra.mxu0 0.0
        %3489 = vmatpush.msra.mxu0 0.0
        %3490 = vmatpush.msra.mxu0 0.0
        %3491 = vmatpush.msra.mxu0 0.0
        %3492 = vmatpush.msra.mxu0 0.0
        %v3493 = vand.u32 %v3250, 4294901760
        %3494 = vmatpush.msra.mxu0 %v3493
        %v3495 = vand.u32 %v3248, 4294901760
        %3496 = vmatpush.msra.mxu0 %v3495
        %v3497 = vand.u32 %v3253, 4294901760
        %v3498 = vsub.f32 %v3253, %v3497
        %v3499 = vand.u32 %v3498, 4294901760
        %3500 = vmatmul.f32.gmra.mxu0 %v3499
        %v3501 = vpop.f32.mrf.mxu0
        %v3502 = vadd.f32 %v3442, %v3501
        %v3503 = vand.u32 %v3256, 4294901760
        %v3504 = vsub.f32 %v3256, %v3503
        %v3505 = vand.u32 %v3504, 4294901760
        %3506 = vmatmul.f32.gmra.mxu0 %v3505
        %v3507 = vpop.f32.mrf.mxu0
        %v3508 = vadd.f32 %v3447, %v3507
        %v3509 = vand.u32 %v3259, 4294901760
        %v3510 = vsub.f32 %v3259, %v3509
        %v3511 = vand.u32 %v3510, 4294901760
        %3512 = vmatmul.f32.gmra.mxu0 %v3511
        %v3513 = vpop.f32.mrf.mxu0
        %v3514 = vadd.f32 %v3452, %v3513
        %v3515 = vand.u32 %v3262, 4294901760
        %v3516 = vsub.f32 %v3262, %v3515
        %v3517 = vand.u32 %v3516, 4294901760
        %3518 = vmatmul.f32.gmra.mxu0 %v3517
        %v3519 = vpop.f32.mrf.mxu0
        %v3520 = vadd.f32 %v3457, %v3519
        %v3521 = vand.u32 %v3265, 4294901760
        %v3522 = vsub.f32 %v3265, %v3521
        %v3523 = vand.u32 %v3522, 4294901760
        %3524 = vmatmul.f32.gmra.mxu0 %v3523
        %v3525 = vpop.f32.mrf.mxu0
        %v3526 = vadd.f32 %v3462, %v3525
        %v3527 = vand.u32 %v3268, 4294901760
        %v3528 = vsub.f32 %v3268, %v3527
        %v3529 = vand.u32 %v3528, 4294901760
        %3530 = vmatmul.f32.gmra.mxu0 %v3529
        %v3531 = vpop.f32.mrf.mxu0
        %v3532 = vadd.f32 %v3467, %v3531
        %v3533 = vand.u32 %v3271, 4294901760
        %v3534 = vsub.f32 %v3271, %v3533
        %v3535 = vand.u32 %v3534, 4294901760
        %3536 = vmatmul.f32.gmra.mxu0 %v3535
        %v3537 = vpop.f32.mrf.mxu0
        %v3538 = vadd.f32 %v3472, %v3537
        %v3539 = vand.u32 %v3274, 4294901760
        %v3540 = vsub.f32 %v3274, %v3539
        %v3541 = vand.u32 %v3540, 4294901760
        %3542 = vmatmul.f32.gmra.mxu0 %v3541
        %v3543 = vpop.f32.mrf.mxu0
        %v3544 = vadd.f32 %v3477, %v3543
        %3545 = vdwg.mxu0
        %3546 = vmatpush.msra.mxu0 0.0
        %3547 = vmatpush.msra.mxu0 0.0
        %3548 = vmatpush.msra.mxu0 0.0
        %3549 = vmatpush.msra.mxu0 0.0
        %3550 = vmatpush.msra.mxu0 0.0
        %3551 = vmatpush.msra.mxu0 0.0
        %3552 = vmatpush.msra.mxu0 0.0
        %3553 = vmatpush.msra.mxu0 0.0
        %3554 = vmatpush.msra.mxu0 0.0
        %3555 = vmatpush.msra.mxu0 0.0
        %3556 = vmatpush.msra.mxu0 0.0
        %3557 = vmatpush.msra.mxu0 0.0
        %3558 = vmatpush.msra.mxu0 0.0
        %3559 = vmatpush.msra.mxu0 0.0
        %v3560 = vand.u32 %v3250, 4294901760
        %v3561 = vsub.f32 %v3250, %v3560
        %v3562 = vand.u32 %v3561, 4294901760
        %3563 = vmatpush.msra.mxu0 %v3562
        %v3564 = vand.u32 %v3248, 4294901760
        %v3565 = vsub.f32 %v3248, %v3564
        %v3566 = vand.u32 %v3565, 4294901760
        %3567 = vmatpush.msra.mxu0 %v3566
        %v3568 = vand.u32 %v3253, 4294901760
        %3569 = vmatmul.f32.gmra.mxu0 %v3568
        %v3570 = vpop.f32.mrf.mxu0
        %v3571 = vadd.f32 %v3502, %v3570
        %v3572 = vand.u32 %v3256, 4294901760
        %3573 = vmatmul.f32.gmra.mxu0 %v3572
        %v3574 = vpop.f32.mrf.mxu0
        %v3575 = vadd.f32 %v3508, %v3574
        %v3576 = vand.u32 %v3259, 4294901760
        %3577 = vmatmul.f32.gmra.mxu0 %v3576
        %v3578 = vpop.f32.mrf.mxu0
        %v3579 = vadd.f32 %v3514, %v3578
        %v3580 = vand.u32 %v3262, 4294901760
        %3581 = vmatmul.f32.gmra.mxu0 %v3580
        %v3582 = vpop.f32.mrf.mxu0
        %v3583 = vadd.f32 %v3520, %v3582
        %v3584 = vand.u32 %v3265, 4294901760
        %3585 = vmatmul.f32.gmra.mxu0 %v3584
        %v3586 = vpop.f32.mrf.mxu0
        %v3587 = vadd.f32 %v3526, %v3586
        %v3588 = vand.u32 %v3268, 4294901760
        %3589 = vmatmul.f32.gmra.mxu0 %v3588
        %v3590 = vpop.f32.mrf.mxu0
        %v3591 = vadd.f32 %v3532, %v3590
        %v3592 = vand.u32 %v3271, 4294901760
        %3593 = vmatmul.f32.gmra.mxu0 %v3592
        %v3594 = vpop.f32.mrf.mxu0
        %v3595 = vadd.f32 %v3538, %v3594
        %v3596 = vand.u32 %v3274, 4294901760
        %3597 = vmatmul.f32.gmra.mxu0 %v3596
        %v3598 = vpop.f32.mrf.mxu0
        %v3599 = vadd.f32 %v3544, %v3598
        %3600 = vdwg.mxu0
        %3601 = vmatpush.msra.mxu0 0.0
        %3602 = vmatpush.msra.mxu0 0.0
        %3603 = vmatpush.msra.mxu0 0.0
        %3604 = vmatpush.msra.mxu0 0.0
        %3605 = vmatpush.msra.mxu0 0.0
        %3606 = vmatpush.msra.mxu0 0.0
        %3607 = vmatpush.msra.mxu0 0.0
        %3608 = vmatpush.msra.mxu0 0.0
        %3609 = vmatpush.msra.mxu0 0.0
        %3610 = vmatpush.msra.mxu0 0.0
        %3611 = vmatpush.msra.mxu0 0.0
        %3612 = vmatpush.msra.mxu0 0.0
        %3613 = vmatpush.msra.mxu0 0.0
        %3614 = vmatpush.msra.mxu0 0.0
        %v3615 = vand.u32 %v3250, 4294901760
        %3616 = vmatpush.msra.mxu0 %v3615
        %v3617 = vand.u32 %v3248, 4294901760
        %3618 = vmatpush.msra.mxu0 %v3617
        %v3619 = vand.u32 %v3253, 4294901760
        %3620 = vmatmul.f32.gmra.mxu0 %v3619
        %v3621 = vpop.f32.mrf.mxu0
        %v3622 = vadd.f32 %v3571, %v3621
        %v3623 = vand.u32 %v3256, 4294901760
        %3624 = vmatmul.f32.gmra.mxu0 %v3623
        %v3625 = vpop.f32.mrf.mxu0
        %v3626 = vadd.f32 %v3575, %v3625
        %v3627 = vand.u32 %v3259, 4294901760
        %3628 = vmatmul.f32.gmra.mxu0 %v3627
        %v3629 = vpop.f32.mrf.mxu0
        %v3630 = vadd.f32 %v3579, %v3629
        %v3631 = vand.u32 %v3262, 4294901760
        %3632 = vmatmul.f32.gmra.mxu0 %v3631
        %v3633 = vpop.f32.mrf.mxu0
        %v3634 = vadd.f32 %v3583, %v3633
        %v3635 = vand.u32 %v3265, 4294901760
        %3636 = vmatmul.f32.gmra.mxu0 %v3635
        %v3637 = vpop.f32.mrf.mxu0
        %v3638 = vadd.f32 %v3587, %v3637
        %v3639 = vand.u32 %v3268, 4294901760
        %3640 = vmatmul.f32.gmra.mxu0 %v3639
        %v3641 = vpop.f32.mrf.mxu0
        %v3642 = vadd.f32 %v3591, %v3641
        %v3643 = vand.u32 %v3271, 4294901760
        %3644 = vmatmul.f32.gmra.mxu0 %v3643
        %v3645 = vpop.f32.mrf.mxu0
        %v3646 = vadd.f32 %v3595, %v3645
        %v3647 = vand.u32 %v3274, 4294901760
        %3648 = vmatmul.f32.gmra.mxu0 %v3647
        %v3649 = vpop.f32.mrf.mxu0
        %v3650 = vadd.f32 %v3599, %v3649
        %3651 = vdwg.mxu0
        %3652 = vmatpush.msra.mxu0 0.0
        %3653 = vmatpush.msra.mxu0 0.0
        %3654 = vmatpush.msra.mxu0 0.0
        %3655 = vmatpush.msra.mxu0 0.0
        %3656 = vmatpush.msra.mxu0 0.0
        %3657 = vmatpush.msra.mxu0 0.0
        %3658 = vmatpush.msra.mxu0 0.0
        %3659 = vmatpush.msra.mxu0 0.0
        %3660 = vmatpush.msra.mxu0 0.0
        %3661 = vmatpush.msra.mxu0 0.0
        %3662 = vmatpush.msra.mxu0 0.0
        %3663 = vmatpush.msra.mxu0 0.0
        %3664 = vmatpush.msra.mxu0 0.0
        %3665 = vmatpush.msra.mxu0 0.0
        %v3666 = vand.u32 %v3251, 4294901760
        %3667 = vmatpush.msra.mxu0 %v3666
        %v3668 = vand.u32 %v3249, 4294901760
        %3669 = vmatpush.msra.mxu0 %v3668
        %v3670 = vand.u32 %v3253, 4294901760
        %v3671 = vsub.f32 %v3253, %v3670
        %v3672 = vand.u32 %v3671, 4294901760
        %v3673 = vsub.f32 %v3671, %v3672
        %v3674 = vand.u32 %v3673, 4294901760
        %3675 = vmatmul.f32.gmra.mxu0 %v3674
        %v3676 = vpop.f32.mrf.mxu0
        %v3677 = vadd.f32 0.0, %v3676
        %v3678 = vand.u32 %v3256, 4294901760
        %v3679 = vsub.f32 %v3256, %v3678
        %v3680 = vand.u32 %v3679, 4294901760
        %v3681 = vsub.f32 %v3679, %v3680
        %v3682 = vand.u32 %v3681, 4294901760
        %3683 = vmatmul.f32.gmra.mxu0 %v3682
        %v3684 = vpop.f32.mrf.mxu0
        %v3685 = vadd.f32 0.0, %v3684
        %v3686 = vand.u32 %v3259, 4294901760
        %v3687 = vsub.f32 %v3259, %v3686
        %v3688 = vand.u32 %v3687, 4294901760
        %v3689 = vsub.f32 %v3687, %v3688
        %v3690 = vand.u32 %v3689, 4294901760
        %3691 = vmatmul.f32.gmra.mxu0 %v3690
        %v3692 = vpop.f32.mrf.mxu0
        %v3693 = vadd.f32 0.0, %v3692
        %v3694 = vand.u32 %v3262, 4294901760
        %v3695 = vsub.f32 %v3262, %v3694
        %v3696 = vand.u32 %v3695, 4294901760
        %v3697 = vsub.f32 %v3695, %v3696
        %v3698 = vand.u32 %v3697, 4294901760
        %3699 = vmatmul.f32.gmra.mxu0 %v3698
        %v3700 = vpop.f32.mrf.mxu0
        %v3701 = vadd.f32 0.0, %v3700
        %v3702 = vand.u32 %v3265, 4294901760
        %v3703 = vsub.f32 %v3265, %v3702
        %v3704 = vand.u32 %v3703, 4294901760
        %v3705 = vsub.f32 %v3703, %v3704
        %v3706 = vand.u32 %v3705, 4294901760
        %3707 = vmatmul.f32.gmra.mxu0 %v3706
        %v3708 = vpop.f32.mrf.mxu0
        %v3709 = vadd.f32 0.0, %v3708
        %v3710 = vand.u32 %v3268, 4294901760
        %v3711 = vsub.f32 %v3268, %v3710
        %v3712 = vand.u32 %v3711, 4294901760
        %v3713 = vsub.f32 %v3711, %v3712
        %v3714 = vand.u32 %v3713, 4294901760
        %3715 = vmatmul.f32.gmra.mxu0 %v3714
        %v3716 = vpop.f32.mrf.mxu0
        %v3717 = vadd.f32 0.0, %v3716
        %v3718 = vand.u32 %v3271, 4294901760
        %v3719 = vsub.f32 %v3271, %v3718
        %v3720 = vand.u32 %v3719, 4294901760
        %v3721 = vsub.f32 %v3719, %v3720
        %v3722 = vand.u32 %v3721, 4294901760
        %3723 = vmatmul.f32.gmra.mxu0 %v3722
        %v3724 = vpop.f32.mrf.mxu0
        %v3725 = vadd.f32 0.0, %v3724
        %v3726 = vand.u32 %v3274, 4294901760
        %v3727 = vsub.f32 %v3274, %v3726
        %v3728 = vand.u32 %v3727, 4294901760
        %v3729 = vsub.f32 %v3727, %v3728
        %v3730 = vand.u32 %v3729, 4294901760
        %3731 = vmatmul.f32.gmra.mxu0 %v3730
        %v3732 = vpop.f32.mrf.mxu0
        %v3733 = vadd.f32 0.0, %v3732
        %3734 = vdwg.mxu0
        %3735 = vmatpush.msra.mxu0 0.0
        %3736 = vmatpush.msra.mxu0 0.0
        %3737 = vmatpush.msra.mxu0 0.0
        %3738 = vmatpush.msra.mxu0 0.0
        %3739 = vmatpush.msra.mxu0 0.0
        %3740 = vmatpush.msra.mxu0 0.0
        %3741 = vmatpush.msra.mxu0 0.0
        %3742 = vmatpush.msra.mxu0 0.0
        %3743 = vmatpush.msra.mxu0 0.0
        %3744 = vmatpush.msra.mxu0 0.0
        %3745 = vmatpush.msra.mxu0 0.0
        %3746 = vmatpush.msra.mxu0 0.0
        %3747 = vmatpush.msra.mxu0 0.0
        %3748 = vmatpush.msra.mxu0 0.0
        %v3749 = vand.u32 %v3251, 4294901760
        %v3750 = vsub.f32 %v3251, %v3749
        %v3751 = vand.u32 %v3750, 4294901760
        %v3752 = vsub.f32 %v3750, %v3751
        %v3753 = vand.u32 %v3752, 4294901760
        %3754 = vmatpush.msra.mxu0 %v3753
        %v3755 = vand.u32 %v3249, 4294901760
        %v3756 = vsub.f32 %v3249, %v3755
        %v3757 = vand.u32 %v3756, 4294901760
        %v3758 = vsub.f32 %v3756, %v3757
        %v3759 = vand.u32 %v3758, 4294901760
        %3760 = vmatpush.msra.mxu0 %v3759
        %v3761 = vand.u32 %v3253, 4294901760
        %3762 = vmatmul.f32.gmra.mxu0 %v3761
        %v3763 = vpop.f32.mrf.mxu0
        %v3764 = vadd.f32 %v3677, %v3763
        %v3765 = vand.u32 %v3256, 4294901760
        %3766 = vmatmul.f32.gmra.mxu0 %v3765
        %v3767 = vpop.f32.mrf.mxu0
        %v3768 = vadd.f32 %v3685, %v3767
        %v3769 = vand.u32 %v3259, 4294901760
        %3770 = vmatmul.f32.gmra.mxu0 %v3769
        %v3771 = vpop.f32.mrf.mxu0
        %v3772 = vadd.f32 %v3693, %v3771
        %v3773 = vand.u32 %v3262, 4294901760
        %3774 = vmatmul.f32.gmra.mxu0 %v3773
        %v3775 = vpop.f32.mrf.mxu0
        %v3776 = vadd.f32 %v3701, %v3775
        %v3777 = vand.u32 %v3265, 4294901760
        %3778 = vmatmul.f32.gmra.mxu0 %v3777
        %v3779 = vpop.f32.mrf.mxu0
        %v3780 = vadd.f32 %v3709, %v3779
        %v3781 = vand.u32 %v3268, 4294901760
        %3782 = vmatmul.f32.gmra.mxu0 %v3781
        %v3783 = vpop.f32.mrf.mxu0
        %v3784 = vadd.f32 %v3717, %v3783
        %v3785 = vand.u32 %v3271, 4294901760
        %3786 = vmatmul.f32.gmra.mxu0 %v3785
        %v3787 = vpop.f32.mrf.mxu0
        %v3788 = vadd.f32 %v3725, %v3787
        %v3789 = vand.u32 %v3274, 4294901760
        %3790 = vmatmul.f32.gmra.mxu0 %v3789
        %v3791 = vpop.f32.mrf.mxu0
        %v3792 = vadd.f32 %v3733, %v3791
        %3793 = vdwg.mxu0
        %3794 = vmatpush.msra.mxu0 0.0
        %3795 = vmatpush.msra.mxu0 0.0
        %3796 = vmatpush.msra.mxu0 0.0
        %3797 = vmatpush.msra.mxu0 0.0
        %3798 = vmatpush.msra.mxu0 0.0
        %3799 = vmatpush.msra.mxu0 0.0
        %3800 = vmatpush.msra.mxu0 0.0
        %3801 = vmatpush.msra.mxu0 0.0
        %3802 = vmatpush.msra.mxu0 0.0
        %3803 = vmatpush.msra.mxu0 0.0
        %3804 = vmatpush.msra.mxu0 0.0
        %3805 = vmatpush.msra.mxu0 0.0
        %3806 = vmatpush.msra.mxu0 0.0
        %3807 = vmatpush.msra.mxu0 0.0
        %v3808 = vand.u32 %v3251, 4294901760
        %v3809 = vsub.f32 %v3251, %v3808
        %3810 = vmatpush.msra.mxu0 %v3809
        %v3811 = vand.u32 %v3249, 4294901760
        %v3812 = vsub.f32 %v3249, %v3811
        %3813 = vmatpush.msra.mxu0 %v3812
        %v3814 = vand.u32 %v3253, 4294901760
        %v3815 = vsub.f32 %v3253, %v3814
        %3816 = vmatmul.f32.gmra.mxu0 %v3815
        %v3817 = vpop.f32.mrf.mxu0
        %v3818 = vadd.f32 %v3764, %v3817
        %v3819 = vand.u32 %v3256, 4294901760
        %v3820 = vsub.f32 %v3256, %v3819
        %3821 = vmatmul.f32.gmra.mxu0 %v3820
        %v3822 = vpop.f32.mrf.mxu0
        %v3823 = vadd.f32 %v3768, %v3822
        %v3824 = vand.u32 %v3259, 4294901760
        %v3825 = vsub.f32 %v3259, %v3824
        %3826 = vmatmul.f32.gmra.mxu0 %v3825
        %v3827 = vpop.f32.mrf.mxu0
        %v3828 = vadd.f32 %v3772, %v3827
        %v3829 = vand.u32 %v3262, 4294901760
        %v3830 = vsub.f32 %v3262, %v3829
        %3831 = vmatmul.f32.gmra.mxu0 %v3830
        %v3832 = vpop.f32.mrf.mxu0
        %v3833 = vadd.f32 %v3776, %v3832
        %v3834 = vand.u32 %v3265, 4294901760
        %v3835 = vsub.f32 %v3265, %v3834
        %3836 = vmatmul.f32.gmra.mxu0 %v3835
        %v3837 = vpop.f32.mrf.mxu0
        %v3838 = vadd.f32 %v3780, %v3837
        %v3839 = vand.u32 %v3268, 4294901760
        %v3840 = vsub.f32 %v3268, %v3839
        %3841 = vmatmul.f32.gmra.mxu0 %v3840
        %v3842 = vpop.f32.mrf.mxu0
        %v3843 = vadd.f32 %v3784, %v3842
        %v3844 = vand.u32 %v3271, 4294901760
        %v3845 = vsub.f32 %v3271, %v3844
        %3846 = vmatmul.f32.gmra.mxu0 %v3845
        %v3847 = vpop.f32.mrf.mxu0
        %v3848 = vadd.f32 %v3788, %v3847
        %v3849 = vand.u32 %v3274, 4294901760
        %v3850 = vsub.f32 %v3274, %v3849
        %3851 = vmatmul.f32.gmra.mxu0 %v3850
        %v3852 = vpop.f32.mrf.mxu0
        %v3853 = vadd.f32 %v3792, %v3852
        %3854 = vdwg.mxu0
        %3855 = vmatpush.msra.mxu0 0.0
        %3856 = vmatpush.msra.mxu0 0.0
        %3857 = vmatpush.msra.mxu0 0.0
        %3858 = vmatpush.msra.mxu0 0.0
        %3859 = vmatpush.msra.mxu0 0.0
        %3860 = vmatpush.msra.mxu0 0.0
        %3861 = vmatpush.msra.mxu0 0.0
        %3862 = vmatpush.msra.mxu0 0.0
        %3863 = vmatpush.msra.mxu0 0.0
        %3864 = vmatpush.msra.mxu0 0.0
        %3865 = vmatpush.msra.mxu0 0.0
        %3866 = vmatpush.msra.mxu0 0.0
        %3867 = vmatpush.msra.mxu0 0.0
        %3868 = vmatpush.msra.mxu0 0.0
        %v3869 = vand.u32 %v3251, 4294901760
        %3870 = vmatpush.msra.mxu0 %v3869
        %v3871 = vand.u32 %v3249, 4294901760
        %3872 = vmatpush.msra.mxu0 %v3871
        %v3873 = vand.u32 %v3253, 4294901760
        %v3874 = vsub.f32 %v3253, %v3873
        %v3875 = vand.u32 %v3874, 4294901760
        %3876 = vmatmul.f32.gmra.mxu0 %v3875
        %v3877 = vpop.f32.mrf.mxu0
        %v3878 = vadd.f32 %v3818, %v3877
        %v3879 = vand.u32 %v3256, 4294901760
        %v3880 = vsub.f32 %v3256, %v3879
        %v3881 = vand.u32 %v3880, 4294901760
        %3882 = vmatmul.f32.gmra.mxu0 %v3881
        %v3883 = vpop.f32.mrf.mxu0
        %v3884 = vadd.f32 %v3823, %v3883
        %v3885 = vand.u32 %v3259, 4294901760
        %v3886 = vsub.f32 %v3259, %v3885
        %v3887 = vand.u32 %v3886, 4294901760
        %3888 = vmatmul.f32.gmra.mxu0 %v3887
        %v3889 = vpop.f32.mrf.mxu0
        %v3890 = vadd.f32 %v3828, %v3889
        %v3891 = vand.u32 %v3262, 4294901760
        %v3892 = vsub.f32 %v3262, %v3891
        %v3893 = vand.u32 %v3892, 4294901760
        %3894 = vmatmul.f32.gmra.mxu0 %v3893
        %v3895 = vpop.f32.mrf.mxu0
        %v3896 = vadd.f32 %v3833, %v3895
        %v3897 = vand.u32 %v3265, 4294901760
        %v3898 = vsub.f32 %v3265, %v3897
        %v3899 = vand.u32 %v3898, 4294901760
        %3900 = vmatmul.f32.gmra.mxu0 %v3899
        %v3901 = vpop.f32.mrf.mxu0
        %v3902 = vadd.f32 %v3838, %v3901
        %v3903 = vand.u32 %v3268, 4294901760
        %v3904 = vsub.f32 %v3268, %v3903
        %v3905 = vand.u32 %v3904, 4294901760
        %3906 = vmatmul.f32.gmra.mxu0 %v3905
        %v3907 = vpop.f32.mrf.mxu0
        %v3908 = vadd.f32 %v3843, %v3907
        %v3909 = vand.u32 %v3271, 4294901760
        %v3910 = vsub.f32 %v3271, %v3909
        %v3911 = vand.u32 %v3910, 4294901760
        %3912 = vmatmul.f32.gmra.mxu0 %v3911
        %v3913 = vpop.f32.mrf.mxu0
        %v3914 = vadd.f32 %v3848, %v3913
        %v3915 = vand.u32 %v3274, 4294901760
        %v3916 = vsub.f32 %v3274, %v3915
        %v3917 = vand.u32 %v3916, 4294901760
        %3918 = vmatmul.f32.gmra.mxu0 %v3917
        %v3919 = vpop.f32.mrf.mxu0
        %v3920 = vadd.f32 %v3853, %v3919
        %3921 = vdwg.mxu0
        %3922 = vmatpush.msra.mxu0 0.0
        %3923 = vmatpush.msra.mxu0 0.0
        %3924 = vmatpush.msra.mxu0 0.0
        %3925 = vmatpush.msra.mxu0 0.0
        %3926 = vmatpush.msra.mxu0 0.0
        %3927 = vmatpush.msra.mxu0 0.0
        %3928 = vmatpush.msra.mxu0 0.0
        %3929 = vmatpush.msra.mxu0 0.0
        %3930 = vmatpush.msra.mxu0 0.0
        %3931 = vmatpush.msra.mxu0 0.0
        %3932 = vmatpush.msra.mxu0 0.0
        %3933 = vmatpush.msra.mxu0 0.0
        %3934 = vmatpush.msra.mxu0 0.0
        %3935 = vmatpush.msra.mxu0 0.0
        %v3936 = vand.u32 %v3251, 4294901760
        %v3937 = vsub.f32 %v3251, %v3936
        %v3938 = vand.u32 %v3937, 4294901760
        %3939 = vmatpush.msra.mxu0 %v3938
        %v3940 = vand.u32 %v3249, 4294901760
        %v3941 = vsub.f32 %v3249, %v3940
        %v3942 = vand.u32 %v3941, 4294901760
        %3943 = vmatpush.msra.mxu0 %v3942
        %v3944 = vand.u32 %v3253, 4294901760
        %3945 = vmatmul.f32.gmra.mxu0 %v3944
        %v3946 = vpop.f32.mrf.mxu0
        %v3947 = vadd.f32 %v3878, %v3946
        %v3948 = vand.u32 %v3256, 4294901760
        %3949 = vmatmul.f32.gmra.mxu0 %v3948
        %v3950 = vpop.f32.mrf.mxu0
        %v3951 = vadd.f32 %v3884, %v3950
        %v3952 = vand.u32 %v3259, 4294901760
        %3953 = vmatmul.f32.gmra.mxu0 %v3952
        %v3954 = vpop.f32.mrf.mxu0
        %v3955 = vadd.f32 %v3890, %v3954
        %v3956 = vand.u32 %v3262, 4294901760
        %3957 = vmatmul.f32.gmra.mxu0 %v3956
        %v3958 = vpop.f32.mrf.mxu0
        %v3959 = vadd.f32 %v3896, %v3958
        %v3960 = vand.u32 %v3265, 4294901760
        %3961 = vmatmul.f32.gmra.mxu0 %v3960
        %v3962 = vpop.f32.mrf.mxu0
        %v3963 = vadd.f32 %v3902, %v3962
        %v3964 = vand.u32 %v3268, 4294901760
        %3965 = vmatmul.f32.gmra.mxu0 %v3964
        %v3966 = vpop.f32.mrf.mxu0
        %v3967 = vadd.f32 %v3908, %v3966
        %v3968 = vand.u32 %v3271, 4294901760
        %3969 = vmatmul.f32.gmra.mxu0 %v3968
        %v3970 = vpop.f32.mrf.mxu0
        %v3971 = vadd.f32 %v3914, %v3970
        %v3972 = vand.u32 %v3274, 4294901760
        %3973 = vmatmul.f32.gmra.mxu0 %v3972
        %v3974 = vpop.f32.mrf.mxu0
        %v3975 = vadd.f32 %v3920, %v3974
        %3976 = vdwg.mxu0
        %3977 = vmatpush.msra.mxu0 0.0
        %3978 = vmatpush.msra.mxu0 0.0
        %3979 = vmatpush.msra.mxu0 0.0
        %3980 = vmatpush.msra.mxu0 0.0
        %3981 = vmatpush.msra.mxu0 0.0
        %3982 = vmatpush.msra.mxu0 0.0
        %3983 = vmatpush.msra.mxu0 0.0
        %3984 = vmatpush.msra.mxu0 0.0
        %3985 = vmatpush.msra.mxu0 0.0
        %3986 = vmatpush.msra.mxu0 0.0
        %3987 = vmatpush.msra.mxu0 0.0
        %3988 = vmatpush.msra.mxu0 0.0
        %3989 = vmatpush.msra.mxu0 0.0
        %3990 = vmatpush.msra.mxu0 0.0
        %v3991 = vand.u32 %v3251, 4294901760
        %3992 = vmatpush.msra.mxu0 %v3991
        %v3993 = vand.u32 %v3249, 4294901760
        %3994 = vmatpush.msra.mxu0 %v3993
        %v3995 = vand.u32 %v3253, 4294901760
        %3996 = vmatmul.f32.gmra.mxu0 %v3995
        %v3997 = vpop.f32.mrf.mxu0
        %v3998 = vadd.f32 %v3947, %v3997
        %v3999 = vand.u32 %v3256, 4294901760
        %4000 = vmatmul.f32.gmra.mxu0 %v3999
        %v4001 = vpop.f32.mrf.mxu0
        %v4002 = vadd.f32 %v3951, %v4001
        %v4003 = vand.u32 %v3259, 4294901760
        %4004 = vmatmul.f32.gmra.mxu0 %v4003
        %v4005 = vpop.f32.mrf.mxu0
        %v4006 = vadd.f32 %v3955, %v4005
        %v4007 = vand.u32 %v3262, 4294901760
        %4008 = vmatmul.f32.gmra.mxu0 %v4007
        %v4009 = vpop.f32.mrf.mxu0
        %v4010 = vadd.f32 %v3959, %v4009
        %v4011 = vand.u32 %v3265, 4294901760
        %4012 = vmatmul.f32.gmra.mxu0 %v4011
        %v4013 = vpop.f32.mrf.mxu0
        %v4014 = vadd.f32 %v3963, %v4013
        %v4015 = vand.u32 %v3268, 4294901760
        %4016 = vmatmul.f32.gmra.mxu0 %v4015
        %v4017 = vpop.f32.mrf.mxu0
        %v4018 = vadd.f32 %v3967, %v4017
        %v4019 = vand.u32 %v3271, 4294901760
        %4020 = vmatmul.f32.gmra.mxu0 %v4019
        %v4021 = vpop.f32.mrf.mxu0
        %v4022 = vadd.f32 %v3971, %v4021
        %v4023 = vand.u32 %v3274, 4294901760
        %4024 = vmatmul.f32.gmra.mxu0 %v4023
        %v4025 = vpop.f32.mrf.mxu0
        %v4026 = vadd.f32 %v3975, %v4025
        %4027 = vdwg.mxu0
        %v4028 = vmul.f32 %v379, %v2842
        %v4029 = vmul.f32 %v380, %v3218
        %v4030 = vmul.f32 %v381, %v2846
        %v4031 = vmul.f32 %v382, %v3222
        %v4032 = vmul.f32 %v383, %v2850
        %v4033 = vmul.f32 %v384, %v3226
        %v4034 = vmul.f32 %v385, %v2854
        %v4035 = vmul.f32 %v386, %v3230
        %v4036 = vmul.f32 %v387, %v2858
        %v4037 = vmul.f32 %v388, %v3234
        %v4038 = vmul.f32 %v389, %v2862
        %v4039 = vmul.f32 %v390, %v3238
        %v4040 = vmul.f32 %v391, %v2866
        %v4041 = vmul.f32 %v392, %v3242
        %v4042 = vmul.f32 %v393, %v2870
        %v4043 = vmul.f32 %v394, %v3246
        %v4044 = vmul.f32 %v4028, %v3622
        %v4045 = vmul.f32 %v4029, %v3998
        %v4046 = vmul.f32 %v4030, %v3626
        %v4047 = vmul.f32 %v4031, %v4002
        %v4048 = vmul.f32 %v4032, %v3630
        %v4049 = vmul.f32 %v4033, %v4006
        %v4050 = vmul.f32 %v4034, %v3634
        %v4051 = vmul.f32 %v4035, %v4010
        %v4052 = vmul.f32 %v4036, %v3638
        %v4053 = vmul.f32 %v4037, %v4014
        %v4054 = vmul.f32 %v4038, %v3642
        %v4055 = vmul.f32 %v4039, %v4018
        %v4056 = vmul.f32 %v4040, %v3646
        %v4057 = vmul.f32 %v4041, %v4022
        %v4058 = vmul.f32 %v4042, %v3650
        %v4059 = vmul.f32 %v4043, %v4026
        %4060 = vst [vmem:[%s370] sm:$0xff] %v4044
        %4061 = vst [vmem:[%s370 + $0x8] sm:$0xff] %v4045
        %4062 = vst [vmem:[%s370 + $0x10] sm:$0xff] %v4046
        %4063 = vst [vmem:[%s370 + $0x18] sm:$0xff] %v4047
        %4064 = vst [vmem:[%s370 + $0x20] sm:$0xff] %v4048
        %4065 = vst [vmem:[%s370 + $0x28] sm:$0xff] %v4049
        %4066 = vst [vmem:[%s370 + $0x30] sm:$0xff] %v4050
        %4067 = vst [vmem:[%s370 + $0x38] sm:$0xff] %v4051
        %4068 = vst [vmem:[%s370 + $0x40] sm:$0xff] %v4052
        %4069 = vst [vmem:[%s370 + $0x48] sm:$0xff] %v4053
        %4070 = vst [vmem:[%s370 + $0x50] sm:$0xff] %v4054
        %4071 = vst [vmem:[%s370 + $0x58] sm:$0xff] %v4055
        %4072 = vst [vmem:[%s370 + $0x60] sm:$0xff] %v4056
        %4073 = vst [vmem:[%s370 + $0x68] sm:$0xff] %v4057
        %4074 = vst [vmem:[%s370 + $0x70] sm:$0xff] %v4058
        %4075 = vst [vmem:[%s370 + $0x78] sm:$0xff] %v4059
        %s4076 = sand.u32 %s248, 1
        %s4077 = scalar_lea.sflag [#allocation4], %s4076
        %s4078 = sand.u32 %s248, 1
        %s4079 = smul.addr %s4078, 128
        %s4080 = scalar_lea.vmem [#allocation5], %s4079
        // Predicated region
        $region65: #{tpu_custom_call.1} parent=59 // pred_check
          %p4081 = pneg %p258
        $region66: #{tpu_custom_call.1} parent=59 // pred_check_branch
          %4083 = sbr.rel (%p4081) target = $region68
        $region67: #{tpu_custom_call.1} parent=59 // pred_region
          %s4084 = smul.u32 8, %s25
          %4086 = vsyncadd %s4077, 0
          %s4087 = smul.addr %s4084, 2
          %s4088 = smul.addr %s4087, 8
          %s4089 = scalar_lea.hbm %s10, %s4088
          %s4090 = sshll.u32 %s4080, 4
          %s4091 = int_to_ptr.vmem [resolvable:$true] %s4090
          %s4092 = sshll.u32 %s4089, 4
          %s4093 = int_to_ptr.hbm [resolvable:$true] %s4092
          %4098 = dma.vmem_to_hbm [thread:$0]  %s4091, 2048, %s4093, %s4077, 256, 256, 16
        $region68: #{tpu_custom_call.1} parent=59 // pred_fallthru
          _
      $region60: #{tpu_custom_call.1} parent=5 // pred_fallthru
        _
      %p4099 = scmp.le.s32.totalorder 2, %s20
      // Predicated region
      $region69: #{tpu_custom_call.1} parent=5 // pred_check
        %p4100 = pneg %p4099
      $region70: #{tpu_custom_call.1} parent=5 // pred_check_branch
        %4102 = sbr.rel (%p4100) target = $region72
      $region71: #{tpu_custom_call.1} parent=5 // pred_region
        %s4103 = ssub.s32 %s20, 2
        // Predicated region
        $region73: #{tpu_custom_call.1} parent=71 // pred_check
          %p4104 = pneg %p264
        $region74: #{tpu_custom_call.1} parent=71 // pred_check_branch
          %4106 = sbr.rel (%p4104) target = $region76
        $region75: #{tpu_custom_call.1} parent=71 // pred_region
          %s4107 = sand.u32 %s249, 1
          %s4108 = scalar_lea.sflag [#allocation4], %s4107
          %s4109 = sand.u32 %s249, 1
          %s4110 = smul.addr %s4109, 128
          %s4111 = scalar_lea.vmem [#allocation5], %s4110
          %4113 = dma.done %s4108, 2048
        $region76: #{tpu_custom_call.1} parent=71 // pred_fallthru
          _
      $region72: #{tpu_custom_call.1} parent=5 // pred_fallthru
        _
    $region6: #{tpu_custom_call.1} parent=1 // loop_footer
      %s24 = sadd.s32 1, %s20
    $region7: #{tpu_custom_call.1} parent=1 // loop_footer_branch
      %19 = sbr.rel target = $region3
    $region8: #{tpu_custom_call.1} parent=1 // loop_exit
      _
    %4114 = vsyncpa [#allocation3], 1
    %s4115 = scalar_lea.sflag [#allocation3], 1
    %4116 = vsyncpa %s4115, 1
    %4117 = vsyncpa [#allocation4], 1
    %s4118 = scalar_lea.sflag [#allocation4], 1
    %4119 = vsyncpa %s4118, 1

</llo_original>
